<compile_context>
chip_gen: v6e
topology: v6e:2x2x1
jax: 0.10.0
libtpu: 0.0.40
codegen_flags: <defaults>
</compile_context>

<pallas_src>
import jax
import jax.numpy as jnp
from jax.experimental import pallas as pl
from jax.experimental.pallas import tpu as pltpu

_BN_EPS = 1e-5


def _round_up(x, m):
    return (x + m - 1) // m * m


def _tap(k, stride):
    """3x3 tap k in {0,1,2} -> (stride phase, plane-index shift d): output
    position i reads phase-plane index i + d (zero when out of range)."""
    if stride == 1:
        return 0, k - 1
    return ((1, -1), (0, 0), (1, 0))[k]


# ------------------------------ Pallas kernel ------------------------------ #
def _make_bottleneck_kernel(stride, n, ho, wo, cin, width, cpad, has_downsample):
    s = stride
    m = n * ho * wo
    bf16, f32 = jnp.bfloat16, jnp.float32

    def shift_plane(p, dr, dc):
        # p: (n, ho, wo, width); out[b, i, j] = p[b, i+dr, j+dc], zero outside.
        if dr == -1:
            p = jnp.concatenate(
                [jnp.zeros((n, 1, wo, width), p.dtype), p[:, :ho - 1]], axis=1)
        elif dr == 1:
            p = jnp.concatenate(
                [p[:, 1:], jnp.zeros((n, 1, wo, width), p.dtype)], axis=1)
        if dc == -1:
            p = jnp.concatenate(
                [jnp.zeros((n, ho, 1, width), p.dtype), p[:, :, :wo - 1]], axis=2)
        elif dc == 1:
            p = jnp.concatenate(
                [p[:, :, 1:], jnp.zeros((n, ho, 1, width), p.dtype)], axis=2)
        return p

    def kernel(x_ref, w1_ref, b1_ref, w2_ref, b2_ref, w3_ref, b3_ref, o_ref):
        x = x_ref[...]                                   # (S, S, n, ho, wo, cin)

        # ---- conv1 (1x1) + bn1 + relu: all stride phases in ONE matmul.
        h1 = jnp.dot(x.reshape(s * s * m, cin).astype(bf16), w1_ref[...],
                     preferred_element_type=f32)
        h1 = jnp.maximum(h1 + b1_ref[...], 0.0).astype(bf16)
        h1 = h1.reshape(s, s, n, ho, wo, width)

        # ---- conv2 (3x3, stride) + bn2 + relu: one K=9*width matmul over the
        #      concatenated-tap operand (shift + zero-fill done on VMEM values).
        taps = []
        for kh in range(3):
            pr, dr = _tap(kh, stride)
            for kw in range(3):
                pc, dc = _tap(kw, stride)
                taps.append(shift_plane(h1[pr, pc], dr, dc))
        op2 = jnp.concatenate(taps, axis=-1).reshape(m, 9 * width)
        h2 = jnp.dot(op2, w2_ref[...], preferred_element_type=f32)
        h2 = jnp.maximum(h2 + b2_ref[...], 0.0).astype(bf16)

        # ---- conv3 (1x1) + bn3 (+ fused downsample) + residual + final relu.
        if has_downsample:
            x00 = x[0, 0].reshape(m, cin).astype(bf16)   # x at strided positions
            lhs = jnp.concatenate([h2, x00], axis=-1)    # (m, width + cin)
            out = jnp.dot(lhs, w3_ref[...], preferred_element_type=f32) + b3_ref[...]
        else:
            out = jnp.dot(h2, w3_ref[...], preferred_element_type=f32) + b3_ref[...]
            out = out + x[0, 0].reshape(m, cpad).astype(f32)   # identity, f32 add
        o_ref[...] = jnp.maximum(out, 0.0).reshape(n, ho, wo, cpad).astype(o_ref.dtype)

    return kernel


# ------------------------- param prep (done once) -------------------------- #
def _fold_bn(bn):
    s = bn["gamma"] / jnp.sqrt(bn["var"] + _BN_EPS)
    b = bn["beta"] - bn["mean"] * s
    return s.astype(jnp.float32), b.astype(jnp.float32)


def prepare_bottleneck(raw):
    """Fold BN scales into conv weights, fuse downsample into conv3, re-layout /
    pad everything once (hoisted out of the forward)."""
    w1, w2, w3 = raw["w1"], raw["w2"], raw["w3"]
    width, cin = w1.shape[0], w1.shape[1]
    cout = w3.shape[0]
    has_ds = "wd" in raw
    cpad = _round_up(cout, 128)            # lane-dense HBM output store

    cin_eff = cin
    if (not has_ds) and cpad != cin:       # identity is read straight from x
        cin_eff = cpad

    s1, b1 = _fold_bn(raw["bn1"])
    s2, b2 = _fold_bn(raw["bn2"])
    s3, b3 = _fold_bn(raw["bn3"])

    # conv1: (cin_eff, width); BN1 scale folded into the output columns.
    w1m = jnp.transpose(w1[:, :, 0, 0]) * s1[None, :]
    if cin_eff != cin:
        w1m = jnp.pad(w1m, ((0, cin_eff - cin), (0, 0)))
    # conv2: 9 taps stacked along K -> (9*width, width); BN2 scale folded.
    w2m = jnp.transpose(w2, (2, 3, 1, 0)).reshape(9 * width, width) * s2[None, :]
    # conv3 (+ downsample rows): (width [+ cin], cpad); BN3/BNd scales folded.
    w3m = jnp.pad(jnp.transpose(w3[:, :, 0, 0]) * s3[None, :],
                  ((0, 0), (0, cpad - cout)))
    b3m = jnp.pad(b3, (0, cpad - cout))
    if has_ds:
        sd, bd = _fold_bn(raw["bnd"])
        wdm = jnp.pad(jnp.transpose(raw["wd"][:, :, 0, 0]) * sd[None, :],
                      ((0, 0), (0, cpad - cout)))
        w3m = jnp.concatenate([w3m, wdm], axis=0)        # rows: [width | cin]
        b3m = b3m + jnp.pad(bd, (0, cpad - cout))

    return dict(
        stride=int(raw["stride"]), has_downsample=has_ds,
        cin=cin, cin_eff=cin_eff, width=width, cout=cout, cpad=cpad,
        w1=w1m.astype(jnp.bfloat16), b1=b1.reshape(1, width),
        w2=w2m.astype(jnp.bfloat16), b2=b2.reshape(1, width),
        w3=w3m.astype(jnp.bfloat16), b3=b3m.reshape(1, cpad),
    )


# --------------------------------- forward --------------------------------- #
def bottleneck_forward_nhwc(x_nhwc, p, out_dtype=jnp.float32, cores=1):
    """One fused Pallas call per block.  Activations stay channels-last (NHWC)
    so chained blocks never round-trip through NCHW.  `cores=2` shards the
    batch across a parallel grid axis (useful on v7x's 2 TensorCores)."""
    N, H, W, C = x_nhwc.shape
    S, width, cpad, cout = p["stride"], p["width"], p["cpad"], p["cout"]
    cin_eff = p["cin_eff"]
    assert S in (1, 2) and H % S == 0 and W % S == 0
    assert N % cores == 0
    if not p["has_downsample"]:
        assert S == 1 and cin_eff == cpad
    ho, wo = H // S, W // S
    nb = N // cores                                   # images per grid step

    x = x_nhwc
    if cin_eff != C:
        x = jnp.pad(x, ((0, 0), (0, 0), (0, 0), (0, cin_eff - C)))
    if S == 1:
        x_s = x.reshape(1, 1, N, H, W, cin_eff)       # free reshape
    else:                                             # space-to-depth phase split
        x_s = x.reshape(N, ho, S, wo, S, cin_eff).transpose(2, 4, 0, 1, 3, 5)

    kernel = _make_bottleneck_kernel(S, nb, ho, wo, cin_eff, width, cpad,
                                     p["has_downsample"])
    k3 = p["w3"].shape[0]                             # width (+ cin when ds fused)

    in_specs = [
        pl.BlockSpec((S, S, nb, ho, wo, cin_eff), lambda g: (0, 0, g, 0, 0, 0)),
        pl.BlockSpec((cin_eff, width), lambda g: (0, 0)),
        pl.BlockSpec((1, width), lambda g: (0, 0)),
        pl.BlockSpec((9 * width, width), lambda g: (0, 0)),
        pl.BlockSpec((1, width), lambda g: (0, 0)),
        pl.BlockSpec((k3, cpad), lambda g: (0, 0)),
        pl.BlockSpec((1, cpad), lambda g: (0, 0)),
    ]
    out = pl.pallas_call(
        kernel,
        out_shape=jax.ShapeDtypeStruct((N, ho, wo, cpad), out_dtype),
        grid=(cores,),
        in_specs=in_specs,
        out_specs=pl.BlockSpec((nb, ho, wo, cpad), lambda g: (g, 0, 0, 0)),
        compiler_params=pltpu.CompilerParams(dimension_semantics=("parallel",)),
    )(x_s, p["w1"], p["b1"], p["w2"], p["b2"], p["w3"], p["b3"])

    if cpad != cout:
        out = out[..., :cout]
    return out


# -------------------------- pure-JAX reference ----------------------------- #
def _ref_conv_bn(x, w, bn, stride, pad, relu):
    # BN(eval) scale folded into the conv weight BEFORE the bf16 cast -- the
    # exact precision policy the kernel uses (mathematically identical to
    # conv -> BN in exact arithmetic); element-wise math stays f32.
    s, b = _fold_bn(bn)
    ws = (w * s[:, None, None, None]).astype(jnp.bfloat16)
    y = jax.lax.conv_general_dilated(
        x.astype(jnp.bfloat16), ws, (stride, stride), [(pad, pad), (pad, pad)],
        dimension_numbers=("NCHW", "OIHW", "NCHW"),
        preferred_element_type=jnp.float32)
    y = y + b[None, :, None, None]
    return jnp.maximum(y, 0.0) if relu else y


def ref_bottleneck(x, raw):
    stride = raw["stride"]
    out = _ref_conv_bn(x, raw["w1"], raw["bn1"], 1, 0, True)
    out = _ref_conv_bn(out, raw["w2"], raw["bn2"], stride, 1, True)
    out = _ref_conv_bn(out, raw["w3"], raw["bn3"], 1, 0, False)
    if "wd" in raw:
        identity = _ref_conv_bn(x, raw["wd"], raw["bnd"], stride, 0, False)
    else:
        identity = x
    return jnp.maximum(out + identity, 0.0)


# ------------------------------ param init --------------------------------- #
def _init_bn(key, c):
    k1, k2, k3, k4 = jax.random.split(key, 4)
    return dict(
        gamma=jax.random.uniform(k1, (c,), jnp.float32, 0.5, 1.5),
        beta=jax.random.normal(k2, (c,), jnp.float32) * 0.1,
        mean=jax.random.normal(k3, (c,), jnp.float32) * 0.1,
        var=jax.random.uniform(k4, (c,), jnp.float32, 0.5, 1.5),
    )


def _init_conv(key, cout, cin, k):
    fan = k * k * cin
    return jax.random.normal(key, (cout, cin, k, k), jnp.float32) * jnp.sqrt(2.0 / fan)


def init_bottleneck(key, inplanes, planes, stride, downsample,
                    base_width=64, groups=1, expansion=4):
    width = int(planes * (base_width / 64.0)) * groups
    cout = planes * expansion
    ks = jax.random.split(key, 8)
    raw = dict(
        stride=stride,
        w1=_init_conv(ks[0], width, inplanes, 1), bn1=_init_bn(ks[1], width),
        w2=_init_conv(ks[2], width, width, 3),    bn2=_init_bn(ks[3], width),
        w3=_init_conv(ks[4], cout, width, 1),     bn3=_init_bn(ks[5], cout),
    )
    if downsample:
        raw["wd"] = _init_conv(ks[6], cout, inplanes, 1)
        raw["bnd"] = _init_bn(ks[7], cout)
    return raw


# ---------------------------------- main ------------------------------------ #
if __name__ == "__main__":
    key = jax.random.PRNGKey(0)
    k_x, k_a, k_b = jax.random.split(key, 3)

    # x: (N, C, H, W) = (2, 4, 16, 16)
    N, Cin, H, W = 2, 4, 16, 16
    x = jax.random.normal(k_x, (N, Cin, H, W), jnp.float32)

    # Block A: Bottleneck(inplanes=4, planes=32, stride=2, downsample=conv1x1+BN)
    #          -> out channels = planes*expansion = 128, spatial 8x8.
    # Block B: Bottleneck(inplanes=128, planes=32, stride=1, downsample=None)
    #          -> identity shortcut.
    raw_a = init_bottleneck(k_a, inplanes=4, planes=32, stride=2, downsample=True)
    raw_b = init_bottleneck(k_b, inplanes=128, planes=32, stride=1, downsample=False)

    prep_a = prepare_bottleneck(raw_a)   # hoisted out of the forward (done once)
    prep_b = prepare_bottleneck(raw_b)

    @jax.jit
    def fwd(inp):
        h = jnp.transpose(inp, (0, 2, 3, 1))                      # NCHW -> NHWC once
        h = bottleneck_forward_nhwc(h, prep_a, out_dtype=jnp.bfloat16)  # bf16 between blocks
        h = bottleneck_forward_nhwc(h, prep_b, out_dtype=jnp.float32)   # final block: f32
        return jnp.transpose(h, (0, 3, 1, 2))                     # NHWC -> NCHW once

    out = jax.block_until_ready(fwd(x))

    ref_a = ref_bottleneck(x, raw_a)
    # Match the kernel's bf16 inter-block activation store in the reference.
    ref_a = ref_a.astype(jnp.bfloat16).astype(jnp.float32)
    ref = jax.block_until_ready(ref_bottleneck(ref_a, raw_b))

    assert out.shape == ref.shape == (N, 128, H // 2, W // 2), (out.shape, ref.shape)
    max_err = float(jnp.max(jnp.abs(out - ref)))
    assert max_err < 5e-2, f"mismatch vs reference: {max_err}"

    print("KERNEL_OK")
</pallas_src>

<mosaic_0001>
module attributes {stable_mosaic.version = 11 : i64} {
  func.func @kernel(%arg0: i32, %arg1: memref<2x2x2x8x8x4xf32, #tpu.memory_space<vmem>>, %arg2: memref<4x32xbf16, #tpu.memory_space<vmem>>, %arg3: memref<1x32xf32, #tpu.memory_space<vmem>>, %arg4: memref<288x32xbf16, #tpu.memory_space<vmem>>, %arg5: memref<1x32xf32, #tpu.memory_space<vmem>>, %arg6: memref<36x128xbf16, #tpu.memory_space<vmem>>, %arg7: memref<1x128xf32, #tpu.memory_space<vmem>>, %arg8: memref<2x8x8x128xbf16, #tpu.memory_space<vmem>>) attributes {dimension_semantics = [#tpu.dimension_semantics<parallel>], iteration_bounds = array<i64: 1>, scalar_prefetch = 0 : i64, scratch_operands = 0 : i64, tpu.core_type = #tpu.core_type<tc>, window_params = [{transform_indices = @transform_0, window_bounds = array<i64: 2, 2, 2, 8, 8, 4>}, {pipeline_mode = #tpu.pipeline_mode<synchronous>, transform_indices = @transform_1, window_bounds = array<i64: 4, 32>}, {pipeline_mode = #tpu.pipeline_mode<synchronous>, transform_indices = @transform_2, window_bounds = array<i64: 1, 32>}, {pipeline_mode = #tpu.pipeline_mode<synchronous>, transform_indices = @transform_3, window_bounds = array<i64: 288, 32>}, {pipeline_mode = #tpu.pipeline_mode<synchronous>, transform_indices = @transform_4, window_bounds = array<i64: 1, 32>}, {pipeline_mode = #tpu.pipeline_mode<synchronous>, transform_indices = @transform_5, window_bounds = array<i64: 36, 128>}, {pipeline_mode = #tpu.pipeline_mode<synchronous>, transform_indices = @transform_6, window_bounds = array<i64: 1, 128>}, {transform_indices = @transform_7, window_bounds = array<i64: 2, 8, 8, 128>}]} {
    %c0 = arith.constant 0 : index
    %c0_0 = arith.constant 0 : index
    %c0_1 = arith.constant 0 : index
    %c0_2 = arith.constant 0 : index
    %c0_3 = arith.constant 0 : index
    %c0_4 = arith.constant 0 : index
    %0 = vector.load %arg1[%c0, %c0_0, %c0_1, %c0_2, %c0_3, %c0_4] : memref<2x2x2x8x8x4xf32, #tpu.memory_space<vmem>>, vector<2x2x2x8x8x4xf32>
    %1 = vector.shape_cast %0 : vector<2x2x2x8x8x4xf32> to vector<512x4xf32>
    %2 = arith.truncf %1 : vector<512x4xf32> to vector<512x4xbf16>
    %c0_5 = arith.constant 0 : index
    %c0_6 = arith.constant 0 : index
    %3 = vector.load %arg2[%c0_5, %c0_6] : memref<4x32xbf16, #tpu.memory_space<vmem>>, vector<4x32xbf16>
    %cst = arith.constant dense<0.000000e+00> : vector<512x32xf32>
    %4 = tpu.matmul %2, %3, %cst {dimension_numbers = #tpu.dot_dimension_numbers<[1], [0], [0], [1], [0, 0, 1, 1], [], []>} : vector<512x4xbf16>, vector<4x32xbf16>, vector<512x32xf32> -> vector<512x32xf32>
    %c0_7 = arith.constant 0 : index
    %c0_8 = arith.constant 0 : index
    %5 = vector.load %arg3[%c0_7, %c0_8] : memref<1x32xf32, #tpu.memory_space<vmem>>, vector<1x32xf32>
    %6 = vector.broadcast %5 : vector<1x32xf32> to vector<512x32xf32>
    %7 = arith.addf %4, %6 : vector<512x32xf32>
    %cst_9 = arith.constant 0.000000e+00 : f32
    %8 = vector.broadcast %cst_9 : f32 to vector<512x32xf32>
    %9 = arith.maximumf %7, %8 : vector<512x32xf32>
    %10 = arith.truncf %9 : vector<512x32xf32> to vector<512x32xbf16>
    %11 = vector.shape_cast %10 : vector<512x32xbf16> to vector<2x2x2x8x8x32xbf16>
    %12 = vector.extract_strided_slice %11 {offsets = [1, 1, 0, 0, 0, 0], sizes = [1, 1, 2, 8, 8, 32], strides = [1, 1, 1, 1, 1, 1]} : vector<2x2x2x8x8x32xbf16> to vector<1x1x2x8x8x32xbf16>
    %13 = vector.shape_cast %12 : vector<1x1x2x8x8x32xbf16> to vector<2x8x8x32xbf16>
    %cst_10 = arith.constant 0.000000e+00 : bf16
    %14 = vector.broadcast %cst_10 : bf16 to vector<2x1x8x32xbf16>
    %15 = vector.extract_strided_slice %13 {offsets = [0, 0, 0, 0], sizes = [2, 7, 8, 32], strides = [1, 1, 1, 1]} : vector<2x8x8x32xbf16> to vector<2x7x8x32xbf16>
    %16 = tpu.concatenate %14, %15 in 1 : vector<2x1x8x32xbf16>, vector<2x7x8x32xbf16> -> vector<2x8x8x32xbf16>
    %cst_11 = arith.constant 0.000000e+00 : bf16
    %17 = vector.broadcast %cst_11 : bf16 to vector<2x8x1x32xbf16>
    %18 = vector.extract_strided_slice %16 {offsets = [0, 0, 0, 0], sizes = [2, 8, 7, 32], strides = [1, 1, 1, 1]} : vector<2x8x8x32xbf16> to vector<2x8x7x32xbf16>
    %19 = tpu.concatenate %17, %18 in 2 : vector<2x8x1x32xbf16>, vector<2x8x7x32xbf16> -> vector<2x8x8x32xbf16>
    %20 = vector.extract_strided_slice %11 {offsets = [1, 0, 0, 0, 0, 0], sizes = [1, 1, 2, 8, 8, 32], strides = [1, 1, 1, 1, 1, 1]} : vector<2x2x2x8x8x32xbf16> to vector<1x1x2x8x8x32xbf16>
    %21 = vector.shape_cast %20 : vector<1x1x2x8x8x32xbf16> to vector<2x8x8x32xbf16>
    %cst_12 = arith.constant 0.000000e+00 : bf16
    %22 = vector.broadcast %cst_12 : bf16 to vector<2x1x8x32xbf16>
    %23 = vector.extract_strided_slice %21 {offsets = [0, 0, 0, 0], sizes = [2, 7, 8, 32], strides = [1, 1, 1, 1]} : vector<2x8x8x32xbf16> to vector<2x7x8x32xbf16>
    %24 = tpu.concatenate %22, %23 in 1 : vector<2x1x8x32xbf16>, vector<2x7x8x32xbf16> -> vector<2x8x8x32xbf16>
    %25 = vector.extract_strided_slice %11 {offsets = [1, 1, 0, 0, 0, 0], sizes = [1, 1, 2, 8, 8, 32], strides = [1, 1, 1, 1, 1, 1]} : vector<2x2x2x8x8x32xbf16> to vector<1x1x2x8x8x32xbf16>
    %26 = vector.shape_cast %25 : vector<1x1x2x8x8x32xbf16> to vector<2x8x8x32xbf16>
    %cst_13 = arith.constant 0.000000e+00 : bf16
    %27 = vector.broadcast %cst_13 : bf16 to vector<2x1x8x32xbf16>
    %28 = vector.extract_strided_slice %26 {offsets = [0, 0, 0, 0], sizes = [2, 7, 8, 32], strides = [1, 1, 1, 1]} : vector<2x8x8x32xbf16> to vector<2x7x8x32xbf16>
    %29 = tpu.concatenate %27, %28 in 1 : vector<2x1x8x32xbf16>, vector<2x7x8x32xbf16> -> vector<2x8x8x32xbf16>
    %30 = vector.extract_strided_slice %11 {offsets = [0, 1, 0, 0, 0, 0], sizes = [1, 1, 2, 8, 8, 32], strides = [1, 1, 1, 1, 1, 1]} : vector<2x2x2x8x8x32xbf16> to vector<1x1x2x8x8x32xbf16>
    %31 = vector.shape_cast %30 : vector<1x1x2x8x8x32xbf16> to vector<2x8x8x32xbf16>
    %cst_14 = arith.constant 0.000000e+00 : bf16
    %32 = vector.broadcast %cst_14 : bf16 to vector<2x8x1x32xbf16>
    %33 = vector.extract_strided_slice %31 {offsets = [0, 0, 0, 0], sizes = [2, 8, 7, 32], strides = [1, 1, 1, 1]} : vector<2x8x8x32xbf16> to vector<2x8x7x32xbf16>
    %34 = tpu.concatenate %32, %33 in 2 : vector<2x8x1x32xbf16>, vector<2x8x7x32xbf16> -> vector<2x8x8x32xbf16>
    %35 = vector.extract_strided_slice %11 {offsets = [0, 0, 0, 0, 0, 0], sizes = [1, 1, 2, 8, 8, 32], strides = [1, 1, 1, 1, 1, 1]} : vector<2x2x2x8x8x32xbf16> to vector<1x1x2x8x8x32xbf16>
    %36 = vector.shape_cast %35 : vector<1x1x2x8x8x32xbf16> to vector<2x8x8x32xbf16>
    %37 = vector.extract_strided_slice %11 {offsets = [0, 1, 0, 0, 0, 0], sizes = [1, 1, 2, 8, 8, 32], strides = [1, 1, 1, 1, 1, 1]} : vector<2x2x2x8x8x32xbf16> to vector<1x1x2x8x8x32xbf16>
    %38 = vector.shape_cast %37 : vector<1x1x2x8x8x32xbf16> to vector<2x8x8x32xbf16>
    %39 = vector.extract_strided_slice %11 {offsets = [1, 1, 0, 0, 0, 0], sizes = [1, 1, 2, 8, 8, 32], strides = [1, 1, 1, 1, 1, 1]} : vector<2x2x2x8x8x32xbf16> to vector<1x1x2x8x8x32xbf16>
    %40 = vector.shape_cast %39 : vector<1x1x2x8x8x32xbf16> to vector<2x8x8x32xbf16>
    %cst_15 = arith.constant 0.000000e+00 : bf16
    %41 = vector.broadcast %cst_15 : bf16 to vector<2x8x1x32xbf16>
    %42 = vector.extract_strided_slice %40 {offsets = [0, 0, 0, 0], sizes = [2, 8, 7, 32], strides = [1, 1, 1, 1]} : vector<2x8x8x32xbf16> to vector<2x8x7x32xbf16>
    %43 = tpu.concatenate %41, %42 in 2 : vector<2x8x1x32xbf16>, vector<2x8x7x32xbf16> -> vector<2x8x8x32xbf16>
    %44 = vector.extract_strided_slice %11 {offsets = [1, 0, 0, 0, 0, 0], sizes = [1, 1, 2, 8, 8, 32], strides = [1, 1, 1, 1, 1, 1]} : vector<2x2x2x8x8x32xbf16> to vector<1x1x2x8x8x32xbf16>
    %45 = vector.shape_cast %44 : vector<1x1x2x8x8x32xbf16> to vector<2x8x8x32xbf16>
    %46 = vector.extract_strided_slice %11 {offsets = [1, 1, 0, 0, 0, 0], sizes = [1, 1, 2, 8, 8, 32], strides = [1, 1, 1, 1, 1, 1]} : vector<2x2x2x8x8x32xbf16> to vector<1x1x2x8x8x32xbf16>
    %47 = vector.shape_cast %46 : vector<1x1x2x8x8x32xbf16> to vector<2x8x8x32xbf16>
    %48 = tpu.concatenate %19, %24, %29, %34, %36, %38, %43, %45, %47 in 3 : vector<2x8x8x32xbf16>, vector<2x8x8x32xbf16>, vector<2x8x8x32xbf16>, vector<2x8x8x32xbf16>, vector<2x8x8x32xbf16>, vector<2x8x8x32xbf16>, vector<2x8x8x32xbf16>, vector<2x8x8x32xbf16>, vector<2x8x8x32xbf16> -> vector<2x8x8x288xbf16>
    %49 = vector.shape_cast %48 : vector<2x8x8x288xbf16> to vector<128x288xbf16>
    %c0_16 = arith.constant 0 : index
    %c0_17 = arith.constant 0 : index
    %50 = vector.load %arg4[%c0_16, %c0_17] : memref<288x32xbf16, #tpu.memory_space<vmem>>, vector<288x32xbf16>
    %cst_18 = arith.constant dense<0.000000e+00> : vector<128x32xf32>
    %51 = tpu.matmul %49, %50, %cst_18 {dimension_numbers = #tpu.dot_dimension_numbers<[1], [0], [0], [1], [0, 0, 1, 1], [], []>} : vector<128x288xbf16>, vector<288x32xbf16>, vector<128x32xf32> -> vector<128x32xf32>
    %c0_19 = arith.constant 0 : index
    %c0_20 = arith.constant 0 : index
    %52 = vector.load %arg5[%c0_19, %c0_20] : memref<1x32xf32, #tpu.memory_space<vmem>>, vector<1x32xf32>
    %53 = vector.broadcast %52 : vector<1x32xf32> to vector<128x32xf32>
    %54 = arith.addf %51, %53 : vector<128x32xf32>
    %cst_21 = arith.constant 0.000000e+00 : f32
    %55 = vector.broadcast %cst_21 : f32 to vector<128x32xf32>
    %56 = arith.maximumf %54, %55 : vector<128x32xf32>
    %57 = arith.truncf %56 : vector<128x32xf32> to vector<128x32xbf16>
    %58 = vector.extract_strided_slice %0 {offsets = [0, 0, 0, 0, 0, 0], sizes = [1, 1, 2, 8, 8, 4], strides = [1, 1, 1, 1, 1, 1]} : vector<2x2x2x8x8x4xf32> to vector<1x1x2x8x8x4xf32>
    %59 = vector.shape_cast %58 : vector<1x1x2x8x8x4xf32> to vector<2x8x8x4xf32>
    %60 = vector.shape_cast %59 : vector<2x8x8x4xf32> to vector<128x4xf32>
    %61 = arith.truncf %60 : vector<128x4xf32> to vector<128x4xbf16>
    %62 = tpu.concatenate %57, %61 in 1 : vector<128x32xbf16>, vector<128x4xbf16> -> vector<128x36xbf16>
    %c0_22 = arith.constant 0 : index
    %c0_23 = arith.constant 0 : index
    %63 = vector.load %arg6[%c0_22, %c0_23] : memref<36x128xbf16, #tpu.memory_space<vmem>>, vector<36x128xbf16>
    %cst_24 = arith.constant dense<0.000000e+00> : vector<128x128xf32>
    %64 = tpu.matmul %62, %63, %cst_24 {dimension_numbers = #tpu.dot_dimension_numbers<[1], [0], [0], [1], [0, 0, 1, 1], [], []>} : vector<128x36xbf16>, vector<36x128xbf16>, vector<128x128xf32> -> vector<128x128xf32>
    %c0_25 = arith.constant 0 : index
    %c0_26 = arith.constant 0 : index
    %65 = vector.load %arg7[%c0_25, %c0_26] : memref<1x128xf32, #tpu.memory_space<vmem>>, vector<1x128xf32>
    %66 = vector.broadcast %65 : vector<1x128xf32> to vector<128x128xf32>
    %67 = arith.addf %64, %66 : vector<128x128xf32>
    %cst_27 = arith.constant 0.000000e+00 : f32
    %68 = vector.broadcast %cst_27 : f32 to vector<128x128xf32>
    %69 = arith.maximumf %67, %68 : vector<128x128xf32>
    %70 = vector.shape_cast %69 : vector<128x128xf32> to vector<2x8x8x128xf32>
    %71 = arith.truncf %70 : vector<2x8x8x128xf32> to vector<2x8x8x128xbf16>
    %c0_28 = arith.constant 0 : index
    %c0_29 = arith.constant 0 : index
    %c0_30 = arith.constant 0 : index
    %c0_31 = arith.constant 0 : index
    %72 = vector.load %arg8[%c0_28, %c0_29, %c0_30, %c0_31] : memref<2x8x8x128xbf16, #tpu.memory_space<vmem>>, vector<2x8x8x128xbf16>
    tpu.vector_store %arg8[%c0_28, %c0_29, %c0_30, %c0_31], %71 {strides = array<i32>} : memref<2x8x8x128xbf16, #tpu.memory_space<vmem>>, vector<2x8x8x128xbf16>,
    return
  }
  func.func @transform_0(%arg0: i32) -> (i32, i32, i32, i32, i32, i32) {
    %c0_i32 = arith.constant 0 : i32
    %c0_i32_0 = arith.constant 0 : i32
    %c0_i32_1 = arith.constant 0 : i32
    %c0_i32_2 = arith.constant 0 : i32
    %c0_i32_3 = arith.constant 0 : i32
    %c0_i32_4 = arith.constant 0 : i32
    return %c0_i32, %c0_i32_0, %arg0, %c0_i32_1, %c0_i32_2, %c0_i32_3 : i32, i32, i32, i32, i32, i32
  }
  func.func @transform_1(%arg0: i32) -> (i32, i32) {
    %c0_i32 = arith.constant 0 : i32
    %c0_i32_0 = arith.constant 0 : i32
    %c0_i32_1 = arith.constant 0 : i32
    return %c0_i32, %c0_i32_0 : i32, i32
  }
  func.func @transform_2(%arg0: i32) -> (i32, i32) {
    %c0_i32 = arith.constant 0 : i32
    %c0_i32_0 = arith.constant 0 : i32
    %c0_i32_1 = arith.constant 0 : i32
    return %c0_i32, %c0_i32_0 : i32, i32
  }
  func.func @transform_3(%arg0: i32) -> (i32, i32) {
    %c0_i32 = arith.constant 0 : i32
    %c0_i32_0 = arith.constant 0 : i32
    %c0_i32_1 = arith.constant 0 : i32
    return %c0_i32, %c0_i32_0 : i32, i32
  }
  func.func @transform_4(%arg0: i32) -> (i32, i32) {
    %c0_i32 = arith.constant 0 : i32
    %c0_i32_0 = arith.constant 0 : i32
    %c0_i32_1 = arith.constant 0 : i32
    return %c0_i32, %c0_i32_0 : i32, i32
  }
  func.func @transform_5(%arg0: i32) -> (i32, i32) {
    %c0_i32 = arith.constant 0 : i32
    %c0_i32_0 = arith.constant 0 : i32
    %c0_i32_1 = arith.constant 0 : i32
    return %c0_i32, %c0_i32_0 : i32, i32
  }
  func.func @transform_6(%arg0: i32) -> (i32, i32) {
    %c0_i32 = arith.constant 0 : i32
    %c0_i32_0 = arith.constant 0 : i32
    %c0_i32_1 = arith.constant 0 : i32
    return %c0_i32, %c0_i32_0 : i32, i32
  }
  func.func @transform_7(%arg0: i32) -> (i32, i32, i32, i32) {
    %c0_i32 = arith.constant 0 : i32
    %c0_i32_0 = arith.constant 0 : i32
    %c0_i32_1 = arith.constant 0 : i32
    %c0_i32_2 = arith.constant 0 : i32
    return %arg0, %c0_i32, %c0_i32_0, %c0_i32_1 : i32, i32, i32, i32
  }
}

module attributes {stable_mosaic.version = 11 : i64} {
  func.func @kernel(%arg0: i32, %arg1: memref<1x1x2x8x8x128xbf16, #tpu.memory_space<vmem>>, %arg2: memref<128x32xbf16, #tpu.memory_space<vmem>>, %arg3: memref<1x32xf32, #tpu.memory_space<vmem>>, %arg4: memref<288x32xbf16, #tpu.memory_space<vmem>>, %arg5: memref<1x32xf32, #tpu.memory_space<vmem>>, %arg6: memref<32x128xbf16, #tpu.memory_space<vmem>>, %arg7: memref<1x128xf32, #tpu.memory_space<vmem>>, %arg8: memref<2x8x8x128xf32, #tpu.memory_space<vmem>>) attributes {dimension_semantics = [#tpu.dimension_semantics<parallel>], iteration_bounds = array<i64: 1>, scalar_prefetch = 0 : i64, scratch_operands = 0 : i64, tpu.core_type = #tpu.core_type<tc>, window_params = [{transform_indices = @transform_0, window_bounds = array<i64: 1, 1, 2, 8, 8, 128>}, {pipeline_mode = #tpu.pipeline_mode<synchronous>, transform_indices = @transform_1, window_bounds = array<i64: 128, 32>}, {pipeline_mode = #tpu.pipeline_mode<synchronous>, transform_indices = @transform_2, window_bounds = array<i64: 1, 32>}, {pipeline_mode = #tpu.pipeline_mode<synchronous>, transform_indices = @transform_3, window_bounds = array<i64: 288, 32>}, {pipeline_mode = #tpu.pipeline_mode<synchronous>, transform_indices = @transform_4, window_bounds = array<i64: 1, 32>}, {pipeline_mode = #tpu.pipeline_mode<synchronous>, transform_indices = @transform_5, window_bounds = array<i64: 32, 128>}, {pipeline_mode = #tpu.pipeline_mode<synchronous>, transform_indices = @transform_6, window_bounds = array<i64: 1, 128>}, {transform_indices = @transform_7, window_bounds = array<i64: 2, 8, 8, 128>}]} {
    %c0 = arith.constant 0 : index
    %c0_0 = arith.constant 0 : index
    %c0_1 = arith.constant 0 : index
    %c0_2 = arith.constant 0 : index
    %c0_3 = arith.constant 0 : index
    %c0_4 = arith.constant 0 : index
    %0 = vector.load %arg1[%c0, %c0_0, %c0_1, %c0_2, %c0_3, %c0_4] : memref<1x1x2x8x8x128xbf16, #tpu.memory_space<vmem>>, vector<1x1x2x8x8x128xbf16>
    %1 = vector.shape_cast %0 : vector<1x1x2x8x8x128xbf16> to vector<128x128xbf16>
    %c0_5 = arith.constant 0 : index
    %c0_6 = arith.constant 0 : index
    %2 = vector.load %arg2[%c0_5, %c0_6] : memref<128x32xbf16, #tpu.memory_space<vmem>>, vector<128x32xbf16>
    %cst = arith.constant dense<0.000000e+00> : vector<128x32xf32>
    %3 = tpu.matmul %1, %2, %cst {dimension_numbers = #tpu.dot_dimension_numbers<[1], [0], [0], [1], [0, 0, 1, 1], [], []>} : vector<128x128xbf16>, vector<128x32xbf16>, vector<128x32xf32> -> vector<128x32xf32>
    %c0_7 = arith.constant 0 : index
    %c0_8 = arith.constant 0 : index
    %4 = vector.load %arg3[%c0_7, %c0_8] : memref<1x32xf32, #tpu.memory_space<vmem>>, vector<1x32xf32>
    %5 = vector.broadcast %4 : vector<1x32xf32> to vector<128x32xf32>
    %6 = arith.addf %3, %5 : vector<128x32xf32>
    %cst_9 = arith.constant 0.000000e+00 : f32
    %7 = vector.broadcast %cst_9 : f32 to vector<128x32xf32>
    %8 = arith.maximumf %6, %7 : vector<128x32xf32>
    %9 = arith.truncf %8 : vector<128x32xf32> to vector<128x32xbf16>
    %10 = vector.shape_cast %9 : vector<128x32xbf16> to vector<1x1x2x8x8x32xbf16>
    %11 = vector.shape_cast %10 : vector<1x1x2x8x8x32xbf16> to vector<2x8x8x32xbf16>
    %cst_10 = arith.constant 0.000000e+00 : bf16
    %12 = vector.broadcast %cst_10 : bf16 to vector<2x1x8x32xbf16>
    %13 = vector.extract_strided_slice %11 {offsets = [0, 0, 0, 0], sizes = [2, 7, 8, 32], strides = [1, 1, 1, 1]} : vector<2x8x8x32xbf16> to vector<2x7x8x32xbf16>
    %14 = tpu.concatenate %12, %13 in 1 : vector<2x1x8x32xbf16>, vector<2x7x8x32xbf16> -> vector<2x8x8x32xbf16>
    %cst_11 = arith.constant 0.000000e+00 : bf16
    %15 = vector.broadcast %cst_11 : bf16 to vector<2x8x1x32xbf16>
    %16 = vector.extract_strided_slice %14 {offsets = [0, 0, 0, 0], sizes = [2, 8, 7, 32], strides = [1, 1, 1, 1]} : vector<2x8x8x32xbf16> to vector<2x8x7x32xbf16>
    %17 = tpu.concatenate %15, %16 in 2 : vector<2x8x1x32xbf16>, vector<2x8x7x32xbf16> -> vector<2x8x8x32xbf16>
    %18 = vector.shape_cast %10 : vector<1x1x2x8x8x32xbf16> to vector<2x8x8x32xbf16>
    %cst_12 = arith.constant 0.000000e+00 : bf16
    %19 = vector.broadcast %cst_12 : bf16 to vector<2x1x8x32xbf16>
    %20 = vector.extract_strided_slice %18 {offsets = [0, 0, 0, 0], sizes = [2, 7, 8, 32], strides = [1, 1, 1, 1]} : vector<2x8x8x32xbf16> to vector<2x7x8x32xbf16>
    %21 = tpu.concatenate %19, %20 in 1 : vector<2x1x8x32xbf16>, vector<2x7x8x32xbf16> -> vector<2x8x8x32xbf16>
    %22 = vector.shape_cast %10 : vector<1x1x2x8x8x32xbf16> to vector<2x8x8x32xbf16>
    %cst_13 = arith.constant 0.000000e+00 : bf16
    %23 = vector.broadcast %cst_13 : bf16 to vector<2x1x8x32xbf16>
    %24 = vector.extract_strided_slice %22 {offsets = [0, 0, 0, 0], sizes = [2, 7, 8, 32], strides = [1, 1, 1, 1]} : vector<2x8x8x32xbf16> to vector<2x7x8x32xbf16>
    %25 = tpu.concatenate %23, %24 in 1 : vector<2x1x8x32xbf16>, vector<2x7x8x32xbf16> -> vector<2x8x8x32xbf16>
    %26 = vector.extract_strided_slice %25 {offsets = [0, 0, 1, 0], sizes = [2, 8, 7, 32], strides = [1, 1, 1, 1]} : vector<2x8x8x32xbf16> to vector<2x8x7x32xbf16>
    %cst_14 = arith.constant 0.000000e+00 : bf16
    %27 = vector.broadcast %cst_14 : bf16 to vector<2x8x1x32xbf16>
    %28 = tpu.concatenate %26, %27 in 2 : vector<2x8x7x32xbf16>, vector<2x8x1x32xbf16> -> vector<2x8x8x32xbf16>
    %29 = vector.shape_cast %10 : vector<1x1x2x8x8x32xbf16> to vector<2x8x8x32xbf16>
    %cst_15 = arith.constant 0.000000e+00 : bf16
    %30 = vector.broadcast %cst_15 : bf16 to vector<2x8x1x32xbf16>
    %31 = vector.extract_strided_slice %29 {offsets = [0, 0, 0, 0], sizes = [2, 8, 7, 32], strides = [1, 1, 1, 1]} : vector<2x8x8x32xbf16> to vector<2x8x7x32xbf16>
    %32 = tpu.concatenate %30, %31 in 2 : vector<2x8x1x32xbf16>, vector<2x8x7x32xbf16> -> vector<2x8x8x32xbf16>
    %33 = vector.shape_cast %10 : vector<1x1x2x8x8x32xbf16> to vector<2x8x8x32xbf16>
    %34 = vector.shape_cast %10 : vector<1x1x2x8x8x32xbf16> to vector<2x8x8x32xbf16>
    %35 = vector.extract_strided_slice %34 {offsets = [0, 0, 1, 0], sizes = [2, 8, 7, 32], strides = [1, 1, 1, 1]} : vector<2x8x8x32xbf16> to vector<2x8x7x32xbf16>
    %cst_16 = arith.constant 0.000000e+00 : bf16
    %36 = vector.broadcast %cst_16 : bf16 to vector<2x8x1x32xbf16>
    %37 = tpu.concatenate %35, %36 in 2 : vector<2x8x7x32xbf16>, vector<2x8x1x32xbf16> -> vector<2x8x8x32xbf16>
    %38 = vector.shape_cast %10 : vector<1x1x2x8x8x32xbf16> to vector<2x8x8x32xbf16>
    %39 = vector.extract_strided_slice %38 {offsets = [0, 1, 0, 0], sizes = [2, 7, 8, 32], strides = [1, 1, 1, 1]} : vector<2x8x8x32xbf16> to vector<2x7x8x32xbf16>
    %cst_17 = arith.constant 0.000000e+00 : bf16
    %40 = vector.broadcast %cst_17 : bf16 to vector<2x1x8x32xbf16>
    %41 = tpu.concatenate %39, %40 in 1 : vector<2x7x8x32xbf16>, vector<2x1x8x32xbf16> -> vector<2x8x8x32xbf16>
    %cst_18 = arith.constant 0.000000e+00 : bf16
    %42 = vector.broadcast %cst_18 : bf16 to vector<2x8x1x32xbf16>
    %43 = vector.extract_strided_slice %41 {offsets = [0, 0, 0, 0], sizes = [2, 8, 7, 32], strides = [1, 1, 1, 1]} : vector<2x8x8x32xbf16> to vector<2x8x7x32xbf16>
    %44 = tpu.concatenate %42, %43 in 2 : vector<2x8x1x32xbf16>, vector<2x8x7x32xbf16> -> vector<2x8x8x32xbf16>
    %45 = vector.shape_cast %10 : vector<1x1x2x8x8x32xbf16> to vector<2x8x8x32xbf16>
    %46 = vector.extract_strided_slice %45 {offsets = [0, 1, 0, 0], sizes = [2, 7, 8, 32], strides = [1, 1, 1, 1]} : vector<2x8x8x32xbf16> to vector<2x7x8x32xbf16>
    %cst_19 = arith.constant 0.000000e+00 : bf16
    %47 = vector.broadcast %cst_19 : bf16 to vector<2x1x8x32xbf16>
    %48 = tpu.concatenate %46, %47 in 1 : vector<2x7x8x32xbf16>, vector<2x1x8x32xbf16> -> vector<2x8x8x32xbf16>
    %49 = vector.shape_cast %10 : vector<1x1x2x8x8x32xbf16> to vector<2x8x8x32xbf16>
    %50 = vector.extract_strided_slice %49 {offsets = [0, 1, 0, 0], sizes = [2, 7, 8, 32], strides = [1, 1, 1, 1]} : vector<2x8x8x32xbf16> to vector<2x7x8x32xbf16>
    %cst_20 = arith.constant 0.000000e+00 : bf16
    %51 = vector.broadcast %cst_20 : bf16 to vector<2x1x8x32xbf16>
    %52 = tpu.concatenate %50, %51 in 1 : vector<2x7x8x32xbf16>, vector<2x1x8x32xbf16> -> vector<2x8x8x32xbf16>
    %53 = vector.extract_strided_slice %52 {offsets = [0, 0, 1, 0], sizes = [2, 8, 7, 32], strides = [1, 1, 1, 1]} : vector<2x8x8x32xbf16> to vector<2x8x7x32xbf16>
    %cst_21 = arith.constant 0.000000e+00 : bf16
    %54 = vector.broadcast %cst_21 : bf16 to vector<2x8x1x32xbf16>
    %55 = tpu.concatenate %53, %54 in 2 : vector<2x8x7x32xbf16>, vector<2x8x1x32xbf16> -> vector<2x8x8x32xbf16>
    %56 = tpu.concatenate %17, %21, %28, %32, %33, %37, %44, %48, %55 in 3 : vector<2x8x8x32xbf16>, vector<2x8x8x32xbf16>, vector<2x8x8x32xbf16>, vector<2x8x8x32xbf16>, vector<2x8x8x32xbf16>, vector<2x8x8x32xbf16>, vector<2x8x8x32xbf16>, vector<2x8x8x32xbf16>, vector<2x8x8x32xbf16> -> vector<2x8x8x288xbf16>
    %57 = vector.shape_cast %56 : vector<2x8x8x288xbf16> to vector<128x288xbf16>
    %c0_22 = arith.constant 0 : index
    %c0_23 = arith.constant 0 : index
    %58 = vector.load %arg4[%c0_22, %c0_23] : memref<288x32xbf16, #tpu.memory_space<vmem>>, vector<288x32xbf16>
    %cst_24 = arith.constant dense<0.000000e+00> : vector<128x32xf32>
    %59 = tpu.matmul %57, %58, %cst_24 {dimension_numbers = #tpu.dot_dimension_numbers<[1], [0], [0], [1], [0, 0, 1, 1], [], []>} : vector<128x288xbf16>, vector<288x32xbf16>, vector<128x32xf32> -> vector<128x32xf32>
    %c0_25 = arith.constant 0 : index
    %c0_26 = arith.constant 0 : index
    %60 = vector.load %arg5[%c0_25, %c0_26] : memref<1x32xf32, #tpu.memory_space<vmem>>, vector<1x32xf32>
    %61 = vector.broadcast %60 : vector<1x32xf32> to vector<128x32xf32>
    %62 = arith.addf %59, %61 : vector<128x32xf32>
    %cst_27 = arith.constant 0.000000e+00 : f32
    %63 = vector.broadcast %cst_27 : f32 to vector<128x32xf32>
    %64 = arith.maximumf %62, %63 : vector<128x32xf32>
    %65 = arith.truncf %64 : vector<128x32xf32> to vector<128x32xbf16>
    %c0_28 = arith.constant 0 : index
    %c0_29 = arith.constant 0 : index
    %66 = vector.load %arg6[%c0_28, %c0_29] : memref<32x128xbf16, #tpu.memory_space<vmem>>, vector<32x128xbf16>
    %cst_30 = arith.constant dense<0.000000e+00> : vector<128x128xf32>
    %67 = tpu.matmul %65, %66, %cst_30 {dimension_numbers = #tpu.dot_dimension_numbers<[1], [0], [0], [1], [0, 0, 1, 1], [], []>} : vector<128x32xbf16>, vector<32x128xbf16>, vector<128x128xf32> -> vector<128x128xf32>
    %c0_31 = arith.constant 0 : index
    %c0_32 = arith.constant 0 : index
    %68 = vector.load %arg7[%c0_31, %c0_32] : memref<1x128xf32, #tpu.memory_space<vmem>>, vector<1x128xf32>
    %69 = vector.broadcast %68 : vector<1x128xf32> to vector<128x128xf32>
    %70 = arith.addf %67, %69 : vector<128x128xf32>
    %71 = vector.shape_cast %0 : vector<1x1x2x8x8x128xbf16> to vector<2x8x8x128xbf16>
    %72 = vector.shape_cast %71 : vector<2x8x8x128xbf16> to vector<128x128xbf16>
    %73 = arith.extf %72 : vector<128x128xbf16> to vector<128x128xf32>
    %74 = arith.addf %70, %73 : vector<128x128xf32>
    %cst_33 = arith.constant 0.000000e+00 : f32
    %75 = vector.broadcast %cst_33 : f32 to vector<128x128xf32>
    %76 = arith.maximumf %74, %75 : vector<128x128xf32>
    %77 = vector.shape_cast %76 : vector<128x128xf32> to vector<2x8x8x128xf32>
    %c0_34 = arith.constant 0 : index
    %c0_35 = arith.constant 0 : index
    %c0_36 = arith.constant 0 : index
    %c0_37 = arith.constant 0 : index
    %78 = vector.load %arg8[%c0_34, %c0_35, %c0_36, %c0_37] : memref<2x8x8x128xf32, #tpu.memory_space<vmem>>, vector<2x8x8x128xf32>
    tpu.vector_store %arg8[%c0_34, %c0_35, %c0_36, %c0_37], %77 {strides = array<i32>} : memref<2x8x8x128xf32, #tpu.memory_space<vmem>>, vector<2x8x8x128xf32>,
    return
  }
  func.func @transform_0(%arg0: i32) -> (i32, i32, i32, i32, i32, i32) {
    %c0_i32 = arith.constant 0 : i32
    %c0_i32_0 = arith.constant 0 : i32
    %c0_i32_1 = arith.constant 0 : i32
    %c0_i32_2 = arith.constant 0 : i32
    %c0_i32_3 = arith.constant 0 : i32
    %c0_i32_4 = arith.constant 0 : i32
    return %c0_i32, %c0_i32_0, %arg0, %c0_i32_1, %c0_i32_2, %c0_i32_3 : i32, i32, i32, i32, i32, i32
  }
  func.func @transform_1(%arg0: i32) -> (i32, i32) {
    %c0_i32 = arith.constant 0 : i32
    %c0_i32_0 = arith.constant 0 : i32
    %c0_i32_1 = arith.constant 0 : i32
    return %c0_i32, %c0_i32_0 : i32, i32
  }
  func.func @transform_2(%arg0: i32) -> (i32, i32) {
    %c0_i32 = arith.constant 0 : i32
    %c0_i32_0 = arith.constant 0 : i32
    %c0_i32_1 = arith.constant 0 : i32
    return %c0_i32, %c0_i32_0 : i32, i32
  }
  func.func @transform_3(%arg0: i32) -> (i32, i32) {
    %c0_i32 = arith.constant 0 : i32
    %c0_i32_0 = arith.constant 0 : i32
    %c0_i32_1 = arith.constant 0 : i32
    return %c0_i32, %c0_i32_0 : i32, i32
  }
  func.func @transform_4(%arg0: i32) -> (i32, i32) {
    %c0_i32 = arith.constant 0 : i32
    %c0_i32_0 = arith.constant 0 : i32
    %c0_i32_1 = arith.constant 0 : i32
    return %c0_i32, %c0_i32_0 : i32, i32
  }
  func.func @transform_5(%arg0: i32) -> (i32, i32) {
    %c0_i32 = arith.constant 0 : i32
    %c0_i32_0 = arith.constant 0 : i32
    %c0_i32_1 = arith.constant 0 : i32
    return %c0_i32, %c0_i32_0 : i32, i32
  }
  func.func @transform_6(%arg0: i32) -> (i32, i32) {
    %c0_i32 = arith.constant 0 : i32
    %c0_i32_0 = arith.constant 0 : i32
    %c0_i32_1 = arith.constant 0 : i32
    return %c0_i32, %c0_i32_0 : i32, i32
  }
  func.func @transform_7(%arg0: i32) -> (i32, i32, i32, i32) {
    %c0_i32 = arith.constant 0 : i32
    %c0_i32_0 = arith.constant 0 : i32
    %c0_i32_1 = arith.constant 0 : i32
    %c0_i32_2 = arith.constant 0 : i32
    return %arg0, %c0_i32, %c0_i32_0, %c0_i32_1 : i32, i32, i32, i32
  }
}

</mosaic_0001>

<llo_original>
// kernel: fwd.3
$region0: #{fwd.3}
  #allocation0 [shape = 'u32[]', space=smem, size = 0x4, offset = 0x4, fixed_abs, tag = 'smem constant byte address 0x4 - core index']
  #allocation1 [shape = 'u32[144,128]{1,0:T(1,128)}', space=vmem, size = 0x12000, scoped, tag = 'internal scratch']
  %s0 = inlined_call_operand.vmem [shape: bf16[1,1,2,8,8,128], index: 0, kind: input, shape index: {}]
  %s1 = inlined_call_operand.vmem [shape: bf16[128,32], index: 1, kind: input, shape index: {}]
  %s2 = inlined_call_operand.vmem [shape: f32[1,32], index: 2, kind: input, shape index: {}]
  %s3 = inlined_call_operand.vmem [shape: bf16[288,32], index: 3, kind: input, shape index: {}]
  %s4 = inlined_call_operand.vmem [shape: f32[1,32], index: 4, kind: input, shape index: {}]
  %s5 = inlined_call_operand.vmem [shape: bf16[32,128], index: 5, kind: input, shape index: {}]
  %s6 = inlined_call_operand.vmem [shape: f32[1,128], index: 6, kind: input, shape index: {}]
  %s7 = inlined_call_operand.hbm [shape: f32[2,8,8,128], index: 7, kind: output, shape index: {}]
  %s8 = sld [smem:[#allocation0]]
  $region38: #{fwd.3} parent=0
    _
  %s10 = ssub.s32 1, %s8
  %s11 = scalar_select 0, %s10, %s8
  $region1: #{fwd.3} parent=0
    #allocation2 [shape = 'u8[65536]{0}', space=vmem, size = 0x10000, scoped, tag = 'output window, operand 0, single buffered']
    #allocation3 [shape = 's32[1]{0}', space=sflag, size = 0x4, scoped, tag = 'scoped memory for fwd.3']
    %12 = vsyncpa [#allocation3], 0
    // Predicated region
    $region2: #{fwd.3} parent=1 // pred_check
      _
    $region3: #{fwd.3} parent=1 // pred_check_branch
      %14 = sbr.rel (0) target = $region5
    $region4: #{fwd.3} parent=1 // pred_region
      _
    $region5: #{fwd.3} parent=1 // pred_fallthru
      _
    // Predicated region
    $region6: #{fwd.3} parent=1 // pred_check
      _
    $region7: #{fwd.3} parent=1 // pred_check_branch
      %16 = sbr.rel (0) target = $region9
    $region8: #{fwd.3} parent=1 // pred_region
      _
    $region9: #{fwd.3} parent=1 // pred_fallthru
      _
    // Predicated region
    $region10: #{fwd.3} parent=1 // pred_check
      _
    $region11: #{fwd.3} parent=1 // pred_check_branch
      %18 = sbr.rel (0) target = $region13
    $region12: #{fwd.3} parent=1 // pred_region
      _
    $region13: #{fwd.3} parent=1 // pred_fallthru
      _
    // Predicated region
    $region14: #{fwd.3} parent=1 // pred_check
      _
    $region15: #{fwd.3} parent=1 // pred_check_branch
      %20 = sbr.rel (0) target = $region17
    $region16: #{fwd.3} parent=1 // pred_region
      _
    $region17: #{fwd.3} parent=1 // pred_fallthru
      _
    // Predicated region
    $region18: #{fwd.3} parent=1 // pred_check
      _
    $region19: #{fwd.3} parent=1 // pred_check_branch
      %22 = sbr.rel (0) target = $region21
    $region20: #{fwd.3} parent=1 // pred_region
      _
    $region21: #{fwd.3} parent=1 // pred_fallthru
      _
    // Predicated region
    $region22: #{fwd.3} parent=1 // pred_check
      _
    $region23: #{fwd.3} parent=1 // pred_check_branch
      %24 = sbr.rel (0) target = $region25
    $region24: #{fwd.3} parent=1 // pred_region
      _
    $region25: #{fwd.3} parent=1 // pred_fallthru
      _
    // Predicated region
    $region26: #{fwd.3} parent=1 // pred_check
      _
    $region27: #{fwd.3} parent=1 // pred_check_branch
      %26 = sbr.rel (0) target = $region29
    $region28: #{fwd.3} parent=1 // pred_region
      _
    $region29: #{fwd.3} parent=1 // pred_fallthru
      _
    %v28 = vld [vmem:[%s0] sm:$0xf]
    %v29 = vld [vmem:[%s0 + $0x4] sm:$0xf]
    %v30 = vld [vmem:[%s0 + $0x8] sm:$0xf]
    %v31 = vld [vmem:[%s0 + $0xc] sm:$0xf]
    %v32 = vld [vmem:[%s0 + $0x10] sm:$0xf]
    %v33 = vld [vmem:[%s0 + $0x14] sm:$0xf]
    %v34 = vld [vmem:[%s0 + $0x18] sm:$0xf]
    %v35 = vld [vmem:[%s0 + $0x1c] sm:$0xf]
    %v36 = vld [vmem:[%s0 + $0x20] sm:$0xf]
    %v37 = vld [vmem:[%s0 + $0x24] sm:$0xf]
    %v38 = vld [vmem:[%s0 + $0x28] sm:$0xf]
    %v39 = vld [vmem:[%s0 + $0x2c] sm:$0xf]
    %v40 = vld [vmem:[%s0 + $0x30] sm:$0xf]
    %v41 = vld [vmem:[%s0 + $0x34] sm:$0xf]
    %v42 = vld [vmem:[%s0 + $0x38] sm:$0xf]
    %v43 = vld [vmem:[%s0 + $0x3c] sm:$0xf]
    %v44 = vld [vmem:[%s1] sm:$0xf]
    %v45 = vld [vmem:[%s1 + $0x4] sm:$0xf]
    %v46 = vld [vmem:[%s1 + $0x8] sm:$0xf]
    %v47 = vld [vmem:[%s1 + $0xc] sm:$0xf]
    %v48 = vld [vmem:[%s1 + $0x10] sm:$0xf]
    %v49 = vld [vmem:[%s1 + $0x14] sm:$0xf]
    %v50 = vld [vmem:[%s1 + $0x18] sm:$0xf]
    %v51 = vld [vmem:[%s1 + $0x1c] sm:$0xf]
    %v52 = vld [vmem:[%s1 + $0x20] sm:$0xf]
    %v53 = vld [vmem:[%s1 + $0x24] sm:$0xf]
    %v54 = vld [vmem:[%s1 + $0x28] sm:$0xf]
    %v55 = vld [vmem:[%s1 + $0x2c] sm:$0xf]
    %v56 = vld [vmem:[%s1 + $0x30] sm:$0xf]
    %v57 = vld [vmem:[%s1 + $0x34] sm:$0xf]
    %v58 = vld [vmem:[%s1 + $0x38] sm:$0xf]
    %v59 = vld [vmem:[%s1 + $0x3c] sm:$0xf]
    %v60 = vld [vmem:[%s2] sm:$0x1]
    %v62 = vlaneseq
    %v63 = vshrl.u32 %v62, 7
    %v64 = vsub.s32 0, %v63
    %v65 = vrot.slane %v60, %v64
    %v83 = vunpack.c.l.b16 %v28
    %v84 = vunpack.c.l.b16 %v29
    %v85 = vunpack.c.l.b16 %v30
    %v86 = vunpack.c.l.b16 %v31
    %v87 = vunpack.c.l.b16 %v32
    %v88 = vunpack.c.l.b16 %v33
    %v89 = vunpack.c.l.b16 %v34
    %v90 = vunpack.c.l.b16 %v35
    %v91 = vunpack.c.l.b16 %v36
    %v92 = vunpack.c.l.b16 %v37
    %v93 = vunpack.c.l.b16 %v38
    %v94 = vunpack.c.l.b16 %v39
    %v95 = vunpack.c.l.b16 %v40
    %v96 = vunpack.c.l.b16 %v41
    %v97 = vunpack.c.l.b16 %v42
    %v98 = vunpack.c.l.b16 %v43
    %v99 = vpack.c.b16 %v84, %v83
    %v100 = vpack.c.b16 %v86, %v85
    %v101 = vpack.c.b16 %v88, %v87
    %v102 = vpack.c.b16 %v90, %v89
    %v103 = vpack.c.b16 %v92, %v91
    %v104 = vpack.c.b16 %v94, %v93
    %v105 = vpack.c.b16 %v96, %v95
    %v106 = vpack.c.b16 %v98, %v97
    %v131 = vunpack.c.l.b16 %v44
    %v132 = vunpack.c.l.b16 %v45
    %v133 = vunpack.c.l.b16 %v46
    %v134 = vunpack.c.l.b16 %v47
    %v135 = vunpack.c.l.b16 %v48
    %v136 = vunpack.c.l.b16 %v49
    %v137 = vunpack.c.l.b16 %v50
    %v138 = vunpack.c.l.b16 %v51
    %v139 = vunpack.c.l.b16 %v52
    %v140 = vunpack.c.l.b16 %v53
    %v141 = vunpack.c.l.b16 %v54
    %v142 = vunpack.c.l.b16 %v55
    %v143 = vunpack.c.l.b16 %v56
    %v144 = vunpack.c.l.b16 %v57
    %v145 = vunpack.c.l.b16 %v58
    %v146 = vunpack.c.l.b16 %v59
    %v147 = vpack.c.b16 %v132, %v131
    %v148 = vpack.c.b16 %v134, %v133
    %v149 = vpack.c.b16 %v136, %v135
    %v150 = vpack.c.b16 %v138, %v137
    %v151 = vpack.c.b16 %v140, %v139
    %v152 = vpack.c.b16 %v142, %v141
    %v153 = vpack.c.b16 %v144, %v143
    %v154 = vpack.c.b16 %v146, %v145
    %163 = vmatprep.subr.bf16.mxu0 0
    %164 = vmatpush1.bf16.msra.mxu0 %v154
    %165 = vmatprep.subr.bf16.mxu0 0
    %166 = vmatpush1.bf16.msra.mxu0 %v153
    %167 = vmatprep.subr.bf16.mxu0 0
    %168 = vmatpush1.bf16.msra.mxu0 %v152
    %169 = vmatprep.subr.bf16.mxu0 0
    %170 = vmatpush1.bf16.msra.mxu0 %v151
    %171 = vmatprep.subr.bf16.mxu0 0
    %172 = vmatpush1.bf16.msra.mxu0 %v150
    %173 = vmatprep.subr.bf16.mxu0 0
    %174 = vmatpush1.bf16.msra.mxu0 %v149
    %175 = vmatprep.subr.bf16.mxu0 0
    %176 = vmatpush1.bf16.msra.mxu0 %v148
    %177 = vmatprep.subr.bf16.mxu0 0
    %178 = vmatpush1.bf16.msra.mxu0 %v147
    %179 = vmatprep.subr.bf16.mxu0 0
    %180 = vmatpush2.bf16.msra.mxu0 0
    %181 = vmatprep.subr.bf16.mxu0 0
    %182 = vmatpush2.bf16.msra.mxu0 0
    %183 = vmatprep.subr.bf16.mxu0 0
    %184 = vmatpush2.bf16.msra.mxu0 0
    %185 = vmatprep.subr.bf16.mxu0 0
    %186 = vmatpush2.bf16.msra.mxu0 0
    %187 = vmatprep.subr.bf16.mxu0 0
    %188 = vmatpush2.bf16.msra.mxu0 0
    %189 = vmatprep.subr.bf16.mxu0 0
    %190 = vmatpush2.bf16.msra.mxu0 0
    %191 = vmatprep.subr.bf16.mxu0 0
    %192 = vmatpush2.bf16.msra.mxu0 0
    %193 = vmatprep.subr.bf16.mxu0 0
    %194 = vmatpush2.bf16.msra.mxu0 0
    %195 = vmatprep.mubr.bf16.mxu0 0
    %196 = vmatmul.mubr.bf16.gmra.mxu0 %v99
    %v197 = vpop.f32.mrf.mxu0
    %v198 = vadd.f32 %v65, %v197
    %v199 = vpop.f32.mrf.mxu0
    %v200 = vpop.f32.mrf.mxu0
    %v201 = vadd.f32 %v65, %v200
    %v202 = vpop.f32.mrf.mxu0
    %203 = vmatprep.mubr.bf16.mxu0 0
    %204 = vmatmul.mubr.bf16.gmra.mxu0 %v100
    %v205 = vpop.f32.mrf.mxu0
    %v206 = vadd.f32 %v65, %v205
    %v207 = vpop.f32.mrf.mxu0
    %v208 = vpop.f32.mrf.mxu0
    %v209 = vadd.f32 %v65, %v208
    %v210 = vpop.f32.mrf.mxu0
    %211 = vmatprep.mubr.bf16.mxu0 0
    %212 = vmatmul.mubr.bf16.gmra.mxu0 %v101
    %v213 = vpop.f32.mrf.mxu0
    %v214 = vadd.f32 %v65, %v213
    %v215 = vpop.f32.mrf.mxu0
    %v216 = vpop.f32.mrf.mxu0
    %v217 = vadd.f32 %v65, %v216
    %v218 = vpop.f32.mrf.mxu0
    %219 = vmatprep.mubr.bf16.mxu0 0
    %220 = vmatmul.mubr.bf16.gmra.mxu0 %v102
    %v221 = vpop.f32.mrf.mxu0
    %v222 = vadd.f32 %v65, %v221
    %v223 = vpop.f32.mrf.mxu0
    %v224 = vpop.f32.mrf.mxu0
    %v225 = vadd.f32 %v65, %v224
    %v226 = vpop.f32.mrf.mxu0
    %227 = vmatprep.mubr.bf16.mxu0 0
    %228 = vmatmul.mubr.bf16.gmra.mxu0 %v103
    %v229 = vpop.f32.mrf.mxu0
    %v230 = vadd.f32 %v65, %v229
    %v231 = vpop.f32.mrf.mxu0
    %v232 = vpop.f32.mrf.mxu0
    %v233 = vadd.f32 %v65, %v232
    %v234 = vpop.f32.mrf.mxu0
    %235 = vmatprep.mubr.bf16.mxu0 0
    %236 = vmatmul.mubr.bf16.gmra.mxu0 %v104
    %v237 = vpop.f32.mrf.mxu0
    %v238 = vadd.f32 %v65, %v237
    %v239 = vpop.f32.mrf.mxu0
    %v240 = vpop.f32.mrf.mxu0
    %v241 = vadd.f32 %v65, %v240
    %v242 = vpop.f32.mrf.mxu0
    %243 = vmatprep.mubr.bf16.mxu0 0
    %244 = vmatmul.mubr.bf16.gmra.mxu0 %v105
    %v245 = vpop.f32.mrf.mxu0
    %v246 = vadd.f32 %v65, %v245
    %v247 = vpop.f32.mrf.mxu0
    %v248 = vpop.f32.mrf.mxu0
    %v249 = vadd.f32 %v65, %v248
    %v250 = vpop.f32.mrf.mxu0
    %251 = vmatprep.mubr.bf16.mxu0 0
    %252 = vmatmul.mubr.bf16.gmra.mxu0 %v106
    %v253 = vpop.f32.mrf.mxu0
    %v254 = vadd.f32 %v65, %v253
    %v255 = vpop.f32.mrf.mxu0
    %v256 = vpop.f32.mrf.mxu0
    %v257 = vadd.f32 %v65, %v256
    %v258 = vpop.f32.mrf.mxu0
    %259 = vdwg.mxu0
    %v260 = vmax.f32 %v198, 0.0
    %v261 = vmax.f32 %v201, 0.0
    %v262 = vmax.f32 %v206, 0.0
    %v263 = vmax.f32 %v209, 0.0
    %v264 = vmax.f32 %v214, 0.0
    %v265 = vmax.f32 %v217, 0.0
    %v266 = vmax.f32 %v222, 0.0
    %v267 = vmax.f32 %v225, 0.0
    %v268 = vmax.f32 %v230, 0.0
    %v269 = vmax.f32 %v233, 0.0
    %v270 = vmax.f32 %v238, 0.0
    %v271 = vmax.f32 %v241, 0.0
    %v272 = vmax.f32 %v246, 0.0
    %v273 = vmax.f32 %v249, 0.0
    %v274 = vmax.f32 %v254, 0.0
    %v275 = vmax.f32 %v257, 0.0
    %v276 = vpack.c.bf16 %v261, %v260
    %v277 = vpack.c.bf16 %v263, %v262
    %v278 = vpack.c.bf16 %v265, %v264
    %v279 = vpack.c.bf16 %v267, %v266
    %v280 = vpack.c.bf16 %v269, %v268
    %v281 = vpack.c.bf16 %v271, %v270
    %v282 = vpack.c.bf16 %v273, %v272
    %v283 = vpack.c.bf16 %v275, %v274
    %v292 = vunpack.c.l.b16 %v276
    %v293 = vunpack.c.h.b16 %v276
    %v294 = vunpack.c.l.b16 %v277
    %v295 = vunpack.c.h.b16 %v277
    %v296 = vunpack.c.l.b16 %v278
    %v297 = vunpack.c.h.b16 %v278
    %v298 = vunpack.c.l.b16 %v279
    %v299 = vunpack.c.h.b16 %v279
    %v300 = vunpack.c.l.b16 %v280
    %v301 = vunpack.c.h.b16 %v280
    %v302 = vunpack.c.l.b16 %v281
    %v303 = vunpack.c.h.b16 %v281
    %v304 = vunpack.c.l.b16 %v282
    %v305 = vunpack.c.h.b16 %v282
    %v306 = vunpack.c.l.b16 %v283
    %v307 = vunpack.c.h.b16 %v283
    %v308 = vpack.c.b16 %v292, %v292
    %v309 = vpack.c.b16 %v293, %v293
    %v310 = vpack.c.b16 %v294, %v294
    %v311 = vpack.c.b16 %v295, %v295
    %v312 = vpack.c.b16 %v296, %v296
    %v313 = vpack.c.b16 %v297, %v297
    %v314 = vpack.c.b16 %v298, %v298
    %v315 = vpack.c.b16 %v299, %v299
    %v316 = vpack.c.b16 %v300, %v300
    %v317 = vpack.c.b16 %v301, %v301
    %v318 = vpack.c.b16 %v302, %v302
    %v319 = vpack.c.b16 %v303, %v303
    %v320 = vpack.c.b16 %v304, %v304
    %v321 = vpack.c.b16 %v305, %v305
    %v322 = vpack.c.b16 %v306, %v306
    %v323 = vpack.c.b16 %v307, %v307
    %v325 = vshrl.u32 0, 16
    %v327 = vrot.slane %v325, 7
    %v328 = vshll.u32 0, 16
    %v330 = vor.u32 %v327, %v328
    %v332 = vshrl.u32 %v308, 16
    %v334 = vrot.slane %v332, 7
    %v335 = vshll.u32 %v308, 16
    %v337 = vor.u32 %v334, %v335
    %v339 = vshrl.u32 %v309, 16
    %v341 = vrot.slane %v339, 7
    %v342 = vshll.u32 %v309, 16
    %v344 = vor.u32 %v341, %v342
    %v346 = vshrl.u32 %v310, 16
    %v348 = vrot.slane %v346, 7
    %v349 = vshll.u32 %v310, 16
    %v351 = vor.u32 %v348, %v349
    %v353 = vshrl.u32 %v311, 16
    %v355 = vrot.slane %v353, 7
    %v356 = vshll.u32 %v311, 16
    %v358 = vor.u32 %v355, %v356
    %v360 = vshrl.u32 %v312, 16
    %v362 = vrot.slane %v360, 7
    %v363 = vshll.u32 %v312, 16
    %v365 = vor.u32 %v362, %v363
    %v367 = vshrl.u32 %v313, 16
    %v369 = vrot.slane %v367, 7
    %v370 = vshll.u32 %v313, 16
    %v372 = vor.u32 %v369, %v370
    %v374 = vshrl.u32 %v314, 16
    %v376 = vrot.slane %v374, 7
    %v377 = vshll.u32 %v314, 16
    %v379 = vor.u32 %v376, %v377
    %v381 = vshrl.u32 %v316, 16
    %v383 = vrot.slane %v381, 7
    %v384 = vshll.u32 %v316, 16
    %v386 = vor.u32 %v383, %v384
    %v388 = vshrl.u32 %v317, 16
    %v390 = vrot.slane %v388, 7
    %v391 = vshll.u32 %v317, 16
    %v393 = vor.u32 %v390, %v391
    %v395 = vshrl.u32 %v318, 16
    %v397 = vrot.slane %v395, 7
    %v398 = vshll.u32 %v318, 16
    %v400 = vor.u32 %v397, %v398
    %v402 = vshrl.u32 %v319, 16
    %v404 = vrot.slane %v402, 7
    %v405 = vshll.u32 %v319, 16
    %v407 = vor.u32 %v404, %v405
    %v409 = vshrl.u32 %v320, 16
    %v411 = vrot.slane %v409, 7
    %v412 = vshll.u32 %v320, 16
    %v414 = vor.u32 %v411, %v412
    %v416 = vshrl.u32 %v321, 16
    %v418 = vrot.slane %v416, 7
    %v419 = vshll.u32 %v321, 16
    %v421 = vor.u32 %v418, %v419
    %v423 = vshrl.u32 %v322, 16
    %v425 = vrot.slane %v423, 7
    %v426 = vshll.u32 %v322, 16
    %v428 = vor.u32 %v425, %v426
    %vm444 = vcmask 1040384
    %vm445 = vsmask.f32 256
    %vm446 = vmand %vm444, %vm445
    %v447 = vsel %vm446, 0, %v330
    %v448 = vsel %vm446, 0, %v337
    %v449 = vsel %vm446, 0, %v344
    %v450 = vsel %vm446, 0, %v351
    %v451 = vsel %vm446, 0, %v358
    %v452 = vsel %vm446, 0, %v365
    %v453 = vsel %vm446, 0, %v372
    %v454 = vsel %vm446, 0, %v379
    %v455 = vsel %vm446, 0, %v386
    %v456 = vsel %vm446, 0, %v393
    %v457 = vsel %vm446, 0, %v400
    %v458 = vsel %vm446, 0, %v407
    %v459 = vsel %vm446, 0, %v414
    %v460 = vsel %vm446, 0, %v421
    %v461 = vsel %vm446, 0, %v428
    %v462 = vrot.slane %v328, 1
    %v463 = vor.u32 %v325, %v462
    %v464 = vrot.slane %v335, 1
    %v465 = vor.u32 %v332, %v464
    %v466 = vrot.slane %v342, 1
    %v467 = vor.u32 %v339, %v466
    %v468 = vrot.slane %v349, 1
    %v469 = vor.u32 %v346, %v468
    %v470 = vrot.slane %v356, 1
    %v471 = vor.u32 %v353, %v470
    %v472 = vrot.slane %v363, 1
    %v473 = vor.u32 %v360, %v472
    %v474 = vrot.slane %v370, 1
    %v475 = vor.u32 %v367, %v474
    %v476 = vrot.slane %v377, 1
    %v477 = vor.u32 %v374, %v476
    %v478 = vrot.slane %v384, 1
    %v479 = vor.u32 %v381, %v478
    %v480 = vrot.slane %v391, 1
    %v481 = vor.u32 %v388, %v480
    %v482 = vrot.slane %v398, 1
    %v483 = vor.u32 %v395, %v482
    %v484 = vrot.slane %v405, 1
    %v485 = vor.u32 %v402, %v484
    %v486 = vrot.slane %v412, 1
    %v487 = vor.u32 %v409, %v486
    %v488 = vrot.slane %v419, 1
    %v489 = vor.u32 %v416, %v488
    %v490 = vrot.slane %v426, 1
    %v491 = vor.u32 %v423, %v490
    %vm507 = vcmask 1043456
    %vm508 = vsmask.f32 3328
    %vm509 = vmand %vm507, %vm508
    %v510 = vsel %vm509, %v463, 0
    %v511 = vsel %vm509, %v465, 0
    %v512 = vsel %vm509, %v467, 0
    %v513 = vsel %vm509, %v469, 0
    %v514 = vsel %vm509, %v471, 0
    %v515 = vsel %vm509, %v473, 0
    %v516 = vsel %vm509, %v475, 0
    %v517 = vsel %vm509, %v477, 0
    %v518 = vsel %vm509, %v479, 0
    %v519 = vsel %vm509, %v481, 0
    %v520 = vsel %vm509, %v483, 0
    %v521 = vsel %vm509, %v485, 0
    %v522 = vsel %vm509, %v487, 0
    %v523 = vsel %vm509, %v489, 0
    %v524 = vsel %vm509, %v491, 0
    %v526 = vshrl.u32 %v315, 16
    %v528 = vrot.slane %v526, 7
    %v529 = vshll.u32 %v315, 16
    %v531 = vor.u32 %v528, %v529
    %v533 = vshrl.u32 %v323, 16
    %v535 = vrot.slane %v533, 7
    %v536 = vshll.u32 %v323, 16
    %v538 = vor.u32 %v535, %v536
    %v541 = vsel %vm446, 0, %v531
    %v542 = vsel %vm446, 0, %v538
    %v543 = vrot.slane %v529, 1
    %v544 = vor.u32 %v526, %v543
    %v545 = vrot.slane %v536, 1
    %v546 = vor.u32 %v533, %v545
    %v549 = vsel %vm509, %v544, 0
    %v550 = vsel %vm509, %v546, 0
    %v552 = vunpack.c.l.b16 0
    %v553 = vpack.c.b16 %v552, %v552
    %v555 = vshrl.u32 %v553, 16
    %v557 = vrot.slane %v555, 7
    %v558 = vshll.u32 %v553, 16
    %v560 = vor.u32 %v557, %v558
    %v562 = vsel %vm446, 0, %v560
    %v563 = vrot.slane %v558, 1
    %v564 = vor.u32 %v555, %v563
    %v566 = vsel %vm509, %v564, 0
    %567 = vrot.lane.b32.xlu0 0, 32
    %v568 = vpop.permute.xlu0 %567
    %569 = vrot.lane.b32.xlu0 %v308, 32
    %v570 = vpop.permute.xlu0 %569
    %571 = vrot.lane.b32.xlu0 %v309, 32
    %v572 = vpop.permute.xlu0 %571
    %573 = vrot.lane.b32.xlu0 %v310, 32
    %v574 = vpop.permute.xlu0 %573
    %575 = vrot.lane.b32.xlu0 %v311, 32
    %v576 = vpop.permute.xlu0 %575
    %577 = vrot.lane.b32.xlu0 %v312, 32
    %v578 = vpop.permute.xlu0 %577
    %579 = vrot.lane.b32.xlu0 %v313, 32
    %v580 = vpop.permute.xlu0 %579
    %581 = vrot.lane.b32.xlu0 %v314, 32
    %v582 = vpop.permute.xlu0 %581
    %583 = vrot.lane.b32.xlu0 %v316, 32
    %v584 = vpop.permute.xlu0 %583
    %585 = vrot.lane.b32.xlu0 %v317, 32
    %v586 = vpop.permute.xlu0 %585
    %587 = vrot.lane.b32.xlu0 %v318, 32
    %v588 = vpop.permute.xlu0 %587
    %589 = vrot.lane.b32.xlu0 %v319, 32
    %v590 = vpop.permute.xlu0 %589
    %591 = vrot.lane.b32.xlu0 %v320, 32
    %v592 = vpop.permute.xlu0 %591
    %593 = vrot.lane.b32.xlu0 %v321, 32
    %v594 = vpop.permute.xlu0 %593
    %595 = vrot.lane.b32.xlu0 %v322, 32
    %v596 = vpop.permute.xlu0 %595
    %612 = vrot.lane.b32.xlu0 %v510, 64
    %v613 = vpop.permute.xlu0 %612
    %614 = vrot.lane.b32.xlu0 %v511, 64
    %v615 = vpop.permute.xlu0 %614
    %616 = vrot.lane.b32.xlu0 %v512, 64
    %v617 = vpop.permute.xlu0 %616
    %618 = vrot.lane.b32.xlu0 %v513, 64
    %v619 = vpop.permute.xlu0 %618
    %620 = vrot.lane.b32.xlu0 %v514, 64
    %v621 = vpop.permute.xlu0 %620
    %622 = vrot.lane.b32.xlu0 %v515, 64
    %v623 = vpop.permute.xlu0 %622
    %624 = vrot.lane.b32.xlu0 %v516, 64
    %v625 = vpop.permute.xlu0 %624
    %626 = vrot.lane.b32.xlu0 %v517, 64
    %v627 = vpop.permute.xlu0 %626
    %628 = vrot.lane.b32.xlu0 %v518, 64
    %v629 = vpop.permute.xlu0 %628
    %630 = vrot.lane.b32.xlu0 %v519, 64
    %v631 = vpop.permute.xlu0 %630
    %632 = vrot.lane.b32.xlu0 %v520, 64
    %v633 = vpop.permute.xlu0 %632
    %634 = vrot.lane.b32.xlu0 %v521, 64
    %v635 = vpop.permute.xlu0 %634
    %636 = vrot.lane.b32.xlu0 %v522, 64
    %v637 = vpop.permute.xlu0 %636
    %638 = vrot.lane.b32.xlu0 %v523, 64
    %v639 = vpop.permute.xlu0 %638
    %640 = vrot.lane.b32.xlu0 %v524, 64
    %v641 = vpop.permute.xlu0 %640
    %658 = vrot.lane.b32.xlu0 %v448, 96
    %v659 = vpop.permute.xlu0 %658
    %660 = vrot.lane.b32.xlu0 %v449, 96
    %v661 = vpop.permute.xlu0 %660
    %662 = vrot.lane.b32.xlu0 %v450, 96
    %v663 = vpop.permute.xlu0 %662
    %664 = vrot.lane.b32.xlu0 %v451, 96
    %v665 = vpop.permute.xlu0 %664
    %666 = vrot.lane.b32.xlu0 %v452, 96
    %v667 = vpop.permute.xlu0 %666
    %668 = vrot.lane.b32.xlu0 %v453, 96
    %v669 = vpop.permute.xlu0 %668
    %670 = vrot.lane.b32.xlu0 %v454, 96
    %v671 = vpop.permute.xlu0 %670
    %672 = vrot.lane.b32.xlu0 %v541, 96
    %v673 = vpop.permute.xlu0 %672
    %674 = vrot.lane.b32.xlu0 %v455, 96
    %v675 = vpop.permute.xlu0 %674
    %676 = vrot.lane.b32.xlu0 %v456, 96
    %v677 = vpop.permute.xlu0 %676
    %678 = vrot.lane.b32.xlu0 %v457, 96
    %v679 = vpop.permute.xlu0 %678
    %680 = vrot.lane.b32.xlu0 %v458, 96
    %v681 = vpop.permute.xlu0 %680
    %682 = vrot.lane.b32.xlu0 %v459, 96
    %v683 = vpop.permute.xlu0 %682
    %684 = vrot.lane.b32.xlu0 %v460, 96
    %v685 = vpop.permute.xlu0 %684
    %686 = vrot.lane.b32.xlu0 %v461, 96
    %v687 = vpop.permute.xlu0 %686
    %688 = vrot.lane.b32.xlu0 %v542, 96
    %v689 = vpop.permute.xlu0 %688
    %692 = vrot.lane.b32.xlu0 %v511, 32
    %v693 = vpop.permute.xlu0 %692
    %694 = vrot.lane.b32.xlu0 %v512, 32
    %v695 = vpop.permute.xlu0 %694
    %696 = vrot.lane.b32.xlu0 %v513, 32
    %v697 = vpop.permute.xlu0 %696
    %698 = vrot.lane.b32.xlu0 %v514, 32
    %v699 = vpop.permute.xlu0 %698
    %700 = vrot.lane.b32.xlu0 %v515, 32
    %v701 = vpop.permute.xlu0 %700
    %702 = vrot.lane.b32.xlu0 %v516, 32
    %v703 = vpop.permute.xlu0 %702
    %704 = vrot.lane.b32.xlu0 %v517, 32
    %v705 = vpop.permute.xlu0 %704
    %706 = vrot.lane.b32.xlu0 %v549, 32
    %v707 = vpop.permute.xlu0 %706
    %708 = vrot.lane.b32.xlu0 %v518, 32
    %v709 = vpop.permute.xlu0 %708
    %710 = vrot.lane.b32.xlu0 %v519, 32
    %v711 = vpop.permute.xlu0 %710
    %712 = vrot.lane.b32.xlu0 %v520, 32
    %v713 = vpop.permute.xlu0 %712
    %714 = vrot.lane.b32.xlu0 %v521, 32
    %v715 = vpop.permute.xlu0 %714
    %716 = vrot.lane.b32.xlu0 %v522, 32
    %v717 = vpop.permute.xlu0 %716
    %718 = vrot.lane.b32.xlu0 %v523, 32
    %v719 = vpop.permute.xlu0 %718
    %720 = vrot.lane.b32.xlu0 %v524, 32
    %v721 = vpop.permute.xlu0 %720
    %722 = vrot.lane.b32.xlu0 %v550, 32
    %v723 = vpop.permute.xlu0 %722
    %725 = vrot.lane.b32.xlu0 %v449, 64
    %v726 = vpop.permute.xlu0 %725
    %727 = vrot.lane.b32.xlu0 %v450, 64
    %v728 = vpop.permute.xlu0 %727
    %729 = vrot.lane.b32.xlu0 %v451, 64
    %v730 = vpop.permute.xlu0 %729
    %731 = vrot.lane.b32.xlu0 %v452, 64
    %v732 = vpop.permute.xlu0 %731
    %733 = vrot.lane.b32.xlu0 %v453, 64
    %v734 = vpop.permute.xlu0 %733
    %735 = vrot.lane.b32.xlu0 %v454, 64
    %v736 = vpop.permute.xlu0 %735
    %737 = vrot.lane.b32.xlu0 %v541, 64
    %v738 = vpop.permute.xlu0 %737
    %739 = vrot.lane.b32.xlu0 %v562, 64
    %v740 = vpop.permute.xlu0 %739
    %741 = vrot.lane.b32.xlu0 %v456, 64
    %v742 = vpop.permute.xlu0 %741
    %743 = vrot.lane.b32.xlu0 %v457, 64
    %v744 = vpop.permute.xlu0 %743
    %745 = vrot.lane.b32.xlu0 %v458, 64
    %v746 = vpop.permute.xlu0 %745
    %747 = vrot.lane.b32.xlu0 %v459, 64
    %v748 = vpop.permute.xlu0 %747
    %749 = vrot.lane.b32.xlu0 %v460, 64
    %v750 = vpop.permute.xlu0 %749
    %751 = vrot.lane.b32.xlu0 %v461, 64
    %v752 = vpop.permute.xlu0 %751
    %753 = vrot.lane.b32.xlu0 %v542, 64
    %v754 = vpop.permute.xlu0 %753
    %755 = vrot.lane.b32.xlu0 %v309, 96
    %v756 = vpop.permute.xlu0 %755
    %757 = vrot.lane.b32.xlu0 %v310, 96
    %v758 = vpop.permute.xlu0 %757
    %759 = vrot.lane.b32.xlu0 %v311, 96
    %v760 = vpop.permute.xlu0 %759
    %761 = vrot.lane.b32.xlu0 %v312, 96
    %v762 = vpop.permute.xlu0 %761
    %763 = vrot.lane.b32.xlu0 %v313, 96
    %v764 = vpop.permute.xlu0 %763
    %765 = vrot.lane.b32.xlu0 %v314, 96
    %v766 = vpop.permute.xlu0 %765
    %767 = vrot.lane.b32.xlu0 %v315, 96
    %v768 = vpop.permute.xlu0 %767
    %769 = vrot.lane.b32.xlu0 %v553, 96
    %v770 = vpop.permute.xlu0 %769
    %771 = vrot.lane.b32.xlu0 %v317, 96
    %v772 = vpop.permute.xlu0 %771
    %773 = vrot.lane.b32.xlu0 %v318, 96
    %v774 = vpop.permute.xlu0 %773
    %775 = vrot.lane.b32.xlu0 %v319, 96
    %v776 = vpop.permute.xlu0 %775
    %777 = vrot.lane.b32.xlu0 %v320, 96
    %v778 = vpop.permute.xlu0 %777
    %779 = vrot.lane.b32.xlu0 %v321, 96
    %v780 = vpop.permute.xlu0 %779
    %781 = vrot.lane.b32.xlu0 %v322, 96
    %v782 = vpop.permute.xlu0 %781
    %783 = vrot.lane.b32.xlu0 %v323, 96
    %v784 = vpop.permute.xlu0 %783
    %vm785 = vcmask 261120
    %v788 = vsel %vm785, %v447, %v568
    %v791 = vsel %vm785, %v448, %v570
    %v794 = vsel %vm785, %v449, %v572
    %v797 = vsel %vm785, %v450, %v574
    %v800 = vsel %vm785, %v451, %v576
    %v803 = vsel %vm785, %v452, %v578
    %v806 = vsel %vm785, %v453, %v580
    %v809 = vsel %vm785, %v454, %v582
    %v812 = vsel %vm785, %v455, %v584
    %v815 = vsel %vm785, %v456, %v586
    %v818 = vsel %vm785, %v457, %v588
    %v821 = vsel %vm785, %v458, %v590
    %v824 = vsel %vm785, %v459, %v592
    %v827 = vsel %vm785, %v460, %v594
    %v830 = vsel %vm785, %v461, %v596
    %vm831 = vcmask 523264
    %v833 = vsel %vm831, %v788, %v613
    %v835 = vsel %vm831, %v791, %v615
    %v837 = vsel %vm831, %v794, %v617
    %v839 = vsel %vm831, %v797, %v619
    %v841 = vsel %vm831, %v800, %v621
    %v843 = vsel %vm831, %v803, %v623
    %v845 = vsel %vm831, %v806, %v625
    %v847 = vsel %vm831, %v809, %v627
    %v849 = vsel %vm831, %v812, %v629
    %v851 = vsel %vm831, %v815, %v631
    %v853 = vsel %vm831, %v818, %v633
    %v855 = vsel %vm831, %v821, %v635
    %v857 = vsel %vm831, %v824, %v637
    %v859 = vsel %vm831, %v827, %v639
    %v861 = vsel %vm831, %v830, %v641
    %vm862 = vcmask 785408
    %v864 = vsel %vm862, %v833, %v659
    %v866 = vsel %vm862, %v835, %v661
    %v868 = vsel %vm862, %v837, %v663
    %v870 = vsel %vm862, %v839, %v665
    %v872 = vsel %vm862, %v841, %v667
    %v874 = vsel %vm862, %v843, %v669
    %v876 = vsel %vm862, %v845, %v671
    %v878 = vsel %vm862, %v847, %v673
    %v880 = vsel %vm862, %v833, %v675
    %v882 = vsel %vm862, %v849, %v677
    %v884 = vsel %vm862, %v851, %v679
    %v886 = vsel %vm862, %v853, %v681
    %v888 = vsel %vm862, %v855, %v683
    %v890 = vsel %vm862, %v857, %v685
    %v892 = vsel %vm862, %v859, %v687
    %v894 = vsel %vm862, %v861, %v689
    %v896 = vsel %vm785, %v308, %v693
    %v898 = vsel %vm785, %v309, %v695
    %v900 = vsel %vm785, %v310, %v697
    %v902 = vsel %vm785, %v311, %v699
    %v904 = vsel %vm785, %v312, %v701
    %v906 = vsel %vm785, %v313, %v703
    %v908 = vsel %vm785, %v314, %v705
    %v910 = vsel %vm785, %v315, %v707
    %v912 = vsel %vm785, %v316, %v709
    %v914 = vsel %vm785, %v317, %v711
    %v916 = vsel %vm785, %v318, %v713
    %v918 = vsel %vm785, %v319, %v715
    %v920 = vsel %vm785, %v320, %v717
    %v922 = vsel %vm785, %v321, %v719
    %v924 = vsel %vm785, %v322, %v721
    %v926 = vsel %vm785, %v323, %v723
    %v928 = vsel %vm831, %v896, %v726
    %v930 = vsel %vm831, %v898, %v728
    %v932 = vsel %vm831, %v900, %v730
    %v934 = vsel %vm831, %v902, %v732
    %v936 = vsel %vm831, %v904, %v734
    %v938 = vsel %vm831, %v906, %v736
    %v940 = vsel %vm831, %v908, %v738
    %v942 = vsel %vm831, %v910, %v740
    %v944 = vsel %vm831, %v912, %v742
    %v946 = vsel %vm831, %v914, %v744
    %v948 = vsel %vm831, %v916, %v746
    %v950 = vsel %vm831, %v918, %v748
    %v952 = vsel %vm831, %v920, %v750
    %v954 = vsel %vm831, %v922, %v752
    %v956 = vsel %vm831, %v924, %v754
    %v957 = vsel %vm831, %v926, %v740
    %v959 = vsel %vm862, %v928, %v756
    %v961 = vsel %vm862, %v930, %v758
    %v963 = vsel %vm862, %v932, %v760
    %v965 = vsel %vm862, %v934, %v762
    %v967 = vsel %vm862, %v936, %v764
    %v969 = vsel %vm862, %v938, %v766
    %v971 = vsel %vm862, %v940, %v768
    %v973 = vsel %vm862, %v942, %v770
    %v975 = vsel %vm862, %v944, %v772
    %v977 = vsel %vm862, %v946, %v774
    %v979 = vsel %vm862, %v948, %v776
    %v981 = vsel %vm862, %v950, %v778
    %v983 = vsel %vm862, %v952, %v780
    %v985 = vsel %vm862, %v954, %v782
    %v987 = vsel %vm862, %v956, %v784
    %v988 = vsel %vm862, %v957, %v770
    %v1022 = vunpack.c.l.b16 %v864
    %v1023 = vunpack.c.l.b16 %v959
    %v1024 = vunpack.c.l.b16 %v512
    %v1025 = vunpack.c.l.b16 %v866
    %v1026 = vunpack.c.l.b16 %v961
    %v1027 = vunpack.c.l.b16 %v513
    %v1028 = vunpack.c.l.b16 %v868
    %v1029 = vunpack.c.l.b16 %v963
    %v1030 = vunpack.c.l.b16 %v514
    %v1031 = vunpack.c.l.b16 %v870
    %v1032 = vunpack.c.l.b16 %v965
    %v1033 = vunpack.c.l.b16 %v515
    %v1034 = vunpack.c.l.b16 %v872
    %v1035 = vunpack.c.l.b16 %v967
    %v1036 = vunpack.c.l.b16 %v516
    %v1037 = vunpack.c.l.b16 %v874
    %v1038 = vunpack.c.l.b16 %v969
    %v1039 = vunpack.c.l.b16 %v517
    %v1040 = vunpack.c.l.b16 %v876
    %v1041 = vunpack.c.l.b16 %v971
    %v1042 = vunpack.c.l.b16 %v549
    %v1043 = vunpack.c.l.b16 %v878
    %v1044 = vunpack.c.l.b16 %v973
    %v1045 = vunpack.c.l.b16 %v566
    %v1046 = vunpack.c.l.b16 %v880
    %v1047 = vunpack.c.l.b16 %v975
    %v1048 = vunpack.c.l.b16 %v519
    %v1049 = vunpack.c.l.b16 %v882
    %v1050 = vunpack.c.l.b16 %v977
    %v1051 = vunpack.c.l.b16 %v520
    %v1052 = vunpack.c.l.b16 %v884
    %v1053 = vunpack.c.l.b16 %v979
    %v1054 = vunpack.c.l.b16 %v521
    %v1055 = vunpack.c.l.b16 %v886
    %v1056 = vunpack.c.l.b16 %v981
    %v1057 = vunpack.c.l.b16 %v522
    %v1058 = vunpack.c.l.b16 %v888
    %v1059 = vunpack.c.l.b16 %v983
    %v1060 = vunpack.c.l.b16 %v523
    %v1061 = vunpack.c.l.b16 %v890
    %v1062 = vunpack.c.l.b16 %v985
    %v1063 = vunpack.c.l.b16 %v524
    %v1064 = vunpack.c.l.b16 %v892
    %v1065 = vunpack.c.l.b16 %v987
    %v1066 = vunpack.c.l.b16 %v550
    %v1067 = vunpack.c.l.b16 %v894
    %v1068 = vunpack.c.l.b16 %v988
    %v1069 = vld [vmem:[%s3] sm:$0xf]
    %v1070 = vld [vmem:[%s3 + $0x4] sm:$0xf]
    %v1071 = vld [vmem:[%s3 + $0x8] sm:$0xf]
    %v1072 = vld [vmem:[%s3 + $0xc] sm:$0xf]
    %v1073 = vld [vmem:[%s3 + $0x10] sm:$0xf]
    %v1074 = vld [vmem:[%s3 + $0x14] sm:$0xf]
    %v1075 = vld [vmem:[%s3 + $0x18] sm:$0xf]
    %v1076 = vld [vmem:[%s3 + $0x1c] sm:$0xf]
    %v1077 = vld [vmem:[%s3 + $0x20] sm:$0xf]
    %v1078 = vld [vmem:[%s3 + $0x24] sm:$0xf]
    %v1079 = vld [vmem:[%s3 + $0x28] sm:$0xf]
    %v1080 = vld [vmem:[%s3 + $0x2c] sm:$0xf]
    %v1081 = vld [vmem:[%s3 + $0x30] sm:$0xf]
    %v1082 = vld [vmem:[%s3 + $0x34] sm:$0xf]
    %v1083 = vld [vmem:[%s3 + $0x38] sm:$0xf]
    %v1084 = vld [vmem:[%s3 + $0x3c] sm:$0xf]
    %v1085 = vld [vmem:[%s3 + $0x40] sm:$0xf]
    %v1086 = vld [vmem:[%s3 + $0x44] sm:$0xf]
    %v1087 = vld [vmem:[%s3 + $0x48] sm:$0xf]
    %v1088 = vld [vmem:[%s3 + $0x4c] sm:$0xf]
    %v1089 = vld [vmem:[%s3 + $0x50] sm:$0xf]
    %v1090 = vld [vmem:[%s3 + $0x54] sm:$0xf]
    %v1091 = vld [vmem:[%s3 + $0x58] sm:$0xf]
    %v1092 = vld [vmem:[%s3 + $0x5c] sm:$0xf]
    %v1093 = vld [vmem:[%s3 + $0x60] sm:$0xf]
    %v1094 = vld [vmem:[%s3 + $0x64] sm:$0xf]
    %v1095 = vld [vmem:[%s3 + $0x68] sm:$0xf]
    %v1096 = vld [vmem:[%s3 + $0x6c] sm:$0xf]
    %v1097 = vld [vmem:[%s3 + $0x70] sm:$0xf]
    %v1098 = vld [vmem:[%s3 + $0x74] sm:$0xf]
    %v1099 = vld [vmem:[%s3 + $0x78] sm:$0xf]
    %v1100 = vld [vmem:[%s3 + $0x7c] sm:$0xf]
    %v1101 = vld [vmem:[%s3 + $0x80] sm:$0xf]
    %v1102 = vld [vmem:[%s3 + $0x84] sm:$0xf]
    %v1103 = vld [vmem:[%s3 + $0x88] sm:$0xf]
    %v1104 = vld [vmem:[%s3 + $0x8c] sm:$0xf]
    %v1105 = vld [vmem:[%s4] sm:$0x1]
    %v1107 = vlaneseq
    %v1108 = vshrl.u32 %v1107, 7
    %v1109 = vsub.s32 0, %v1108
    %v1110 = vrot.slane %v1105, %v1109
    %v1112 = vpack.c.b16 %v1025, %v1022
    %v1113 = vpack.c.b16 %v1026, %v1023
    %v1114 = vpack.c.b16 %v1027, %v1024
    %v1115 = vpack.c.b16 %v1031, %v1028
    %v1116 = vpack.c.b16 %v1032, %v1029
    %v1117 = vpack.c.b16 %v1033, %v1030
    %v1118 = vpack.c.b16 %v1037, %v1034
    %v1119 = vpack.c.b16 %v1038, %v1035
    %v1120 = vpack.c.b16 %v1039, %v1036
    %v1121 = vpack.c.b16 %v1043, %v1040
    %v1122 = vpack.c.b16 %v1044, %v1041
    %v1123 = vpack.c.b16 %v1045, %v1042
    %v1124 = vpack.c.b16 %v1049, %v1046
    %v1125 = vpack.c.b16 %v1050, %v1047
    %v1126 = vpack.c.b16 %v1051, %v1048
    %v1127 = vpack.c.b16 %v1055, %v1052
    %v1128 = vpack.c.b16 %v1056, %v1053
    %v1129 = vpack.c.b16 %v1057, %v1054
    %v1130 = vpack.c.b16 %v1061, %v1058
    %v1131 = vpack.c.b16 %v1062, %v1059
    %v1132 = vpack.c.b16 %v1063, %v1060
    %v1133 = vpack.c.b16 %v1067, %v1064
    %v1134 = vpack.c.b16 %v1068, %v1065
    %v1135 = vpack.c.b16 %v1045, %v1066
    %v1188 = vunpack.c.l.b16 %v1069
    %v1189 = vunpack.c.l.b16 %v1070
    %v1190 = vunpack.c.l.b16 %v1071
    %v1191 = vunpack.c.l.b16 %v1072
    %v1192 = vunpack.c.l.b16 %v1073
    %v1193 = vunpack.c.l.b16 %v1074
    %v1194 = vunpack.c.l.b16 %v1075
    %v1195 = vunpack.c.l.b16 %v1076
    %v1196 = vunpack.c.l.b16 %v1077
    %v1197 = vunpack.c.l.b16 %v1078
    %v1198 = vunpack.c.l.b16 %v1079
    %v1199 = vunpack.c.l.b16 %v1080
    %v1200 = vunpack.c.l.b16 %v1081
    %v1201 = vunpack.c.l.b16 %v1082
    %v1202 = vunpack.c.l.b16 %v1083
    %v1203 = vunpack.c.l.b16 %v1084
    %v1204 = vunpack.c.l.b16 %v1085
    %v1205 = vunpack.c.l.b16 %v1086
    %v1206 = vunpack.c.l.b16 %v1087
    %v1207 = vunpack.c.l.b16 %v1088
    %v1208 = vunpack.c.l.b16 %v1089
    %v1209 = vunpack.c.l.b16 %v1090
    %v1210 = vunpack.c.l.b16 %v1091
    %v1211 = vunpack.c.l.b16 %v1092
    %v1212 = vunpack.c.l.b16 %v1093
    %v1213 = vunpack.c.l.b16 %v1094
    %v1214 = vunpack.c.l.b16 %v1095
    %v1215 = vunpack.c.l.b16 %v1096
    %v1216 = vunpack.c.l.b16 %v1097
    %v1217 = vunpack.c.l.b16 %v1098
    %v1218 = vunpack.c.l.b16 %v1099
    %v1219 = vunpack.c.l.b16 %v1100
    %v1220 = vunpack.c.l.b16 %v1101
    %v1221 = vunpack.c.l.b16 %v1102
    %v1222 = vunpack.c.l.b16 %v1103
    %v1223 = vunpack.c.l.b16 %v1104
    %v1224 = vpack.c.b16 %v1189, %v1188
    %v1225 = vpack.c.b16 %v1191, %v1190
    %v1226 = vpack.c.b16 %v1193, %v1192
    %v1227 = vpack.c.b16 %v1195, %v1194
    %v1228 = vpack.c.b16 %v1197, %v1196
    %v1229 = vpack.c.b16 %v1199, %v1198
    %v1230 = vpack.c.b16 %v1201, %v1200
    %v1231 = vpack.c.b16 %v1203, %v1202
    %v1232 = vpack.c.b16 %v1205, %v1204
    %v1233 = vpack.c.b16 %v1207, %v1206
    %v1234 = vpack.c.b16 %v1209, %v1208
    %v1235 = vpack.c.b16 %v1211, %v1210
    %v1236 = vpack.c.b16 %v1213, %v1212
    %v1237 = vpack.c.b16 %v1215, %v1214
    %v1238 = vpack.c.b16 %v1217, %v1216
    %v1239 = vpack.c.b16 %v1219, %v1218
    %v1240 = vpack.c.b16 %v1221, %v1220
    %v1241 = vpack.c.b16 %v1223, %v1222
    %v1261 = vsel %vm785, %v1114, 0
    %v1264 = vsel %vm785, %v1117, 0
    %v1267 = vsel %vm785, %v1120, 0
    %v1270 = vsel %vm785, %v1123, 0
    %v1273 = vsel %vm785, %v1126, 0
    %v1276 = vsel %vm785, %v1129, 0
    %v1279 = vsel %vm785, %v1132, 0
    %v1282 = vsel %vm785, %v1135, 0
    %1284 = vmatprep.subr.bf16.mxu0 0
    %1285 = vmatpush1.bf16.msra.mxu0 %v1231
    %1286 = vmatprep.subr.bf16.mxu0 0
    %1287 = vmatpush1.bf16.msra.mxu0 %v1230
    %1288 = vmatprep.subr.bf16.mxu0 0
    %1289 = vmatpush1.bf16.msra.mxu0 %v1229
    %1290 = vmatprep.subr.bf16.mxu0 0
    %1291 = vmatpush1.bf16.msra.mxu0 %v1228
    %1292 = vmatprep.subr.bf16.mxu0 0
    %1293 = vmatpush1.bf16.msra.mxu0 %v1227
    %1294 = vmatprep.subr.bf16.mxu0 0
    %1295 = vmatpush1.bf16.msra.mxu0 %v1226
    %1296 = vmatprep.subr.bf16.mxu0 0
    %1297 = vmatpush1.bf16.msra.mxu0 %v1225
    %1298 = vmatprep.subr.bf16.mxu0 0
    %1299 = vmatpush1.bf16.msra.mxu0 %v1224
    %1300 = vmatprep.subr.bf16.mxu0 0
    %1301 = vmatpush2.bf16.msra.mxu0 %v1239
    %1302 = vmatprep.subr.bf16.mxu0 0
    %1303 = vmatpush2.bf16.msra.mxu0 %v1238
    %1304 = vmatprep.subr.bf16.mxu0 0
    %1305 = vmatpush2.bf16.msra.mxu0 %v1237
    %1306 = vmatprep.subr.bf16.mxu0 0
    %1307 = vmatpush2.bf16.msra.mxu0 %v1236
    %1308 = vmatprep.subr.bf16.mxu0 0
    %1309 = vmatpush2.bf16.msra.mxu0 %v1235
    %1310 = vmatprep.subr.bf16.mxu0 0
    %1311 = vmatpush2.bf16.msra.mxu0 %v1234
    %1312 = vmatprep.subr.bf16.mxu0 0
    %1313 = vmatpush2.bf16.msra.mxu0 %v1233
    %1314 = vmatprep.subr.bf16.mxu0 0
    %1315 = vmatpush2.bf16.msra.mxu0 %v1232
    %1316 = vmatprep.mubr.bf16.mxu0 %v1113
    %1317 = vmatmul.mubr.bf16.gmra.mxu0 %v1112
    %v1318 = vpop.f32.mrf.mxu0
    %v1319 = vadd.f32 %v1110, %v1318
    %v1320 = vpop.f32.mrf.mxu0
    %v1321 = vpop.f32.mrf.mxu0
    %v1322 = vadd.f32 %v1110, %v1321
    %v1323 = vpop.f32.mrf.mxu0
    %1324 = vmatprep.mubr.bf16.mxu0 %v1116
    %1325 = vmatmul.mubr.bf16.gmra.mxu0 %v1115
    %v1326 = vpop.f32.mrf.mxu0
    %v1327 = vadd.f32 %v1110, %v1326
    %v1328 = vpop.f32.mrf.mxu0
    %v1329 = vpop.f32.mrf.mxu0
    %v1330 = vadd.f32 %v1110, %v1329
    %v1331 = vpop.f32.mrf.mxu0
    %1332 = vmatprep.mubr.bf16.mxu0 %v1119
    %1333 = vmatmul.mubr.bf16.gmra.mxu0 %v1118
    %v1334 = vpop.f32.mrf.mxu0
    %v1335 = vadd.f32 %v1110, %v1334
    %v1336 = vpop.f32.mrf.mxu0
    %v1337 = vpop.f32.mrf.mxu0
    %v1338 = vadd.f32 %v1110, %v1337
    %v1339 = vpop.f32.mrf.mxu0
    %1340 = vmatprep.mubr.bf16.mxu0 %v1122
    %1341 = vmatmul.mubr.bf16.gmra.mxu0 %v1121
    %v1342 = vpop.f32.mrf.mxu0
    %v1343 = vadd.f32 %v1110, %v1342
    %v1344 = vpop.f32.mrf.mxu0
    %v1345 = vpop.f32.mrf.mxu0
    %v1346 = vadd.f32 %v1110, %v1345
    %v1347 = vpop.f32.mrf.mxu0
    %1348 = vmatprep.mubr.bf16.mxu0 %v1125
    %1349 = vmatmul.mubr.bf16.gmra.mxu0 %v1124
    %v1350 = vpop.f32.mrf.mxu0
    %v1351 = vadd.f32 %v1110, %v1350
    %v1352 = vpop.f32.mrf.mxu0
    %v1353 = vpop.f32.mrf.mxu0
    %v1354 = vadd.f32 %v1110, %v1353
    %v1355 = vpop.f32.mrf.mxu0
    %1356 = vmatprep.mubr.bf16.mxu0 %v1128
    %1357 = vmatmul.mubr.bf16.gmra.mxu0 %v1127
    %v1358 = vpop.f32.mrf.mxu0
    %v1359 = vadd.f32 %v1110, %v1358
    %v1360 = vpop.f32.mrf.mxu0
    %v1361 = vpop.f32.mrf.mxu0
    %v1362 = vadd.f32 %v1110, %v1361
    %v1363 = vpop.f32.mrf.mxu0
    %1364 = vmatprep.mubr.bf16.mxu0 %v1131
    %1365 = vmatmul.mubr.bf16.gmra.mxu0 %v1130
    %v1366 = vpop.f32.mrf.mxu0
    %v1367 = vadd.f32 %v1110, %v1366
    %v1368 = vpop.f32.mrf.mxu0
    %v1369 = vpop.f32.mrf.mxu0
    %v1370 = vadd.f32 %v1110, %v1369
    %v1371 = vpop.f32.mrf.mxu0
    %1372 = vmatprep.mubr.bf16.mxu0 %v1134
    %1373 = vmatmul.mubr.bf16.gmra.mxu0 %v1133
    %v1374 = vpop.f32.mrf.mxu0
    %v1375 = vadd.f32 %v1110, %v1374
    %v1376 = vpop.f32.mrf.mxu0
    %v1377 = vpop.f32.mrf.mxu0
    %v1378 = vadd.f32 %v1110, %v1377
    %v1379 = vpop.f32.mrf.mxu0
    %1380 = vdwg.mxu0
    %1381 = vmatprep.subr.bf16.mxu0 0
    %1382 = vmatpush1.bf16.msra.mxu0 0
    %1383 = vmatprep.subr.bf16.mxu0 0
    %1384 = vmatpush1.bf16.msra.mxu0 0
    %1385 = vmatprep.subr.bf16.mxu0 0
    %1386 = vmatpush1.bf16.msra.mxu0 0
    %1387 = vmatprep.subr.bf16.mxu0 0
    %1388 = vmatpush1.bf16.msra.mxu0 0
    %1389 = vmatprep.subr.bf16.mxu0 0
    %1390 = vmatpush1.bf16.msra.mxu0 0
    %1391 = vmatprep.subr.bf16.mxu0 0
    %1392 = vmatpush1.bf16.msra.mxu0 0
    %1393 = vmatprep.subr.bf16.mxu0 0
    %1394 = vmatpush1.bf16.msra.mxu0 %v1241
    %1395 = vmatprep.subr.bf16.mxu0 0
    %1396 = vmatpush1.bf16.msra.mxu0 %v1240
    %1397 = vmatprep.subr.bf16.mxu0 0
    %1398 = vmatpush2.bf16.msra.mxu0 0
    %1399 = vmatprep.subr.bf16.mxu0 0
    %1400 = vmatpush2.bf16.msra.mxu0 0
    %1401 = vmatprep.subr.bf16.mxu0 0
    %1402 = vmatpush2.bf16.msra.mxu0 0
    %1403 = vmatprep.subr.bf16.mxu0 0
    %1404 = vmatpush2.bf16.msra.mxu0 0
    %1405 = vmatprep.subr.bf16.mxu0 0
    %1406 = vmatpush2.bf16.msra.mxu0 0
    %1407 = vmatprep.subr.bf16.mxu0 0
    %1408 = vmatpush2.bf16.msra.mxu0 0
    %1409 = vmatprep.subr.bf16.mxu0 0
    %1410 = vmatpush2.bf16.msra.mxu0 0
    %1411 = vmatprep.subr.bf16.mxu0 0
    %1412 = vmatpush2.bf16.msra.mxu0 0
    %1413 = vmatprep.mubr.bf16.mxu0 0
    %1414 = vmatmul.mubr.bf16.gmra.mxu0 %v1261
    %v1415 = vpop.f32.mrf.mxu0
    %v1416 = vadd.f32 %v1319, %v1415
    %v1417 = vpop.f32.mrf.mxu0
    %v1418 = vpop.f32.mrf.mxu0
    %v1419 = vadd.f32 %v1322, %v1418
    %v1420 = vpop.f32.mrf.mxu0
    %1421 = vmatprep.mubr.bf16.mxu0 0
    %1422 = vmatmul.mubr.bf16.gmra.mxu0 %v1264
    %v1423 = vpop.f32.mrf.mxu0
    %v1424 = vadd.f32 %v1327, %v1423
    %v1425 = vpop.f32.mrf.mxu0
    %v1426 = vpop.f32.mrf.mxu0
    %v1427 = vadd.f32 %v1330, %v1426
    %v1428 = vpop.f32.mrf.mxu0
    %1429 = vmatprep.mubr.bf16.mxu0 0
    %1430 = vmatmul.mubr.bf16.gmra.mxu0 %v1267
    %v1431 = vpop.f32.mrf.mxu0
    %v1432 = vadd.f32 %v1335, %v1431
    %v1433 = vpop.f32.mrf.mxu0
    %v1434 = vpop.f32.mrf.mxu0
    %v1435 = vadd.f32 %v1338, %v1434
    %v1436 = vpop.f32.mrf.mxu0
    %1437 = vmatprep.mubr.bf16.mxu0 0
    %1438 = vmatmul.mubr.bf16.gmra.mxu0 %v1270
    %v1439 = vpop.f32.mrf.mxu0
    %v1440 = vadd.f32 %v1343, %v1439
    %v1441 = vpop.f32.mrf.mxu0
    %v1442 = vpop.f32.mrf.mxu0
    %v1443 = vadd.f32 %v1346, %v1442
    %v1444 = vpop.f32.mrf.mxu0
    %1445 = vmatprep.mubr.bf16.mxu0 0
    %1446 = vmatmul.mubr.bf16.gmra.mxu0 %v1273
    %v1447 = vpop.f32.mrf.mxu0
    %v1448 = vadd.f32 %v1351, %v1447
    %v1449 = vpop.f32.mrf.mxu0
    %v1450 = vpop.f32.mrf.mxu0
    %v1451 = vadd.f32 %v1354, %v1450
    %v1452 = vpop.f32.mrf.mxu0
    %1453 = vmatprep.mubr.bf16.mxu0 0
    %1454 = vmatmul.mubr.bf16.gmra.mxu0 %v1276
    %v1455 = vpop.f32.mrf.mxu0
    %v1456 = vadd.f32 %v1359, %v1455
    %v1457 = vpop.f32.mrf.mxu0
    %v1458 = vpop.f32.mrf.mxu0
    %v1459 = vadd.f32 %v1362, %v1458
    %v1460 = vpop.f32.mrf.mxu0
    %1461 = vmatprep.mubr.bf16.mxu0 0
    %1462 = vmatmul.mubr.bf16.gmra.mxu0 %v1279
    %v1463 = vpop.f32.mrf.mxu0
    %v1464 = vadd.f32 %v1367, %v1463
    %v1465 = vpop.f32.mrf.mxu0
    %v1466 = vpop.f32.mrf.mxu0
    %v1467 = vadd.f32 %v1370, %v1466
    %v1468 = vpop.f32.mrf.mxu0
    %1469 = vmatprep.mubr.bf16.mxu0 0
    %1470 = vmatmul.mubr.bf16.gmra.mxu0 %v1282
    %v1471 = vpop.f32.mrf.mxu0
    %v1472 = vadd.f32 %v1375, %v1471
    %v1473 = vpop.f32.mrf.mxu0
    %v1474 = vpop.f32.mrf.mxu0
    %v1475 = vadd.f32 %v1378, %v1474
    %v1476 = vpop.f32.mrf.mxu0
    %1477 = vdwg.mxu0
    %v1478 = vmax.f32 %v1416, 0.0
    %v1479 = vmax.f32 %v1419, 0.0
    %v1480 = vmax.f32 %v1424, 0.0
    %v1481 = vmax.f32 %v1427, 0.0
    %v1482 = vmax.f32 %v1432, 0.0
    %v1483 = vmax.f32 %v1435, 0.0
    %v1484 = vmax.f32 %v1440, 0.0
    %v1485 = vmax.f32 %v1443, 0.0
    %v1486 = vmax.f32 %v1448, 0.0
    %v1487 = vmax.f32 %v1451, 0.0
    %v1488 = vmax.f32 %v1456, 0.0
    %v1489 = vmax.f32 %v1459, 0.0
    %v1490 = vmax.f32 %v1464, 0.0
    %v1491 = vmax.f32 %v1467, 0.0
    %v1492 = vmax.f32 %v1472, 0.0
    %v1493 = vmax.f32 %v1475, 0.0
    %v1494 = vpack.c.bf16 %v1479, %v1478
    %v1495 = vpack.c.bf16 %v1481, %v1480
    %v1496 = vpack.c.bf16 %v1483, %v1482
    %v1497 = vpack.c.bf16 %v1485, %v1484
    %v1498 = vpack.c.bf16 %v1487, %v1486
    %v1499 = vpack.c.bf16 %v1489, %v1488
    %v1500 = vpack.c.bf16 %v1491, %v1490
    %v1501 = vpack.c.bf16 %v1493, %v1492
    %v1502 = vld [vmem:[%s5] sm:$0xf]
    %v1503 = vld [vmem:[%s5 + $0x4] sm:$0xf]
    %v1504 = vld [vmem:[%s5 + $0x8] sm:$0xf]
    %v1505 = vld [vmem:[%s5 + $0xc] sm:$0xf]
    %v1506 = vld [vmem:[%s6] sm:$0x1]
    %v1508 = vlaneseq
    %v1509 = vshrl.u32 %v1508, 7
    %v1510 = vsub.s32 0, %v1509
    %v1511 = vrot.slane %v1506, %v1510
    %v1517 = vunpack.c.l.b16 %v1502
    %v1518 = vunpack.c.l.b16 %v1503
    %v1519 = vunpack.c.l.b16 %v1504
    %v1520 = vunpack.c.l.b16 %v1505
    %v1521 = vpack.c.b16 %v1518, %v1517
    %v1522 = vpack.c.b16 %v1520, %v1519
    %v1526 = vsel %vm785, %v1494, 0
    %v1529 = vsel %vm785, %v1495, 0
    %v1532 = vsel %vm785, %v1496, 0
    %v1535 = vsel %vm785, %v1497, 0
    %v1538 = vsel %vm785, %v1498, 0
    %v1541 = vsel %vm785, %v1499, 0
    %v1544 = vsel %vm785, %v1500, 0
    %v1547 = vsel %vm785, %v1501, 0
    %1549 = vmatprep.subr.bf16.mxu0 0
    %1550 = vmatpush1.bf16.msra.mxu0 0
    %1551 = vmatprep.subr.bf16.mxu0 0
    %1552 = vmatpush1.bf16.msra.mxu0 0
    %1553 = vmatprep.subr.bf16.mxu0 0
    %1554 = vmatpush1.bf16.msra.mxu0 0
    %1555 = vmatprep.subr.bf16.mxu0 0
    %1556 = vmatpush1.bf16.msra.mxu0 0
    %1557 = vmatprep.subr.bf16.mxu0 0
    %1558 = vmatpush1.bf16.msra.mxu0 0
    %1559 = vmatprep.subr.bf16.mxu0 0
    %1560 = vmatpush1.bf16.msra.mxu0 0
    %1561 = vmatprep.subr.bf16.mxu0 0
    %1562 = vmatpush1.bf16.msra.mxu0 %v1522
    %1563 = vmatprep.subr.bf16.mxu0 0
    %1564 = vmatpush1.bf16.msra.mxu0 %v1521
    %1565 = vmatprep.subr.bf16.mxu0 0
    %1566 = vmatpush2.bf16.msra.mxu0 0
    %1567 = vmatprep.subr.bf16.mxu0 0
    %1568 = vmatpush2.bf16.msra.mxu0 0
    %1569 = vmatprep.subr.bf16.mxu0 0
    %1570 = vmatpush2.bf16.msra.mxu0 0
    %1571 = vmatprep.subr.bf16.mxu0 0
    %1572 = vmatpush2.bf16.msra.mxu0 0
    %1573 = vmatprep.subr.bf16.mxu0 0
    %1574 = vmatpush2.bf16.msra.mxu0 0
    %1575 = vmatprep.subr.bf16.mxu0 0
    %1576 = vmatpush2.bf16.msra.mxu0 0
    %1577 = vmatprep.subr.bf16.mxu0 0
    %1578 = vmatpush2.bf16.msra.mxu0 0
    %1579 = vmatprep.subr.bf16.mxu0 0
    %1580 = vmatpush2.bf16.msra.mxu0 0
    %1581 = vmatprep.mubr.bf16.mxu0 0
    %1582 = vmatmul.mubr.bf16.gmra.mxu0 %v1526
    %v1583 = vpop.f32.mrf.mxu0
    %v1584 = vadd.f32 %v1511, %v1583
    %v1585 = vpop.f32.mrf.mxu0
    %v1586 = vpop.f32.mrf.mxu0
    %v1587 = vadd.f32 %v1511, %v1586
    %v1588 = vpop.f32.mrf.mxu0
    %1589 = vmatprep.mubr.bf16.mxu0 0
    %1590 = vmatmul.mubr.bf16.gmra.mxu0 %v1529
    %v1591 = vpop.f32.mrf.mxu0
    %v1592 = vadd.f32 %v1511, %v1591
    %v1593 = vpop.f32.mrf.mxu0
    %v1594 = vpop.f32.mrf.mxu0
    %v1595 = vadd.f32 %v1511, %v1594
    %v1596 = vpop.f32.mrf.mxu0
    %1597 = vmatprep.mubr.bf16.mxu0 0
    %1598 = vmatmul.mubr.bf16.gmra.mxu0 %v1532
    %v1599 = vpop.f32.mrf.mxu0
    %v1600 = vadd.f32 %v1511, %v1599
    %v1601 = vpop.f32.mrf.mxu0
    %v1602 = vpop.f32.mrf.mxu0
    %v1603 = vadd.f32 %v1511, %v1602
    %v1604 = vpop.f32.mrf.mxu0
    %1605 = vmatprep.mubr.bf16.mxu0 0
    %1606 = vmatmul.mubr.bf16.gmra.mxu0 %v1535
    %v1607 = vpop.f32.mrf.mxu0
    %v1608 = vadd.f32 %v1511, %v1607
    %v1609 = vpop.f32.mrf.mxu0
    %v1610 = vpop.f32.mrf.mxu0
    %v1611 = vadd.f32 %v1511, %v1610
    %v1612 = vpop.f32.mrf.mxu0
    %1613 = vmatprep.mubr.bf16.mxu0 0
    %1614 = vmatmul.mubr.bf16.gmra.mxu0 %v1538
    %v1615 = vpop.f32.mrf.mxu0
    %v1616 = vadd.f32 %v1511, %v1615
    %v1617 = vpop.f32.mrf.mxu0
    %v1618 = vpop.f32.mrf.mxu0
    %v1619 = vadd.f32 %v1511, %v1618
    %v1620 = vpop.f32.mrf.mxu0
    %1621 = vmatprep.mubr.bf16.mxu0 0
    %1622 = vmatmul.mubr.bf16.gmra.mxu0 %v1541
    %v1623 = vpop.f32.mrf.mxu0
    %v1624 = vadd.f32 %v1511, %v1623
    %v1625 = vpop.f32.mrf.mxu0
    %v1626 = vpop.f32.mrf.mxu0
    %v1627 = vadd.f32 %v1511, %v1626
    %v1628 = vpop.f32.mrf.mxu0
    %1629 = vmatprep.mubr.bf16.mxu0 0
    %1630 = vmatmul.mubr.bf16.gmra.mxu0 %v1544
    %v1631 = vpop.f32.mrf.mxu0
    %v1632 = vadd.f32 %v1511, %v1631
    %v1633 = vpop.f32.mrf.mxu0
    %v1634 = vpop.f32.mrf.mxu0
    %v1635 = vadd.f32 %v1511, %v1634
    %v1636 = vpop.f32.mrf.mxu0
    %1637 = vmatprep.mubr.bf16.mxu0 0
    %1638 = vmatmul.mubr.bf16.gmra.mxu0 %v1547
    %v1639 = vpop.f32.mrf.mxu0
    %v1640 = vadd.f32 %v1511, %v1639
    %v1641 = vpop.f32.mrf.mxu0
    %v1642 = vpop.f32.mrf.mxu0
    %v1643 = vadd.f32 %v1511, %v1642
    %v1644 = vpop.f32.mrf.mxu0
    %1645 = vdwg.mxu0
    %v1646 = vunpack.c.l.bf16 %v28
    %v1647 = vunpack.c.l.bf16 %v29
    %v1648 = vunpack.c.l.bf16 %v30
    %v1649 = vunpack.c.l.bf16 %v31
    %v1650 = vunpack.c.l.bf16 %v32
    %v1651 = vunpack.c.l.bf16 %v33
    %v1652 = vunpack.c.l.bf16 %v34
    %v1653 = vunpack.c.l.bf16 %v35
    %v1654 = vunpack.c.l.bf16 %v36
    %v1655 = vunpack.c.l.bf16 %v37
    %v1656 = vunpack.c.l.bf16 %v38
    %v1657 = vunpack.c.l.bf16 %v39
    %v1658 = vunpack.c.l.bf16 %v40
    %v1659 = vunpack.c.l.bf16 %v41
    %v1660 = vunpack.c.l.bf16 %v42
    %v1661 = vunpack.c.l.bf16 %v43
    %v1662 = vadd.f32 %v1584, %v1646
    %v1663 = vadd.f32 %v1587, %v1647
    %v1664 = vadd.f32 %v1592, %v1648
    %v1665 = vadd.f32 %v1595, %v1649
    %v1666 = vadd.f32 %v1600, %v1650
    %v1667 = vadd.f32 %v1603, %v1651
    %v1668 = vadd.f32 %v1608, %v1652
    %v1669 = vadd.f32 %v1611, %v1653
    %v1670 = vadd.f32 %v1616, %v1654
    %v1671 = vadd.f32 %v1619, %v1655
    %v1672 = vadd.f32 %v1624, %v1656
    %v1673 = vadd.f32 %v1627, %v1657
    %v1674 = vadd.f32 %v1632, %v1658
    %v1675 = vadd.f32 %v1635, %v1659
    %v1676 = vadd.f32 %v1640, %v1660
    %v1677 = vadd.f32 %v1643, %v1661
    %v1678 = vmax.f32 %v1662, 0.0
    %v1679 = vmax.f32 %v1663, 0.0
    %v1680 = vmax.f32 %v1664, 0.0
    %v1681 = vmax.f32 %v1665, 0.0
    %v1682 = vmax.f32 %v1666, 0.0
    %v1683 = vmax.f32 %v1667, 0.0
    %v1684 = vmax.f32 %v1668, 0.0
    %v1685 = vmax.f32 %v1669, 0.0
    %v1686 = vmax.f32 %v1670, 0.0
    %v1687 = vmax.f32 %v1671, 0.0
    %v1688 = vmax.f32 %v1672, 0.0
    %v1689 = vmax.f32 %v1673, 0.0
    %v1690 = vmax.f32 %v1674, 0.0
    %v1691 = vmax.f32 %v1675, 0.0
    %v1692 = vmax.f32 %v1676, 0.0
    %v1693 = vmax.f32 %v1677, 0.0
    %1694 = vst [vmem:[#allocation2] sm:$0xff] %v1678
    %1695 = vst [vmem:[#allocation2 + $0x8] sm:$0xff] %v1679
    %1696 = vst [vmem:[#allocation2 + $0x10] sm:$0xff] %v1680
    %1697 = vst [vmem:[#allocation2 + $0x18] sm:$0xff] %v1681
    %1698 = vst [vmem:[#allocation2 + $0x20] sm:$0xff] %v1682
    %1699 = vst [vmem:[#allocation2 + $0x28] sm:$0xff] %v1683
    %1700 = vst [vmem:[#allocation2 + $0x30] sm:$0xff] %v1684
    %1701 = vst [vmem:[#allocation2 + $0x38] sm:$0xff] %v1685
    %1702 = vst [vmem:[#allocation2 + $0x40] sm:$0xff] %v1686
    %1703 = vst [vmem:[#allocation2 + $0x48] sm:$0xff] %v1687
    %1704 = vst [vmem:[#allocation2 + $0x50] sm:$0xff] %v1688
    %1705 = vst [vmem:[#allocation2 + $0x58] sm:$0xff] %v1689
    %1706 = vst [vmem:[#allocation2 + $0x60] sm:$0xff] %v1690
    %1707 = vst [vmem:[#allocation2 + $0x68] sm:$0xff] %v1691
    %1708 = vst [vmem:[#allocation2 + $0x70] sm:$0xff] %v1692
    %1709 = vst [vmem:[#allocation2 + $0x78] sm:$0xff] %v1693
    // Predicated region
    $region30: #{fwd.3} parent=1 // pred_check
      _
    $region31: #{fwd.3} parent=1 // pred_check_branch
      %1711 = sbr.rel (0) target = $region33
    $region32: #{fwd.3} parent=1 // pred_region
      %s1713 = ssub.s32 2048, 2048
      %1714 = vsyncadd [#allocation3], %s1713
      %s1715 = sshll.u32 [#allocation2], 4
      %s1716 = int_to_ptr.vmem [resolvable:$true] %s1715
      %1721 = dma.vmem_to_hbm [thread:$0]  %s1716, 2048, %s7, [#allocation3], 128, 128, 8
    $region33: #{fwd.3} parent=1 // pred_fallthru
      _
    // Predicated region
    $region34: #{fwd.3} parent=1 // pred_check
      _
    $region35: #{fwd.3} parent=1 // pred_check_branch
      %1723 = sbr.rel (0) target = $region37
    $region36: #{fwd.3} parent=1 // pred_region
      %1724 = dma.done [#allocation3], 2048
    $region37: #{fwd.3} parent=1 // pred_fallthru
      _
    %1725 = vsyncpa [#allocation3], 1

// kernel: fwd.2
$region0: #{fwd.2}
  #allocation0 [shape = 'u32[]', space=smem, size = 0x4, offset = 0x4, fixed_abs, tag = 'smem constant byte address 0x4 - core index']
  #allocation1 [shape = 'u32[144,128]{1,0:T(1,128)}', space=vmem, size = 0x12000, scoped, tag = 'internal scratch']
  %s0 = inlined_call_operand.vmem [shape: f32[2,2,2,8,8,4], index: 0, kind: input, shape index: {}]
  %s1 = inlined_call_operand.vmem [shape: bf16[4,32], index: 1, kind: input, shape index: {}]
  %s2 = inlined_call_operand.vmem [shape: f32[1,32], index: 2, kind: input, shape index: {}]
  %s3 = inlined_call_operand.vmem [shape: bf16[288,32], index: 3, kind: input, shape index: {}]
  %s4 = inlined_call_operand.vmem [shape: f32[1,32], index: 4, kind: input, shape index: {}]
  %s5 = inlined_call_operand.vmem [shape: bf16[36,128], index: 5, kind: input, shape index: {}]
  %s6 = inlined_call_operand.vmem [shape: f32[1,128], index: 6, kind: input, shape index: {}]
  %s7 = inlined_call_operand.vmem [shape: bf16[2,8,8,128], index: 7, kind: output, shape index: {}]
  %s8 = sld [smem:[#allocation0]]
  $region38: #{fwd.2} parent=0
    _
  %s10 = ssub.s32 1, %s8
  %s11 = scalar_select 0, %s10, %s8
  // Predicated region
  $region2: #{fwd.2} parent=0 // pred_check
    _
  $region3: #{fwd.2} parent=0 // pred_check_branch
    %13 = sbr.rel (0) target = $region5
  $region4: #{fwd.2} parent=0 // pred_region
    _
  $region5: #{fwd.2} parent=0 // pred_fallthru
    _
  // Predicated region
  $region6: #{fwd.2} parent=0 // pred_check
    _
  $region7: #{fwd.2} parent=0 // pred_check_branch
    %15 = sbr.rel (0) target = $region9
  $region8: #{fwd.2} parent=0 // pred_region
    _
  $region9: #{fwd.2} parent=0 // pred_fallthru
    _
  // Predicated region
  $region10: #{fwd.2} parent=0 // pred_check
    _
  $region11: #{fwd.2} parent=0 // pred_check_branch
    %17 = sbr.rel (0) target = $region13
  $region12: #{fwd.2} parent=0 // pred_region
    _
  $region13: #{fwd.2} parent=0 // pred_fallthru
    _
  // Predicated region
  $region14: #{fwd.2} parent=0 // pred_check
    _
  $region15: #{fwd.2} parent=0 // pred_check_branch
    %19 = sbr.rel (0) target = $region17
  $region16: #{fwd.2} parent=0 // pred_region
    _
  $region17: #{fwd.2} parent=0 // pred_fallthru
    _
  // Predicated region
  $region18: #{fwd.2} parent=0 // pred_check
    _
  $region19: #{fwd.2} parent=0 // pred_check_branch
    %21 = sbr.rel (0) target = $region21
  $region20: #{fwd.2} parent=0 // pred_region
    _
  $region21: #{fwd.2} parent=0 // pred_fallthru
    _
  // Predicated region
  $region22: #{fwd.2} parent=0 // pred_check
    _
  $region23: #{fwd.2} parent=0 // pred_check_branch
    %23 = sbr.rel (0) target = $region25
  $region24: #{fwd.2} parent=0 // pred_region
    _
  $region25: #{fwd.2} parent=0 // pred_fallthru
    _
  // Predicated region
  $region26: #{fwd.2} parent=0 // pred_check
    _
  $region27: #{fwd.2} parent=0 // pred_check_branch
    %25 = sbr.rel (0) target = $region29
  $region28: #{fwd.2} parent=0 // pred_region
    _
  $region29: #{fwd.2} parent=0 // pred_fallthru
    _
  %v27 = vld [vmem:[%s0] sm:$0xff]
  %v28 = vld [vmem:[%s0 + $0x8] sm:$0xff]
  %v29 = vld [vmem:[%s0 + $0x10] sm:$0xff]
  %v30 = vld [vmem:[%s0 + $0x18] sm:$0xff]
  %v31 = vld [vmem:[%s0 + $0x20] sm:$0xff]
  %v32 = vld [vmem:[%s0 + $0x28] sm:$0xff]
  %v33 = vld [vmem:[%s0 + $0x30] sm:$0xff]
  %v34 = vld [vmem:[%s0 + $0x38] sm:$0xff]
  %v35 = vld [vmem:[%s0 + $0x40] sm:$0xff]
  %v36 = vld [vmem:[%s0 + $0x48] sm:$0xff]
  %v37 = vld [vmem:[%s0 + $0x50] sm:$0xff]
  %v38 = vld [vmem:[%s0 + $0x58] sm:$0xff]
  %v39 = vld [vmem:[%s0 + $0x60] sm:$0xff]
  %v40 = vld [vmem:[%s0 + $0x68] sm:$0xff]
  %v41 = vld [vmem:[%s0 + $0x70] sm:$0xff]
  %v42 = vld [vmem:[%s0 + $0x78] sm:$0xff]
  %v43 = vld [vmem:[%s0 + $0x80] sm:$0xff]
  %v44 = vld [vmem:[%s0 + $0x88] sm:$0xff]
  %v45 = vld [vmem:[%s0 + $0x90] sm:$0xff]
  %v46 = vld [vmem:[%s0 + $0x98] sm:$0xff]
  %v47 = vld [vmem:[%s0 + $0xa0] sm:$0xff]
  %v48 = vld [vmem:[%s0 + $0xa8] sm:$0xff]
  %v49 = vld [vmem:[%s0 + $0xb0] sm:$0xff]
  %v50 = vld [vmem:[%s0 + $0xb8] sm:$0xff]
  %v51 = vld [vmem:[%s0 + $0xc0] sm:$0xff]
  %v52 = vld [vmem:[%s0 + $0xc8] sm:$0xff]
  %v53 = vld [vmem:[%s0 + $0xd0] sm:$0xff]
  %v54 = vld [vmem:[%s0 + $0xd8] sm:$0xff]
  %v55 = vld [vmem:[%s0 + $0xe0] sm:$0xff]
  %v56 = vld [vmem:[%s0 + $0xe8] sm:$0xff]
  %v57 = vld [vmem:[%s0 + $0xf0] sm:$0xff]
  %v58 = vld [vmem:[%s0 + $0xf8] sm:$0xff]
  %v59 = vld [vmem:[%s0 + $0x100] sm:$0xff]
  %v60 = vld [vmem:[%s0 + $0x108] sm:$0xff]
  %v61 = vld [vmem:[%s0 + $0x110] sm:$0xff]
  %v62 = vld [vmem:[%s0 + $0x118] sm:$0xff]
  %v63 = vld [vmem:[%s0 + $0x120] sm:$0xff]
  %v64 = vld [vmem:[%s0 + $0x128] sm:$0xff]
  %v65 = vld [vmem:[%s0 + $0x130] sm:$0xff]
  %v66 = vld [vmem:[%s0 + $0x138] sm:$0xff]
  %v67 = vld [vmem:[%s0 + $0x140] sm:$0xff]
  %v68 = vld [vmem:[%s0 + $0x148] sm:$0xff]
  %v69 = vld [vmem:[%s0 + $0x150] sm:$0xff]
  %v70 = vld [vmem:[%s0 + $0x158] sm:$0xff]
  %v71 = vld [vmem:[%s0 + $0x160] sm:$0xff]
  %v72 = vld [vmem:[%s0 + $0x168] sm:$0xff]
  %v73 = vld [vmem:[%s0 + $0x170] sm:$0xff]
  %v74 = vld [vmem:[%s0 + $0x178] sm:$0xff]
  %v75 = vld [vmem:[%s0 + $0x180] sm:$0xff]
  %v76 = vld [vmem:[%s0 + $0x188] sm:$0xff]
  %v77 = vld [vmem:[%s0 + $0x190] sm:$0xff]
  %v78 = vld [vmem:[%s0 + $0x198] sm:$0xff]
  %v79 = vld [vmem:[%s0 + $0x1a0] sm:$0xff]
  %v80 = vld [vmem:[%s0 + $0x1a8] sm:$0xff]
  %v81 = vld [vmem:[%s0 + $0x1b0] sm:$0xff]
  %v82 = vld [vmem:[%s0 + $0x1b8] sm:$0xff]
  %v83 = vld [vmem:[%s0 + $0x1c0] sm:$0xff]
  %v84 = vld [vmem:[%s0 + $0x1c8] sm:$0xff]
  %v85 = vld [vmem:[%s0 + $0x1d0] sm:$0xff]
  %v86 = vld [vmem:[%s0 + $0x1d8] sm:$0xff]
  %v87 = vld [vmem:[%s0 + $0x1e0] sm:$0xff]
  %v88 = vld [vmem:[%s0 + $0x1e8] sm:$0xff]
  %v89 = vld [vmem:[%s0 + $0x1f0] sm:$0xff]
  %v90 = vld [vmem:[%s0 + $0x1f8] sm:$0xff]
  %v91 = vpack.c.bf16 %v28, %v27
  %v92 = vpack.c.bf16 %v30, %v29
  %v93 = vpack.c.bf16 %v32, %v31
  %v94 = vpack.c.bf16 %v34, %v33
  %v95 = vpack.c.bf16 %v36, %v35
  %v96 = vpack.c.bf16 %v38, %v37
  %v97 = vpack.c.bf16 %v40, %v39
  %v98 = vpack.c.bf16 %v42, %v41
  %v99 = vpack.c.bf16 %v44, %v43
  %v100 = vpack.c.bf16 %v46, %v45
  %v101 = vpack.c.bf16 %v48, %v47
  %v102 = vpack.c.bf16 %v50, %v49
  %v103 = vpack.c.bf16 %v52, %v51
  %v104 = vpack.c.bf16 %v54, %v53
  %v105 = vpack.c.bf16 %v56, %v55
  %v106 = vpack.c.bf16 %v58, %v57
  %v107 = vpack.c.bf16 %v60, %v59
  %v108 = vpack.c.bf16 %v62, %v61
  %v109 = vpack.c.bf16 %v64, %v63
  %v110 = vpack.c.bf16 %v66, %v65
  %v111 = vpack.c.bf16 %v68, %v67
  %v112 = vpack.c.bf16 %v70, %v69
  %v113 = vpack.c.bf16 %v72, %v71
  %v114 = vpack.c.bf16 %v74, %v73
  %v115 = vpack.c.bf16 %v76, %v75
  %v116 = vpack.c.bf16 %v78, %v77
  %v117 = vpack.c.bf16 %v80, %v79
  %v118 = vpack.c.bf16 %v82, %v81
  %v119 = vpack.c.bf16 %v84, %v83
  %v120 = vpack.c.bf16 %v86, %v85
  %v121 = vpack.c.bf16 %v88, %v87
  %v122 = vpack.c.bf16 %v90, %v89
  %v123 = vld [vmem:[%s1] sm:$0x3]
  %v124 = vld [vmem:[%s2] sm:$0x1]
  %v126 = vlaneseq
  %v127 = vshrl.u32 %v126, 7
  %v128 = vsub.s32 0, %v127
  %v129 = vrot.slane %v124, %v128
  %vm131 = vcmask 31744
  %v133 = vsel %vm131, %v91, 0
  %v136 = vsel %vm131, %v92, 0
  %v139 = vsel %vm131, %v93, 0
  %v142 = vsel %vm131, %v94, 0
  %v145 = vsel %vm131, %v95, 0
  %v148 = vsel %vm131, %v96, 0
  %v151 = vsel %vm131, %v97, 0
  %v154 = vsel %vm131, %v98, 0
  %v157 = vsel %vm131, %v99, 0
  %v160 = vsel %vm131, %v100, 0
  %v163 = vsel %vm131, %v101, 0
  %v166 = vsel %vm131, %v102, 0
  %v169 = vsel %vm131, %v103, 0
  %v172 = vsel %vm131, %v104, 0
  %v175 = vsel %vm131, %v105, 0
  %v178 = vsel %vm131, %v106, 0
  %v181 = vsel %vm131, %v107, 0
  %v184 = vsel %vm131, %v108, 0
  %v187 = vsel %vm131, %v109, 0
  %v190 = vsel %vm131, %v110, 0
  %v193 = vsel %vm131, %v111, 0
  %v196 = vsel %vm131, %v112, 0
  %v199 = vsel %vm131, %v113, 0
  %v202 = vsel %vm131, %v114, 0
  %v205 = vsel %vm131, %v115, 0
  %v208 = vsel %vm131, %v116, 0
  %v211 = vsel %vm131, %v117, 0
  %v214 = vsel %vm131, %v118, 0
  %v217 = vsel %vm131, %v119, 0
  %v220 = vsel %vm131, %v120, 0
  %v223 = vsel %vm131, %v121, 0
  %v226 = vsel %vm131, %v122, 0
  %vm228 = vcmask 1041408
  %v230 = vsel %vm228, %v123, 0
  %232 = vmatprep.subr.bf16.mxu0 0
  %233 = vmatpush1.bf16.msra.mxu0 0
  %234 = vmatprep.subr.bf16.mxu0 0
  %235 = vmatpush1.bf16.msra.mxu0 0
  %236 = vmatprep.subr.bf16.mxu0 0
  %237 = vmatpush1.bf16.msra.mxu0 0
  %238 = vmatprep.subr.bf16.mxu0 0
  %239 = vmatpush1.bf16.msra.mxu0 0
  %240 = vmatprep.subr.bf16.mxu0 0
  %241 = vmatpush1.bf16.msra.mxu0 0
  %242 = vmatprep.subr.bf16.mxu0 0
  %243 = vmatpush1.bf16.msra.mxu0 0
  %244 = vmatprep.subr.bf16.mxu0 0
  %245 = vmatpush1.bf16.msra.mxu0 0
  %246 = vmatprep.subr.bf16.mxu0 0
  %247 = vmatpush1.bf16.msra.mxu0 %v230
  %248 = vmatprep.subr.bf16.mxu0 0
  %249 = vmatpush2.bf16.msra.mxu0 0
  %250 = vmatprep.subr.bf16.mxu0 0
  %251 = vmatpush2.bf16.msra.mxu0 0
  %252 = vmatprep.subr.bf16.mxu0 0
  %253 = vmatpush2.bf16.msra.mxu0 0
  %254 = vmatprep.subr.bf16.mxu0 0
  %255 = vmatpush2.bf16.msra.mxu0 0
  %256 = vmatprep.subr.bf16.mxu0 0
  %257 = vmatpush2.bf16.msra.mxu0 0
  %258 = vmatprep.subr.bf16.mxu0 0
  %259 = vmatpush2.bf16.msra.mxu0 0
  %260 = vmatprep.subr.bf16.mxu0 0
  %261 = vmatpush2.bf16.msra.mxu0 0
  %262 = vmatprep.subr.bf16.mxu0 0
  %263 = vmatpush2.bf16.msra.mxu0 0
  %264 = vmatprep.mubr.bf16.mxu0 0
  %265 = vmatmul.mubr.bf16.gmra.mxu0 %v133
  %v266 = vpop.f32.mrf.mxu0
  %v267 = vadd.f32 %v129, %v266
  %v268 = vpop.f32.mrf.mxu0
  %v269 = vpop.f32.mrf.mxu0
  %v270 = vadd.f32 %v129, %v269
  %v271 = vpop.f32.mrf.mxu0
  %272 = vmatprep.mubr.bf16.mxu0 0
  %273 = vmatmul.mubr.bf16.gmra.mxu0 %v136
  %v274 = vpop.f32.mrf.mxu0
  %v275 = vadd.f32 %v129, %v274
  %v276 = vpop.f32.mrf.mxu0
  %v277 = vpop.f32.mrf.mxu0
  %v278 = vadd.f32 %v129, %v277
  %v279 = vpop.f32.mrf.mxu0
  %280 = vmatprep.mubr.bf16.mxu0 0
  %281 = vmatmul.mubr.bf16.gmra.mxu0 %v139
  %v282 = vpop.f32.mrf.mxu0
  %v283 = vadd.f32 %v129, %v282
  %v284 = vpop.f32.mrf.mxu0
  %v285 = vpop.f32.mrf.mxu0
  %v286 = vadd.f32 %v129, %v285
  %v287 = vpop.f32.mrf.mxu0
  %288 = vmatprep.mubr.bf16.mxu0 0
  %289 = vmatmul.mubr.bf16.gmra.mxu0 %v142
  %v290 = vpop.f32.mrf.mxu0
  %v291 = vadd.f32 %v129, %v290
  %v292 = vpop.f32.mrf.mxu0
  %v293 = vpop.f32.mrf.mxu0
  %v294 = vadd.f32 %v129, %v293
  %v295 = vpop.f32.mrf.mxu0
  %296 = vmatprep.mubr.bf16.mxu0 0
  %297 = vmatmul.mubr.bf16.gmra.mxu0 %v145
  %v298 = vpop.f32.mrf.mxu0
  %v299 = vadd.f32 %v129, %v298
  %v300 = vpop.f32.mrf.mxu0
  %v301 = vpop.f32.mrf.mxu0
  %v302 = vadd.f32 %v129, %v301
  %v303 = vpop.f32.mrf.mxu0
  %304 = vmatprep.mubr.bf16.mxu0 0
  %305 = vmatmul.mubr.bf16.gmra.mxu0 %v148
  %v306 = vpop.f32.mrf.mxu0
  %v307 = vadd.f32 %v129, %v306
  %v308 = vpop.f32.mrf.mxu0
  %v309 = vpop.f32.mrf.mxu0
  %v310 = vadd.f32 %v129, %v309
  %v311 = vpop.f32.mrf.mxu0
  %312 = vmatprep.mubr.bf16.mxu0 0
  %313 = vmatmul.mubr.bf16.gmra.mxu0 %v151
  %v314 = vpop.f32.mrf.mxu0
  %v315 = vadd.f32 %v129, %v314
  %v316 = vpop.f32.mrf.mxu0
  %v317 = vpop.f32.mrf.mxu0
  %v318 = vadd.f32 %v129, %v317
  %v319 = vpop.f32.mrf.mxu0
  %320 = vmatprep.mubr.bf16.mxu0 0
  %321 = vmatmul.mubr.bf16.gmra.mxu0 %v154
  %v322 = vpop.f32.mrf.mxu0
  %v323 = vadd.f32 %v129, %v322
  %v324 = vpop.f32.mrf.mxu0
  %v325 = vpop.f32.mrf.mxu0
  %v326 = vadd.f32 %v129, %v325
  %v327 = vpop.f32.mrf.mxu0
  %328 = vmatprep.mubr.bf16.mxu0 0
  %329 = vmatmul.mubr.bf16.gmra.mxu0 %v157
  %v330 = vpop.f32.mrf.mxu0
  %v331 = vadd.f32 %v129, %v330
  %v332 = vpop.f32.mrf.mxu0
  %v333 = vpop.f32.mrf.mxu0
  %v334 = vadd.f32 %v129, %v333
  %v335 = vpop.f32.mrf.mxu0
  %336 = vmatprep.mubr.bf16.mxu0 0
  %337 = vmatmul.mubr.bf16.gmra.mxu0 %v160
  %v338 = vpop.f32.mrf.mxu0
  %v339 = vadd.f32 %v129, %v338
  %v340 = vpop.f32.mrf.mxu0
  %v341 = vpop.f32.mrf.mxu0
  %v342 = vadd.f32 %v129, %v341
  %v343 = vpop.f32.mrf.mxu0
  %344 = vmatprep.mubr.bf16.mxu0 0
  %345 = vmatmul.mubr.bf16.gmra.mxu0 %v163
  %v346 = vpop.f32.mrf.mxu0
  %v347 = vadd.f32 %v129, %v346
  %v348 = vpop.f32.mrf.mxu0
  %v349 = vpop.f32.mrf.mxu0
  %v350 = vadd.f32 %v129, %v349
  %v351 = vpop.f32.mrf.mxu0
  %352 = vmatprep.mubr.bf16.mxu0 0
  %353 = vmatmul.mubr.bf16.gmra.mxu0 %v166
  %v354 = vpop.f32.mrf.mxu0
  %v355 = vadd.f32 %v129, %v354
  %v356 = vpop.f32.mrf.mxu0
  %v357 = vpop.f32.mrf.mxu0
  %v358 = vadd.f32 %v129, %v357
  %v359 = vpop.f32.mrf.mxu0
  %360 = vmatprep.mubr.bf16.mxu0 0
  %361 = vmatmul.mubr.bf16.gmra.mxu0 %v169
  %v362 = vpop.f32.mrf.mxu0
  %v363 = vadd.f32 %v129, %v362
  %v364 = vpop.f32.mrf.mxu0
  %v365 = vpop.f32.mrf.mxu0
  %v366 = vadd.f32 %v129, %v365
  %v367 = vpop.f32.mrf.mxu0
  %368 = vmatprep.mubr.bf16.mxu0 0
  %369 = vmatmul.mubr.bf16.gmra.mxu0 %v172
  %v370 = vpop.f32.mrf.mxu0
  %v371 = vadd.f32 %v129, %v370
  %v372 = vpop.f32.mrf.mxu0
  %v373 = vpop.f32.mrf.mxu0
  %v374 = vadd.f32 %v129, %v373
  %v375 = vpop.f32.mrf.mxu0
  %376 = vmatprep.mubr.bf16.mxu0 0
  %377 = vmatmul.mubr.bf16.gmra.mxu0 %v175
  %v378 = vpop.f32.mrf.mxu0
  %v379 = vadd.f32 %v129, %v378
  %v380 = vpop.f32.mrf.mxu0
  %v381 = vpop.f32.mrf.mxu0
  %v382 = vadd.f32 %v129, %v381
  %v383 = vpop.f32.mrf.mxu0
  %384 = vmatprep.mubr.bf16.mxu0 0
  %385 = vmatmul.mubr.bf16.gmra.mxu0 %v178
  %v386 = vpop.f32.mrf.mxu0
  %v387 = vadd.f32 %v129, %v386
  %v388 = vpop.f32.mrf.mxu0
  %v389 = vpop.f32.mrf.mxu0
  %v390 = vadd.f32 %v129, %v389
  %v391 = vpop.f32.mrf.mxu0
  %392 = vmatprep.mubr.bf16.mxu0 0
  %393 = vmatmul.mubr.bf16.gmra.mxu0 %v181
  %v394 = vpop.f32.mrf.mxu0
  %v395 = vadd.f32 %v129, %v394
  %v396 = vpop.f32.mrf.mxu0
  %v397 = vpop.f32.mrf.mxu0
  %v398 = vadd.f32 %v129, %v397
  %v399 = vpop.f32.mrf.mxu0
  %400 = vmatprep.mubr.bf16.mxu0 0
  %401 = vmatmul.mubr.bf16.gmra.mxu0 %v184
  %v402 = vpop.f32.mrf.mxu0
  %v403 = vadd.f32 %v129, %v402
  %v404 = vpop.f32.mrf.mxu0
  %v405 = vpop.f32.mrf.mxu0
  %v406 = vadd.f32 %v129, %v405
  %v407 = vpop.f32.mrf.mxu0
  %408 = vmatprep.mubr.bf16.mxu0 0
  %409 = vmatmul.mubr.bf16.gmra.mxu0 %v187
  %v410 = vpop.f32.mrf.mxu0
  %v411 = vadd.f32 %v129, %v410
  %v412 = vpop.f32.mrf.mxu0
  %v413 = vpop.f32.mrf.mxu0
  %v414 = vadd.f32 %v129, %v413
  %v415 = vpop.f32.mrf.mxu0
  %416 = vmatprep.mubr.bf16.mxu0 0
  %417 = vmatmul.mubr.bf16.gmra.mxu0 %v190
  %v418 = vpop.f32.mrf.mxu0
  %v419 = vadd.f32 %v129, %v418
  %v420 = vpop.f32.mrf.mxu0
  %v421 = vpop.f32.mrf.mxu0
  %v422 = vadd.f32 %v129, %v421
  %v423 = vpop.f32.mrf.mxu0
  %424 = vmatprep.mubr.bf16.mxu0 0
  %425 = vmatmul.mubr.bf16.gmra.mxu0 %v193
  %v426 = vpop.f32.mrf.mxu0
  %v427 = vadd.f32 %v129, %v426
  %v428 = vpop.f32.mrf.mxu0
  %v429 = vpop.f32.mrf.mxu0
  %v430 = vadd.f32 %v129, %v429
  %v431 = vpop.f32.mrf.mxu0
  %432 = vmatprep.mubr.bf16.mxu0 0
  %433 = vmatmul.mubr.bf16.gmra.mxu0 %v196
  %v434 = vpop.f32.mrf.mxu0
  %v435 = vadd.f32 %v129, %v434
  %v436 = vpop.f32.mrf.mxu0
  %v437 = vpop.f32.mrf.mxu0
  %v438 = vadd.f32 %v129, %v437
  %v439 = vpop.f32.mrf.mxu0
  %440 = vmatprep.mubr.bf16.mxu0 0
  %441 = vmatmul.mubr.bf16.gmra.mxu0 %v199
  %v442 = vpop.f32.mrf.mxu0
  %v443 = vadd.f32 %v129, %v442
  %v444 = vpop.f32.mrf.mxu0
  %v445 = vpop.f32.mrf.mxu0
  %v446 = vadd.f32 %v129, %v445
  %v447 = vpop.f32.mrf.mxu0
  %448 = vmatprep.mubr.bf16.mxu0 0
  %449 = vmatmul.mubr.bf16.gmra.mxu0 %v202
  %v450 = vpop.f32.mrf.mxu0
  %v451 = vadd.f32 %v129, %v450
  %v452 = vpop.f32.mrf.mxu0
  %v453 = vpop.f32.mrf.mxu0
  %v454 = vadd.f32 %v129, %v453
  %v455 = vpop.f32.mrf.mxu0
  %456 = vmatprep.mubr.bf16.mxu0 0
  %457 = vmatmul.mubr.bf16.gmra.mxu0 %v205
  %v458 = vpop.f32.mrf.mxu0
  %v459 = vadd.f32 %v129, %v458
  %v460 = vpop.f32.mrf.mxu0
  %v461 = vpop.f32.mrf.mxu0
  %v462 = vadd.f32 %v129, %v461
  %v463 = vpop.f32.mrf.mxu0
  %464 = vmatprep.mubr.bf16.mxu0 0
  %465 = vmatmul.mubr.bf16.gmra.mxu0 %v208
  %v466 = vpop.f32.mrf.mxu0
  %v467 = vadd.f32 %v129, %v466
  %v468 = vpop.f32.mrf.mxu0
  %v469 = vpop.f32.mrf.mxu0
  %v470 = vadd.f32 %v129, %v469
  %v471 = vpop.f32.mrf.mxu0
  %472 = vmatprep.mubr.bf16.mxu0 0
  %473 = vmatmul.mubr.bf16.gmra.mxu0 %v211
  %v474 = vpop.f32.mrf.mxu0
  %v475 = vadd.f32 %v129, %v474
  %v476 = vpop.f32.mrf.mxu0
  %v477 = vpop.f32.mrf.mxu0
  %v478 = vadd.f32 %v129, %v477
  %v479 = vpop.f32.mrf.mxu0
  %480 = vmatprep.mubr.bf16.mxu0 0
  %481 = vmatmul.mubr.bf16.gmra.mxu0 %v214
  %v482 = vpop.f32.mrf.mxu0
  %v483 = vadd.f32 %v129, %v482
  %v484 = vpop.f32.mrf.mxu0
  %v485 = vpop.f32.mrf.mxu0
  %v486 = vadd.f32 %v129, %v485
  %v487 = vpop.f32.mrf.mxu0
  %488 = vmatprep.mubr.bf16.mxu0 0
  %489 = vmatmul.mubr.bf16.gmra.mxu0 %v217
  %v490 = vpop.f32.mrf.mxu0
  %v491 = vadd.f32 %v129, %v490
  %v492 = vpop.f32.mrf.mxu0
  %v493 = vpop.f32.mrf.mxu0
  %v494 = vadd.f32 %v129, %v493
  %v495 = vpop.f32.mrf.mxu0
  %496 = vmatprep.mubr.bf16.mxu0 0
  %497 = vmatmul.mubr.bf16.gmra.mxu0 %v220
  %v498 = vpop.f32.mrf.mxu0
  %v499 = vadd.f32 %v129, %v498
  %v500 = vpop.f32.mrf.mxu0
  %v501 = vpop.f32.mrf.mxu0
  %v502 = vadd.f32 %v129, %v501
  %v503 = vpop.f32.mrf.mxu0
  %504 = vmatprep.mubr.bf16.mxu0 0
  %505 = vmatmul.mubr.bf16.gmra.mxu0 %v223
  %v506 = vpop.f32.mrf.mxu0
  %v507 = vadd.f32 %v129, %v506
  %v508 = vpop.f32.mrf.mxu0
  %v509 = vpop.f32.mrf.mxu0
  %v510 = vadd.f32 %v129, %v509
  %v511 = vpop.f32.mrf.mxu0
  %512 = vmatprep.mubr.bf16.mxu0 0
  %513 = vmatmul.mubr.bf16.gmra.mxu0 %v226
  %v514 = vpop.f32.mrf.mxu0
  %v515 = vadd.f32 %v129, %v514
  %v516 = vpop.f32.mrf.mxu0
  %v517 = vpop.f32.mrf.mxu0
  %v518 = vadd.f32 %v129, %v517
  %v519 = vpop.f32.mrf.mxu0
  %520 = vdwg.mxu0
  %v521 = vmax.f32 %v267, 0.0
  %v522 = vmax.f32 %v270, 0.0
  %v523 = vmax.f32 %v275, 0.0
  %v524 = vmax.f32 %v278, 0.0
  %v525 = vmax.f32 %v283, 0.0
  %v526 = vmax.f32 %v286, 0.0
  %v527 = vmax.f32 %v291, 0.0
  %v528 = vmax.f32 %v294, 0.0
  %v529 = vmax.f32 %v299, 0.0
  %v530 = vmax.f32 %v302, 0.0
  %v531 = vmax.f32 %v307, 0.0
  %v532 = vmax.f32 %v310, 0.0
  %v533 = vmax.f32 %v315, 0.0
  %v534 = vmax.f32 %v318, 0.0
  %v535 = vmax.f32 %v323, 0.0
  %v536 = vmax.f32 %v326, 0.0
  %v537 = vmax.f32 %v331, 0.0
  %v538 = vmax.f32 %v334, 0.0
  %v539 = vmax.f32 %v339, 0.0
  %v540 = vmax.f32 %v342, 0.0
  %v541 = vmax.f32 %v347, 0.0
  %v542 = vmax.f32 %v350, 0.0
  %v543 = vmax.f32 %v355, 0.0
  %v544 = vmax.f32 %v358, 0.0
  %v545 = vmax.f32 %v363, 0.0
  %v546 = vmax.f32 %v366, 0.0
  %v547 = vmax.f32 %v371, 0.0
  %v548 = vmax.f32 %v374, 0.0
  %v549 = vmax.f32 %v379, 0.0
  %v550 = vmax.f32 %v382, 0.0
  %v551 = vmax.f32 %v387, 0.0
  %v552 = vmax.f32 %v390, 0.0
  %v553 = vmax.f32 %v395, 0.0
  %v554 = vmax.f32 %v398, 0.0
  %v555 = vmax.f32 %v403, 0.0
  %v556 = vmax.f32 %v406, 0.0
  %v557 = vmax.f32 %v411, 0.0
  %v558 = vmax.f32 %v414, 0.0
  %v559 = vmax.f32 %v419, 0.0
  %v560 = vmax.f32 %v422, 0.0
  %v561 = vmax.f32 %v427, 0.0
  %v562 = vmax.f32 %v430, 0.0
  %v563 = vmax.f32 %v435, 0.0
  %v564 = vmax.f32 %v438, 0.0
  %v565 = vmax.f32 %v443, 0.0
  %v566 = vmax.f32 %v446, 0.0
  %v567 = vmax.f32 %v451, 0.0
  %v568 = vmax.f32 %v454, 0.0
  %v569 = vmax.f32 %v459, 0.0
  %v570 = vmax.f32 %v462, 0.0
  %v571 = vmax.f32 %v467, 0.0
  %v572 = vmax.f32 %v470, 0.0
  %v573 = vmax.f32 %v475, 0.0
  %v574 = vmax.f32 %v478, 0.0
  %v575 = vmax.f32 %v483, 0.0
  %v576 = vmax.f32 %v486, 0.0
  %v577 = vmax.f32 %v491, 0.0
  %v578 = vmax.f32 %v494, 0.0
  %v579 = vmax.f32 %v499, 0.0
  %v580 = vmax.f32 %v502, 0.0
  %v581 = vmax.f32 %v507, 0.0
  %v582 = vmax.f32 %v510, 0.0
  %v583 = vmax.f32 %v515, 0.0
  %v584 = vmax.f32 %v518, 0.0
  %v585 = vpack.c.bf16 %v522, %v521
  %v586 = vpack.c.bf16 %v524, %v523
  %v587 = vpack.c.bf16 %v526, %v525
  %v588 = vpack.c.bf16 %v528, %v527
  %v589 = vpack.c.bf16 %v530, %v529
  %v590 = vpack.c.bf16 %v532, %v531
  %v591 = vpack.c.bf16 %v534, %v533
  %v592 = vpack.c.bf16 %v536, %v535
  %v593 = vpack.c.bf16 %v538, %v537
  %v594 = vpack.c.bf16 %v540, %v539
  %v595 = vpack.c.bf16 %v542, %v541
  %v596 = vpack.c.bf16 %v544, %v543
  %v597 = vpack.c.bf16 %v546, %v545
  %v598 = vpack.c.bf16 %v548, %v547
  %v599 = vpack.c.bf16 %v550, %v549
  %v600 = vpack.c.bf16 %v552, %v551
  %v601 = vpack.c.bf16 %v554, %v553
  %v602 = vpack.c.bf16 %v556, %v555
  %v603 = vpack.c.bf16 %v558, %v557
  %v604 = vpack.c.bf16 %v560, %v559
  %v605 = vpack.c.bf16 %v562, %v561
  %v606 = vpack.c.bf16 %v564, %v563
  %v607 = vpack.c.bf16 %v566, %v565
  %v608 = vpack.c.bf16 %v568, %v567
  %v609 = vpack.c.bf16 %v570, %v569
  %v610 = vpack.c.bf16 %v572, %v571
  %v611 = vpack.c.bf16 %v574, %v573
  %v612 = vpack.c.bf16 %v576, %v575
  %v613 = vpack.c.bf16 %v578, %v577
  %v614 = vpack.c.bf16 %v580, %v579
  %v615 = vpack.c.bf16 %v582, %v581
  %v616 = vpack.c.bf16 %v584, %v583
  %v649 = vunpack.c.l.b16 %v585
  %v650 = vunpack.c.h.b16 %v585
  %v651 = vunpack.c.l.b16 %v586
  %v652 = vunpack.c.h.b16 %v586
  %v653 = vunpack.c.l.b16 %v587
  %v654 = vunpack.c.h.b16 %v587
  %v655 = vunpack.c.l.b16 %v588
  %v656 = vunpack.c.h.b16 %v588
  %v657 = vunpack.c.l.b16 %v589
  %v658 = vunpack.c.h.b16 %v589
  %v659 = vunpack.c.l.b16 %v590
  %v660 = vunpack.c.h.b16 %v590
  %v661 = vunpack.c.l.b16 %v591
  %v662 = vunpack.c.h.b16 %v591
  %v663 = vunpack.c.l.b16 %v592
  %v664 = vunpack.c.h.b16 %v592
  %v665 = vunpack.c.l.b16 %v593
  %v666 = vunpack.c.h.b16 %v593
  %v667 = vunpack.c.l.b16 %v594
  %v668 = vunpack.c.h.b16 %v594
  %v669 = vunpack.c.l.b16 %v595
  %v670 = vunpack.c.h.b16 %v595
  %v671 = vunpack.c.l.b16 %v596
  %v672 = vunpack.c.h.b16 %v596
  %v673 = vunpack.c.l.b16 %v597
  %v674 = vunpack.c.h.b16 %v597
  %v675 = vunpack.c.l.b16 %v598
  %v676 = vunpack.c.h.b16 %v598
  %v677 = vunpack.c.l.b16 %v599
  %v678 = vunpack.c.h.b16 %v599
  %v679 = vunpack.c.l.b16 %v600
  %v680 = vunpack.c.h.b16 %v600
  %v681 = vunpack.c.l.b16 %v601
  %v682 = vunpack.c.h.b16 %v601
  %v683 = vunpack.c.l.b16 %v602
  %v684 = vunpack.c.h.b16 %v602
  %v685 = vunpack.c.l.b16 %v603
  %v686 = vunpack.c.h.b16 %v603
  %v687 = vunpack.c.l.b16 %v604
  %v688 = vunpack.c.h.b16 %v604
  %v689 = vunpack.c.l.b16 %v605
  %v690 = vunpack.c.h.b16 %v605
  %v691 = vunpack.c.l.b16 %v606
  %v692 = vunpack.c.h.b16 %v606
  %v693 = vunpack.c.l.b16 %v607
  %v694 = vunpack.c.h.b16 %v607
  %v695 = vunpack.c.l.b16 %v608
  %v696 = vunpack.c.h.b16 %v608
  %v697 = vunpack.c.l.b16 %v609
  %v698 = vunpack.c.h.b16 %v609
  %v699 = vunpack.c.l.b16 %v610
  %v700 = vunpack.c.h.b16 %v610
  %v701 = vunpack.c.l.b16 %v611
  %v702 = vunpack.c.h.b16 %v611
  %v703 = vunpack.c.l.b16 %v612
  %v704 = vunpack.c.h.b16 %v612
  %v705 = vunpack.c.l.b16 %v613
  %v706 = vunpack.c.h.b16 %v613
  %v707 = vunpack.c.l.b16 %v614
  %v708 = vunpack.c.h.b16 %v614
  %v709 = vunpack.c.l.b16 %v615
  %v710 = vunpack.c.h.b16 %v615
  %v711 = vunpack.c.l.b16 %v616
  %v712 = vunpack.c.h.b16 %v616
  %v713 = vpack.c.b16 %v649, %v649
  %v714 = vpack.c.b16 %v650, %v650
  %v715 = vpack.c.b16 %v651, %v651
  %v716 = vpack.c.b16 %v652, %v652
  %v717 = vpack.c.b16 %v653, %v653
  %v718 = vpack.c.b16 %v654, %v654
  %v719 = vpack.c.b16 %v655, %v655
  %v720 = vpack.c.b16 %v656, %v656
  %v721 = vpack.c.b16 %v657, %v657
  %v722 = vpack.c.b16 %v658, %v658
  %v723 = vpack.c.b16 %v659, %v659
  %v724 = vpack.c.b16 %v660, %v660
  %v725 = vpack.c.b16 %v661, %v661
  %v726 = vpack.c.b16 %v662, %v662
  %v727 = vpack.c.b16 %v663, %v663
  %v728 = vpack.c.b16 %v664, %v664
  %v729 = vpack.c.b16 %v681, %v681
  %v730 = vpack.c.b16 %v682, %v682
  %v731 = vpack.c.b16 %v683, %v683
  %v732 = vpack.c.b16 %v684, %v684
  %v733 = vpack.c.b16 %v685, %v685
  %v734 = vpack.c.b16 %v686, %v686
  %v735 = vpack.c.b16 %v687, %v687
  %v736 = vpack.c.b16 %v689, %v689
  %v737 = vpack.c.b16 %v690, %v690
  %v738 = vpack.c.b16 %v691, %v691
  %v739 = vpack.c.b16 %v692, %v692
  %v740 = vpack.c.b16 %v693, %v693
  %v741 = vpack.c.b16 %v694, %v694
  %v742 = vpack.c.b16 %v695, %v695
  %v743 = vpack.c.b16 %v697, %v697
  %v744 = vpack.c.b16 %v698, %v698
  %v745 = vpack.c.b16 %v699, %v699
  %v746 = vpack.c.b16 %v700, %v700
  %v747 = vpack.c.b16 %v701, %v701
  %v748 = vpack.c.b16 %v702, %v702
  %v749 = vpack.c.b16 %v703, %v703
  %v750 = vpack.c.b16 %v705, %v705
  %v751 = vpack.c.b16 %v706, %v706
  %v752 = vpack.c.b16 %v707, %v707
  %v753 = vpack.c.b16 %v708, %v708
  %v754 = vpack.c.b16 %v709, %v709
  %v755 = vpack.c.b16 %v710, %v710
  %v756 = vpack.c.b16 %v711, %v711
  %v758 = vshrl.u32 0, 16
  %v760 = vrot.slane %v758, 7
  %v761 = vshll.u32 0, 16
  %v763 = vor.u32 %v760, %v761
  %v765 = vshrl.u32 %v743, 16
  %v767 = vrot.slane %v765, 7
  %v768 = vshll.u32 %v743, 16
  %v770 = vor.u32 %v767, %v768
  %v772 = vshrl.u32 %v744, 16
  %v774 = vrot.slane %v772, 7
  %v775 = vshll.u32 %v744, 16
  %v777 = vor.u32 %v774, %v775
  %v779 = vshrl.u32 %v745, 16
  %v781 = vrot.slane %v779, 7
  %v782 = vshll.u32 %v745, 16
  %v784 = vor.u32 %v781, %v782
  %v786 = vshrl.u32 %v746, 16
  %v788 = vrot.slane %v786, 7
  %v789 = vshll.u32 %v746, 16
  %v791 = vor.u32 %v788, %v789
  %v793 = vshrl.u32 %v747, 16
  %v795 = vrot.slane %v793, 7
  %v796 = vshll.u32 %v747, 16
  %v798 = vor.u32 %v795, %v796
  %v800 = vshrl.u32 %v748, 16
  %v802 = vrot.slane %v800, 7
  %v803 = vshll.u32 %v748, 16
  %v805 = vor.u32 %v802, %v803
  %v807 = vshrl.u32 %v749, 16
  %v809 = vrot.slane %v807, 7
  %v810 = vshll.u32 %v749, 16
  %v812 = vor.u32 %v809, %v810
  %v814 = vshrl.u32 %v750, 16
  %v816 = vrot.slane %v814, 7
  %v817 = vshll.u32 %v750, 16
  %v819 = vor.u32 %v816, %v817
  %v821 = vshrl.u32 %v751, 16
  %v823 = vrot.slane %v821, 7
  %v824 = vshll.u32 %v751, 16
  %v826 = vor.u32 %v823, %v824
  %v828 = vshrl.u32 %v752, 16
  %v830 = vrot.slane %v828, 7
  %v831 = vshll.u32 %v752, 16
  %v833 = vor.u32 %v830, %v831
  %v835 = vshrl.u32 %v753, 16
  %v837 = vrot.slane %v835, 7
  %v838 = vshll.u32 %v753, 16
  %v840 = vor.u32 %v837, %v838
  %v842 = vshrl.u32 %v754, 16
  %v844 = vrot.slane %v842, 7
  %v845 = vshll.u32 %v754, 16
  %v847 = vor.u32 %v844, %v845
  %v849 = vshrl.u32 %v755, 16
  %v851 = vrot.slane %v849, 7
  %v852 = vshll.u32 %v755, 16
  %v854 = vor.u32 %v851, %v852
  %v856 = vshrl.u32 %v756, 16
  %v858 = vrot.slane %v856, 7
  %v859 = vshll.u32 %v756, 16
  %v861 = vor.u32 %v858, %v859
  %vm877 = vcmask 1040384
  %vm878 = vsmask.f32 256
  %vm879 = vmand %vm877, %vm878
  %v880 = vsel %vm879, 0, %v763
  %v881 = vsel %vm879, 0, %v770
  %v882 = vsel %vm879, 0, %v777
  %v883 = vsel %vm879, 0, %v784
  %v884 = vsel %vm879, 0, %v791
  %v885 = vsel %vm879, 0, %v798
  %v886 = vsel %vm879, 0, %v805
  %v887 = vsel %vm879, 0, %v812
  %v888 = vsel %vm879, 0, %v819
  %v889 = vsel %vm879, 0, %v826
  %v890 = vsel %vm879, 0, %v833
  %v891 = vsel %vm879, 0, %v840
  %v892 = vsel %vm879, 0, %v847
  %v893 = vsel %vm879, 0, %v854
  %v894 = vsel %vm879, 0, %v861
  %v895 = vpack.c.b16 %v665, %v665
  %v896 = vpack.c.b16 %v666, %v666
  %v897 = vpack.c.b16 %v667, %v667
  %v898 = vpack.c.b16 %v668, %v668
  %v899 = vpack.c.b16 %v669, %v669
  %v900 = vpack.c.b16 %v670, %v670
  %v901 = vpack.c.b16 %v671, %v671
  %v902 = vpack.c.b16 %v672, %v672
  %v903 = vpack.c.b16 %v673, %v673
  %v904 = vpack.c.b16 %v674, %v674
  %v905 = vpack.c.b16 %v675, %v675
  %v906 = vpack.c.b16 %v676, %v676
  %v907 = vpack.c.b16 %v677, %v677
  %v908 = vpack.c.b16 %v678, %v678
  %v909 = vpack.c.b16 %v679, %v679
  %v910 = vpack.c.b16 %v680, %v680
  %v912 = vshrl.u32 %v895, 16
  %v914 = vrot.slane %v912, 7
  %v915 = vshll.u32 %v895, 16
  %v917 = vor.u32 %v914, %v915
  %v919 = vshrl.u32 %v896, 16
  %v921 = vrot.slane %v919, 7
  %v922 = vshll.u32 %v896, 16
  %v924 = vor.u32 %v921, %v922
  %v926 = vshrl.u32 %v897, 16
  %v928 = vrot.slane %v926, 7
  %v929 = vshll.u32 %v897, 16
  %v931 = vor.u32 %v928, %v929
  %v933 = vshrl.u32 %v898, 16
  %v935 = vrot.slane %v933, 7
  %v936 = vshll.u32 %v898, 16
  %v938 = vor.u32 %v935, %v936
  %v940 = vshrl.u32 %v899, 16
  %v942 = vrot.slane %v940, 7
  %v943 = vshll.u32 %v899, 16
  %v945 = vor.u32 %v942, %v943
  %v947 = vshrl.u32 %v900, 16
  %v949 = vrot.slane %v947, 7
  %v950 = vshll.u32 %v900, 16
  %v952 = vor.u32 %v949, %v950
  %v954 = vshrl.u32 %v901, 16
  %v956 = vrot.slane %v954, 7
  %v957 = vshll.u32 %v901, 16
  %v959 = vor.u32 %v956, %v957
  %v961 = vshrl.u32 %v902, 16
  %v963 = vrot.slane %v961, 7
  %v964 = vshll.u32 %v902, 16
  %v966 = vor.u32 %v963, %v964
  %v968 = vshrl.u32 %v903, 16
  %v970 = vrot.slane %v968, 7
  %v971 = vshll.u32 %v903, 16
  %v973 = vor.u32 %v970, %v971
  %v975 = vshrl.u32 %v904, 16
  %v977 = vrot.slane %v975, 7
  %v978 = vshll.u32 %v904, 16
  %v980 = vor.u32 %v977, %v978
  %v982 = vshrl.u32 %v905, 16
  %v984 = vrot.slane %v982, 7
  %v985 = vshll.u32 %v905, 16
  %v987 = vor.u32 %v984, %v985
  %v989 = vshrl.u32 %v906, 16
  %v991 = vrot.slane %v989, 7
  %v992 = vshll.u32 %v906, 16
  %v994 = vor.u32 %v991, %v992
  %v996 = vshrl.u32 %v907, 16
  %v998 = vrot.slane %v996, 7
  %v999 = vshll.u32 %v907, 16
  %v1001 = vor.u32 %v998, %v999
  %v1003 = vshrl.u32 %v908, 16
  %v1005 = vrot.slane %v1003, 7
  %v1006 = vshll.u32 %v908, 16
  %v1008 = vor.u32 %v1005, %v1006
  %v1010 = vshrl.u32 %v909, 16
  %v1012 = vrot.slane %v1010, 7
  %v1013 = vshll.u32 %v909, 16
  %v1015 = vor.u32 %v1012, %v1013
  %v1017 = vshrl.u32 %v910, 16
  %v1019 = vrot.slane %v1017, 7
  %v1020 = vshll.u32 %v910, 16
  %v1022 = vor.u32 %v1019, %v1020
  %v1039 = vsel %vm879, 0, %v917
  %v1040 = vsel %vm879, 0, %v924
  %v1041 = vsel %vm879, 0, %v931
  %v1042 = vsel %vm879, 0, %v938
  %v1043 = vsel %vm879, 0, %v945
  %v1044 = vsel %vm879, 0, %v952
  %v1045 = vsel %vm879, 0, %v959
  %v1046 = vsel %vm879, 0, %v966
  %v1047 = vsel %vm879, 0, %v973
  %v1048 = vsel %vm879, 0, %v980
  %v1049 = vsel %vm879, 0, %v987
  %v1050 = vsel %vm879, 0, %v994
  %v1051 = vsel %vm879, 0, %v1001
  %v1052 = vsel %vm879, 0, %v1008
  %v1053 = vsel %vm879, 0, %v1015
  %v1054 = vsel %vm879, 0, %v1022
  %v1055 = vpack.c.b16 %v704, %v704
  %v1056 = vpack.c.b16 %v712, %v712
  %v1058 = vshrl.u32 %v1055, 16
  %v1060 = vrot.slane %v1058, 7
  %v1061 = vshll.u32 %v1055, 16
  %v1063 = vor.u32 %v1060, %v1061
  %v1065 = vshrl.u32 %v1056, 16
  %v1067 = vrot.slane %v1065, 7
  %v1068 = vshll.u32 %v1056, 16
  %v1070 = vor.u32 %v1067, %v1068
  %v1073 = vsel %vm879, 0, %v1063
  %v1074 = vsel %vm879, 0, %v1070
  %1076 = vrot.lane.b32.xlu0 0, 32
  %v1077 = vpop.permute.xlu0 %1076
  %1078 = vrot.lane.b32.xlu0 %v729, 32
  %v1079 = vpop.permute.xlu0 %1078
  %1080 = vrot.lane.b32.xlu0 %v730, 32
  %v1081 = vpop.permute.xlu0 %1080
  %1082 = vrot.lane.b32.xlu0 %v731, 32
  %v1083 = vpop.permute.xlu0 %1082
  %1084 = vrot.lane.b32.xlu0 %v732, 32
  %v1085 = vpop.permute.xlu0 %1084
  %1086 = vrot.lane.b32.xlu0 %v733, 32
  %v1087 = vpop.permute.xlu0 %1086
  %1088 = vrot.lane.b32.xlu0 %v734, 32
  %v1089 = vpop.permute.xlu0 %1088
  %1090 = vrot.lane.b32.xlu0 %v735, 32
  %v1091 = vpop.permute.xlu0 %1090
  %1092 = vrot.lane.b32.xlu0 %v736, 32
  %v1093 = vpop.permute.xlu0 %1092
  %1094 = vrot.lane.b32.xlu0 %v737, 32
  %v1095 = vpop.permute.xlu0 %1094
  %1096 = vrot.lane.b32.xlu0 %v738, 32
  %v1097 = vpop.permute.xlu0 %1096
  %1098 = vrot.lane.b32.xlu0 %v739, 32
  %v1099 = vpop.permute.xlu0 %1098
  %1100 = vrot.lane.b32.xlu0 %v740, 32
  %v1101 = vpop.permute.xlu0 %1100
  %1102 = vrot.lane.b32.xlu0 %v741, 32
  %v1103 = vpop.permute.xlu0 %1102
  %1104 = vrot.lane.b32.xlu0 %v742, 32
  %v1105 = vpop.permute.xlu0 %1104
  %1106 = vrot.lane.b32.xlu0 0, 64
  %v1107 = vpop.permute.xlu0 %1106
  %1108 = vrot.lane.b32.xlu0 %v743, 64
  %v1109 = vpop.permute.xlu0 %1108
  %1110 = vrot.lane.b32.xlu0 %v744, 64
  %v1111 = vpop.permute.xlu0 %1110
  %1112 = vrot.lane.b32.xlu0 %v745, 64
  %v1113 = vpop.permute.xlu0 %1112
  %1114 = vrot.lane.b32.xlu0 %v746, 64
  %v1115 = vpop.permute.xlu0 %1114
  %1116 = vrot.lane.b32.xlu0 %v747, 64
  %v1117 = vpop.permute.xlu0 %1116
  %1118 = vrot.lane.b32.xlu0 %v748, 64
  %v1119 = vpop.permute.xlu0 %1118
  %1120 = vrot.lane.b32.xlu0 %v749, 64
  %v1121 = vpop.permute.xlu0 %1120
  %1122 = vrot.lane.b32.xlu0 %v750, 64
  %v1123 = vpop.permute.xlu0 %1122
  %1124 = vrot.lane.b32.xlu0 %v751, 64
  %v1125 = vpop.permute.xlu0 %1124
  %1126 = vrot.lane.b32.xlu0 %v752, 64
  %v1127 = vpop.permute.xlu0 %1126
  %1128 = vrot.lane.b32.xlu0 %v753, 64
  %v1129 = vpop.permute.xlu0 %1128
  %1130 = vrot.lane.b32.xlu0 %v754, 64
  %v1131 = vpop.permute.xlu0 %1130
  %1132 = vrot.lane.b32.xlu0 %v755, 64
  %v1133 = vpop.permute.xlu0 %1132
  %1134 = vrot.lane.b32.xlu0 %v756, 64
  %v1135 = vpop.permute.xlu0 %1134
  %1152 = vrot.lane.b32.xlu0 %v1039, 96
  %v1153 = vpop.permute.xlu0 %1152
  %1154 = vrot.lane.b32.xlu0 %v1040, 96
  %v1155 = vpop.permute.xlu0 %1154
  %1156 = vrot.lane.b32.xlu0 %v1041, 96
  %v1157 = vpop.permute.xlu0 %1156
  %1158 = vrot.lane.b32.xlu0 %v1042, 96
  %v1159 = vpop.permute.xlu0 %1158
  %1160 = vrot.lane.b32.xlu0 %v1043, 96
  %v1161 = vpop.permute.xlu0 %1160
  %1162 = vrot.lane.b32.xlu0 %v1044, 96
  %v1163 = vpop.permute.xlu0 %1162
  %1164 = vrot.lane.b32.xlu0 %v1045, 96
  %v1165 = vpop.permute.xlu0 %1164
  %1166 = vrot.lane.b32.xlu0 %v1046, 96
  %v1167 = vpop.permute.xlu0 %1166
  %1168 = vrot.lane.b32.xlu0 %v1047, 96
  %v1169 = vpop.permute.xlu0 %1168
  %1170 = vrot.lane.b32.xlu0 %v1048, 96
  %v1171 = vpop.permute.xlu0 %1170
  %1172 = vrot.lane.b32.xlu0 %v1049, 96
  %v1173 = vpop.permute.xlu0 %1172
  %1174 = vrot.lane.b32.xlu0 %v1050, 96
  %v1175 = vpop.permute.xlu0 %1174
  %1176 = vrot.lane.b32.xlu0 %v1051, 96
  %v1177 = vpop.permute.xlu0 %1176
  %1178 = vrot.lane.b32.xlu0 %v1052, 96
  %v1179 = vpop.permute.xlu0 %1178
  %1180 = vrot.lane.b32.xlu0 %v1053, 96
  %v1181 = vpop.permute.xlu0 %1180
  %1182 = vrot.lane.b32.xlu0 %v1054, 96
  %v1183 = vpop.permute.xlu0 %1182
  %1184 = vrot.lane.b32.xlu0 %v895, 32
  %v1185 = vpop.permute.xlu0 %1184
  %1186 = vrot.lane.b32.xlu0 %v896, 32
  %v1187 = vpop.permute.xlu0 %1186
  %1188 = vrot.lane.b32.xlu0 %v897, 32
  %v1189 = vpop.permute.xlu0 %1188
  %1190 = vrot.lane.b32.xlu0 %v898, 32
  %v1191 = vpop.permute.xlu0 %1190
  %1192 = vrot.lane.b32.xlu0 %v899, 32
  %v1193 = vpop.permute.xlu0 %1192
  %1194 = vrot.lane.b32.xlu0 %v900, 32
  %v1195 = vpop.permute.xlu0 %1194
  %1196 = vrot.lane.b32.xlu0 %v901, 32
  %v1197 = vpop.permute.xlu0 %1196
  %1198 = vrot.lane.b32.xlu0 %v902, 32
  %v1199 = vpop.permute.xlu0 %1198
  %1200 = vrot.lane.b32.xlu0 %v903, 32
  %v1201 = vpop.permute.xlu0 %1200
  %1202 = vrot.lane.b32.xlu0 %v904, 32
  %v1203 = vpop.permute.xlu0 %1202
  %1204 = vrot.lane.b32.xlu0 %v905, 32
  %v1205 = vpop.permute.xlu0 %1204
  %1206 = vrot.lane.b32.xlu0 %v906, 32
  %v1207 = vpop.permute.xlu0 %1206
  %1208 = vrot.lane.b32.xlu0 %v907, 32
  %v1209 = vpop.permute.xlu0 %1208
  %1210 = vrot.lane.b32.xlu0 %v908, 32
  %v1211 = vpop.permute.xlu0 %1210
  %1212 = vrot.lane.b32.xlu0 %v909, 32
  %v1213 = vpop.permute.xlu0 %1212
  %1214 = vrot.lane.b32.xlu0 %v910, 32
  %v1215 = vpop.permute.xlu0 %1214
  %1232 = vrot.lane.b32.xlu0 %v881, 64
  %v1233 = vpop.permute.xlu0 %1232
  %1234 = vrot.lane.b32.xlu0 %v882, 64
  %v1235 = vpop.permute.xlu0 %1234
  %1236 = vrot.lane.b32.xlu0 %v883, 64
  %v1237 = vpop.permute.xlu0 %1236
  %1238 = vrot.lane.b32.xlu0 %v884, 64
  %v1239 = vpop.permute.xlu0 %1238
  %1240 = vrot.lane.b32.xlu0 %v885, 64
  %v1241 = vpop.permute.xlu0 %1240
  %1242 = vrot.lane.b32.xlu0 %v886, 64
  %v1243 = vpop.permute.xlu0 %1242
  %1244 = vrot.lane.b32.xlu0 %v887, 64
  %v1245 = vpop.permute.xlu0 %1244
  %1246 = vrot.lane.b32.xlu0 %v1073, 64
  %v1247 = vpop.permute.xlu0 %1246
  %1248 = vrot.lane.b32.xlu0 %v888, 64
  %v1249 = vpop.permute.xlu0 %1248
  %1250 = vrot.lane.b32.xlu0 %v889, 64
  %v1251 = vpop.permute.xlu0 %1250
  %1252 = vrot.lane.b32.xlu0 %v890, 64
  %v1253 = vpop.permute.xlu0 %1252
  %1254 = vrot.lane.b32.xlu0 %v891, 64
  %v1255 = vpop.permute.xlu0 %1254
  %1256 = vrot.lane.b32.xlu0 %v892, 64
  %v1257 = vpop.permute.xlu0 %1256
  %1258 = vrot.lane.b32.xlu0 %v893, 64
  %v1259 = vpop.permute.xlu0 %1258
  %1260 = vrot.lane.b32.xlu0 %v894, 64
  %v1261 = vpop.permute.xlu0 %1260
  %1262 = vrot.lane.b32.xlu0 %v1074, 64
  %v1263 = vpop.permute.xlu0 %1262
  %v1264 = vpack.c.b16 %v688, %v688
  %v1265 = vpack.c.b16 %v696, %v696
  %1266 = vrot.lane.b32.xlu0 %v729, 96
  %v1267 = vpop.permute.xlu0 %1266
  %1268 = vrot.lane.b32.xlu0 %v730, 96
  %v1269 = vpop.permute.xlu0 %1268
  %1270 = vrot.lane.b32.xlu0 %v731, 96
  %v1271 = vpop.permute.xlu0 %1270
  %1272 = vrot.lane.b32.xlu0 %v732, 96
  %v1273 = vpop.permute.xlu0 %1272
  %1274 = vrot.lane.b32.xlu0 %v733, 96
  %v1275 = vpop.permute.xlu0 %1274
  %1276 = vrot.lane.b32.xlu0 %v734, 96
  %v1277 = vpop.permute.xlu0 %1276
  %1278 = vrot.lane.b32.xlu0 %v735, 96
  %v1279 = vpop.permute.xlu0 %1278
  %1280 = vrot.lane.b32.xlu0 %v1264, 96
  %v1281 = vpop.permute.xlu0 %1280
  %1282 = vrot.lane.b32.xlu0 %v736, 96
  %v1283 = vpop.permute.xlu0 %1282
  %1284 = vrot.lane.b32.xlu0 %v737, 96
  %v1285 = vpop.permute.xlu0 %1284
  %1286 = vrot.lane.b32.xlu0 %v738, 96
  %v1287 = vpop.permute.xlu0 %1286
  %1288 = vrot.lane.b32.xlu0 %v739, 96
  %v1289 = vpop.permute.xlu0 %1288
  %1290 = vrot.lane.b32.xlu0 %v740, 96
  %v1291 = vpop.permute.xlu0 %1290
  %1292 = vrot.lane.b32.xlu0 %v741, 96
  %v1293 = vpop.permute.xlu0 %1292
  %1294 = vrot.lane.b32.xlu0 %v742, 96
  %v1295 = vpop.permute.xlu0 %1294
  %1296 = vrot.lane.b32.xlu0 %v1265, 96
  %v1297 = vpop.permute.xlu0 %1296
  %vm1298 = vcmask 261120
  %v1301 = vsel %vm1298, %v880, %v1077
  %v1304 = vsel %vm1298, %v881, %v1079
  %v1307 = vsel %vm1298, %v882, %v1081
  %v1310 = vsel %vm1298, %v883, %v1083
  %v1313 = vsel %vm1298, %v884, %v1085
  %v1316 = vsel %vm1298, %v885, %v1087
  %v1319 = vsel %vm1298, %v886, %v1089
  %v1322 = vsel %vm1298, %v887, %v1091
  %v1325 = vsel %vm1298, %v888, %v1093
  %v1328 = vsel %vm1298, %v889, %v1095
  %v1331 = vsel %vm1298, %v890, %v1097
  %v1334 = vsel %vm1298, %v891, %v1099
  %v1337 = vsel %vm1298, %v892, %v1101
  %v1340 = vsel %vm1298, %v893, %v1103
  %v1343 = vsel %vm1298, %v894, %v1105
  %vm1344 = vcmask 523264
  %v1346 = vsel %vm1344, %v1301, %v1107
  %v1348 = vsel %vm1344, %v1304, %v1109
  %v1350 = vsel %vm1344, %v1307, %v1111
  %v1352 = vsel %vm1344, %v1310, %v1113
  %v1354 = vsel %vm1344, %v1313, %v1115
  %v1356 = vsel %vm1344, %v1316, %v1117
  %v1358 = vsel %vm1344, %v1319, %v1119
  %v1360 = vsel %vm1344, %v1322, %v1121
  %v1362 = vsel %vm1344, %v1325, %v1123
  %v1364 = vsel %vm1344, %v1328, %v1125
  %v1366 = vsel %vm1344, %v1331, %v1127
  %v1368 = vsel %vm1344, %v1334, %v1129
  %v1370 = vsel %vm1344, %v1337, %v1131
  %v1372 = vsel %vm1344, %v1340, %v1133
  %v1374 = vsel %vm1344, %v1343, %v1135
  %vm1375 = vcmask 785408
  %v1377 = vsel %vm1375, %v1346, %v1153
  %v1379 = vsel %vm1375, %v1348, %v1155
  %v1381 = vsel %vm1375, %v1350, %v1157
  %v1383 = vsel %vm1375, %v1352, %v1159
  %v1385 = vsel %vm1375, %v1354, %v1161
  %v1387 = vsel %vm1375, %v1356, %v1163
  %v1389 = vsel %vm1375, %v1358, %v1165
  %v1391 = vsel %vm1375, %v1360, %v1167
  %v1393 = vsel %vm1375, %v1346, %v1169
  %v1395 = vsel %vm1375, %v1362, %v1171
  %v1397 = vsel %vm1375, %v1364, %v1173
  %v1399 = vsel %vm1375, %v1366, %v1175
  %v1401 = vsel %vm1375, %v1368, %v1177
  %v1403 = vsel %vm1375, %v1370, %v1179
  %v1405 = vsel %vm1375, %v1372, %v1181
  %v1407 = vsel %vm1375, %v1374, %v1183
  %v1410 = vsel %vm1298, %v713, %v1185
  %v1413 = vsel %vm1298, %v714, %v1187
  %v1416 = vsel %vm1298, %v715, %v1189
  %v1419 = vsel %vm1298, %v716, %v1191
  %v1422 = vsel %vm1298, %v717, %v1193
  %v1425 = vsel %vm1298, %v718, %v1195
  %v1428 = vsel %vm1298, %v719, %v1197
  %v1431 = vsel %vm1298, %v720, %v1199
  %v1434 = vsel %vm1298, %v721, %v1201
  %v1437 = vsel %vm1298, %v722, %v1203
  %v1440 = vsel %vm1298, %v723, %v1205
  %v1443 = vsel %vm1298, %v724, %v1207
  %v1446 = vsel %vm1298, %v725, %v1209
  %v1449 = vsel %vm1298, %v726, %v1211
  %v1452 = vsel %vm1298, %v727, %v1213
  %v1455 = vsel %vm1298, %v728, %v1215
  %v1457 = vsel %vm1344, %v1410, %v1233
  %v1459 = vsel %vm1344, %v1413, %v1235
  %v1461 = vsel %vm1344, %v1416, %v1237
  %v1463 = vsel %vm1344, %v1419, %v1239
  %v1465 = vsel %vm1344, %v1422, %v1241
  %v1467 = vsel %vm1344, %v1425, %v1243
  %v1469 = vsel %vm1344, %v1428, %v1245
  %v1471 = vsel %vm1344, %v1431, %v1247
  %v1473 = vsel %vm1344, %v1434, %v1249
  %v1475 = vsel %vm1344, %v1437, %v1251
  %v1477 = vsel %vm1344, %v1440, %v1253
  %v1479 = vsel %vm1344, %v1443, %v1255
  %v1481 = vsel %vm1344, %v1446, %v1257
  %v1483 = vsel %vm1344, %v1449, %v1259
  %v1485 = vsel %vm1344, %v1452, %v1261
  %v1487 = vsel %vm1344, %v1455, %v1263
  %v1489 = vsel %vm1375, %v1457, %v1267
  %v1491 = vsel %vm1375, %v1459, %v1269
  %v1493 = vsel %vm1375, %v1461, %v1271
  %v1495 = vsel %vm1375, %v1463, %v1273
  %v1497 = vsel %vm1375, %v1465, %v1275
  %v1499 = vsel %vm1375, %v1467, %v1277
  %v1501 = vsel %vm1375, %v1469, %v1279
  %v1503 = vsel %vm1375, %v1471, %v1281
  %v1505 = vsel %vm1375, %v1473, %v1283
  %v1507 = vsel %vm1375, %v1475, %v1285
  %v1509 = vsel %vm1375, %v1477, %v1287
  %v1511 = vsel %vm1375, %v1479, %v1289
  %v1513 = vsel %vm1375, %v1481, %v1291
  %v1515 = vsel %vm1375, %v1483, %v1293
  %v1517 = vsel %vm1375, %v1485, %v1295
  %v1519 = vsel %vm1375, %v1487, %v1297
  %v1552 = vunpack.c.l.b16 %v1377
  %v1553 = vunpack.c.l.b16 %v1489
  %v1554 = vunpack.c.l.b16 %v1379
  %v1555 = vunpack.c.l.b16 %v1491
  %v1556 = vunpack.c.l.b16 %v1381
  %v1557 = vunpack.c.l.b16 %v1493
  %v1558 = vunpack.c.l.b16 %v1383
  %v1559 = vunpack.c.l.b16 %v1495
  %v1560 = vunpack.c.l.b16 %v1385
  %v1561 = vunpack.c.l.b16 %v1497
  %v1562 = vunpack.c.l.b16 %v1387
  %v1563 = vunpack.c.l.b16 %v1499
  %v1564 = vunpack.c.l.b16 %v1389
  %v1565 = vunpack.c.l.b16 %v1501
  %v1566 = vunpack.c.l.b16 %v1391
  %v1567 = vunpack.c.l.b16 %v1503
  %v1568 = vunpack.c.l.b16 %v1393
  %v1569 = vunpack.c.l.b16 %v1505
  %v1570 = vunpack.c.l.b16 %v1395
  %v1571 = vunpack.c.l.b16 %v1507
  %v1572 = vunpack.c.l.b16 %v1397
  %v1573 = vunpack.c.l.b16 %v1509
  %v1574 = vunpack.c.l.b16 %v1399
  %v1575 = vunpack.c.l.b16 %v1511
  %v1576 = vunpack.c.l.b16 %v1401
  %v1577 = vunpack.c.l.b16 %v1513
  %v1578 = vunpack.c.l.b16 %v1403
  %v1579 = vunpack.c.l.b16 %v1515
  %v1580 = vunpack.c.l.b16 %v1405
  %v1581 = vunpack.c.l.b16 %v1517
  %v1582 = vunpack.c.l.b16 %v1407
  %v1583 = vunpack.c.l.b16 %v1519
  %v1584 = vld [vmem:[%s3] sm:$0xf]
  %v1585 = vld [vmem:[%s3 + $0x4] sm:$0xf]
  %v1586 = vld [vmem:[%s3 + $0x8] sm:$0xf]
  %v1587 = vld [vmem:[%s3 + $0xc] sm:$0xf]
  %v1588 = vld [vmem:[%s3 + $0x10] sm:$0xf]
  %v1589 = vld [vmem:[%s3 + $0x14] sm:$0xf]
  %v1590 = vld [vmem:[%s3 + $0x18] sm:$0xf]
  %v1591 = vld [vmem:[%s3 + $0x1c] sm:$0xf]
  %v1592 = vld [vmem:[%s3 + $0x20] sm:$0xf]
  %v1593 = vld [vmem:[%s3 + $0x24] sm:$0xf]
  %v1594 = vld [vmem:[%s3 + $0x28] sm:$0xf]
  %v1595 = vld [vmem:[%s3 + $0x2c] sm:$0xf]
  %v1596 = vld [vmem:[%s3 + $0x30] sm:$0xf]
  %v1597 = vld [vmem:[%s3 + $0x34] sm:$0xf]
  %v1598 = vld [vmem:[%s3 + $0x38] sm:$0xf]
  %v1599 = vld [vmem:[%s3 + $0x3c] sm:$0xf]
  %v1600 = vld [vmem:[%s3 + $0x40] sm:$0xf]
  %v1601 = vld [vmem:[%s3 + $0x44] sm:$0xf]
  %v1602 = vld [vmem:[%s3 + $0x48] sm:$0xf]
  %v1603 = vld [vmem:[%s3 + $0x4c] sm:$0xf]
  %v1604 = vld [vmem:[%s3 + $0x50] sm:$0xf]
  %v1605 = vld [vmem:[%s3 + $0x54] sm:$0xf]
  %v1606 = vld [vmem:[%s3 + $0x58] sm:$0xf]
  %v1607 = vld [vmem:[%s3 + $0x5c] sm:$0xf]
  %v1608 = vld [vmem:[%s3 + $0x60] sm:$0xf]
  %v1609 = vld [vmem:[%s3 + $0x64] sm:$0xf]
  %v1610 = vld [vmem:[%s3 + $0x68] sm:$0xf]
  %v1611 = vld [vmem:[%s3 + $0x6c] sm:$0xf]
  %v1612 = vld [vmem:[%s3 + $0x70] sm:$0xf]
  %v1613 = vld [vmem:[%s3 + $0x74] sm:$0xf]
  %v1614 = vld [vmem:[%s3 + $0x78] sm:$0xf]
  %v1615 = vld [vmem:[%s3 + $0x7c] sm:$0xf]
  %v1616 = vld [vmem:[%s3 + $0x80] sm:$0xf]
  %v1617 = vld [vmem:[%s3 + $0x84] sm:$0xf]
  %v1618 = vld [vmem:[%s3 + $0x88] sm:$0xf]
  %v1619 = vld [vmem:[%s3 + $0x8c] sm:$0xf]
  %v1620 = vld [vmem:[%s4] sm:$0x1]
  %v1622 = vlaneseq
  %v1623 = vshrl.u32 %v1622, 7
  %v1624 = vsub.s32 0, %v1623
  %v1625 = vrot.slane %v1620, %v1624
  %v1627 = vpack.c.b16 %v1554, %v1552
  %v1628 = vpack.c.b16 %v1555, %v1553
  %v1629 = vpack.c.b16 %v698, %v697
  %v1630 = vpack.c.b16 %v1558, %v1556
  %v1631 = vpack.c.b16 %v1559, %v1557
  %v1632 = vpack.c.b16 %v700, %v699
  %v1633 = vpack.c.b16 %v1562, %v1560
  %v1634 = vpack.c.b16 %v1563, %v1561
  %v1635 = vpack.c.b16 %v702, %v701
  %v1636 = vpack.c.b16 %v1566, %v1564
  %v1637 = vpack.c.b16 %v1567, %v1565
  %v1638 = vpack.c.b16 %v704, %v703
  %v1639 = vpack.c.b16 %v1570, %v1568
  %v1640 = vpack.c.b16 %v1571, %v1569
  %v1641 = vpack.c.b16 %v706, %v705
  %v1642 = vpack.c.b16 %v1574, %v1572
  %v1643 = vpack.c.b16 %v1575, %v1573
  %v1644 = vpack.c.b16 %v708, %v707
  %v1645 = vpack.c.b16 %v1578, %v1576
  %v1646 = vpack.c.b16 %v1579, %v1577
  %v1647 = vpack.c.b16 %v710, %v709
  %v1648 = vpack.c.b16 %v1582, %v1580
  %v1649 = vpack.c.b16 %v1583, %v1581
  %v1650 = vpack.c.b16 %v712, %v711
  %v1703 = vunpack.c.l.b16 %v1584
  %v1704 = vunpack.c.l.b16 %v1585
  %v1705 = vunpack.c.l.b16 %v1586
  %v1706 = vunpack.c.l.b16 %v1587
  %v1707 = vunpack.c.l.b16 %v1588
  %v1708 = vunpack.c.l.b16 %v1589
  %v1709 = vunpack.c.l.b16 %v1590
  %v1710 = vunpack.c.l.b16 %v1591
  %v1711 = vunpack.c.l.b16 %v1592
  %v1712 = vunpack.c.l.b16 %v1593
  %v1713 = vunpack.c.l.b16 %v1594
  %v1714 = vunpack.c.l.b16 %v1595
  %v1715 = vunpack.c.l.b16 %v1596
  %v1716 = vunpack.c.l.b16 %v1597
  %v1717 = vunpack.c.l.b16 %v1598
  %v1718 = vunpack.c.l.b16 %v1599
  %v1719 = vunpack.c.l.b16 %v1600
  %v1720 = vunpack.c.l.b16 %v1601
  %v1721 = vunpack.c.l.b16 %v1602
  %v1722 = vunpack.c.l.b16 %v1603
  %v1723 = vunpack.c.l.b16 %v1604
  %v1724 = vunpack.c.l.b16 %v1605
  %v1725 = vunpack.c.l.b16 %v1606
  %v1726 = vunpack.c.l.b16 %v1607
  %v1727 = vunpack.c.l.b16 %v1608
  %v1728 = vunpack.c.l.b16 %v1609
  %v1729 = vunpack.c.l.b16 %v1610
  %v1730 = vunpack.c.l.b16 %v1611
  %v1731 = vunpack.c.l.b16 %v1612
  %v1732 = vunpack.c.l.b16 %v1613
  %v1733 = vunpack.c.l.b16 %v1614
  %v1734 = vunpack.c.l.b16 %v1615
  %v1735 = vunpack.c.l.b16 %v1616
  %v1736 = vunpack.c.l.b16 %v1617
  %v1737 = vunpack.c.l.b16 %v1618
  %v1738 = vunpack.c.l.b16 %v1619
  %v1739 = vpack.c.b16 %v1704, %v1703
  %v1740 = vpack.c.b16 %v1706, %v1705
  %v1741 = vpack.c.b16 %v1708, %v1707
  %v1742 = vpack.c.b16 %v1710, %v1709
  %v1743 = vpack.c.b16 %v1712, %v1711
  %v1744 = vpack.c.b16 %v1714, %v1713
  %v1745 = vpack.c.b16 %v1716, %v1715
  %v1746 = vpack.c.b16 %v1718, %v1717
  %v1747 = vpack.c.b16 %v1720, %v1719
  %v1748 = vpack.c.b16 %v1722, %v1721
  %v1749 = vpack.c.b16 %v1724, %v1723
  %v1750 = vpack.c.b16 %v1726, %v1725
  %v1751 = vpack.c.b16 %v1728, %v1727
  %v1752 = vpack.c.b16 %v1730, %v1729
  %v1753 = vpack.c.b16 %v1732, %v1731
  %v1754 = vpack.c.b16 %v1734, %v1733
  %v1755 = vpack.c.b16 %v1736, %v1735
  %v1756 = vpack.c.b16 %v1738, %v1737
  %v1776 = vsel %vm1298, %v1629, 0
  %v1779 = vsel %vm1298, %v1632, 0
  %v1782 = vsel %vm1298, %v1635, 0
  %v1785 = vsel %vm1298, %v1638, 0
  %v1788 = vsel %vm1298, %v1641, 0
  %v1791 = vsel %vm1298, %v1644, 0
  %v1794 = vsel %vm1298, %v1647, 0
  %v1797 = vsel %vm1298, %v1650, 0
  %1799 = vmatprep.subr.bf16.mxu0 0
  %1800 = vmatpush1.bf16.msra.mxu0 %v1746
  %1801 = vmatprep.subr.bf16.mxu0 0
  %1802 = vmatpush1.bf16.msra.mxu0 %v1745
  %1803 = vmatprep.subr.bf16.mxu0 0
  %1804 = vmatpush1.bf16.msra.mxu0 %v1744
  %1805 = vmatprep.subr.bf16.mxu0 0
  %1806 = vmatpush1.bf16.msra.mxu0 %v1743
  %1807 = vmatprep.subr.bf16.mxu0 0
  %1808 = vmatpush1.bf16.msra.mxu0 %v1742
  %1809 = vmatprep.subr.bf16.mxu0 0
  %1810 = vmatpush1.bf16.msra.mxu0 %v1741
  %1811 = vmatprep.subr.bf16.mxu0 0
  %1812 = vmatpush1.bf16.msra.mxu0 %v1740
  %1813 = vmatprep.subr.bf16.mxu0 0
  %1814 = vmatpush1.bf16.msra.mxu0 %v1739
  %1815 = vmatprep.subr.bf16.mxu0 0
  %1816 = vmatpush2.bf16.msra.mxu0 %v1754
  %1817 = vmatprep.subr.bf16.mxu0 0
  %1818 = vmatpush2.bf16.msra.mxu0 %v1753
  %1819 = vmatprep.subr.bf16.mxu0 0
  %1820 = vmatpush2.bf16.msra.mxu0 %v1752
  %1821 = vmatprep.subr.bf16.mxu0 0
  %1822 = vmatpush2.bf16.msra.mxu0 %v1751
  %1823 = vmatprep.subr.bf16.mxu0 0
  %1824 = vmatpush2.bf16.msra.mxu0 %v1750
  %1825 = vmatprep.subr.bf16.mxu0 0
  %1826 = vmatpush2.bf16.msra.mxu0 %v1749
  %1827 = vmatprep.subr.bf16.mxu0 0
  %1828 = vmatpush2.bf16.msra.mxu0 %v1748
  %1829 = vmatprep.subr.bf16.mxu0 0
  %1830 = vmatpush2.bf16.msra.mxu0 %v1747
  %1831 = vmatprep.mubr.bf16.mxu0 %v1628
  %1832 = vmatmul.mubr.bf16.gmra.mxu0 %v1627
  %v1833 = vpop.f32.mrf.mxu0
  %v1834 = vadd.f32 %v1625, %v1833
  %v1835 = vpop.f32.mrf.mxu0
  %v1836 = vpop.f32.mrf.mxu0
  %v1837 = vadd.f32 %v1625, %v1836
  %v1838 = vpop.f32.mrf.mxu0
  %1839 = vmatprep.mubr.bf16.mxu0 %v1631
  %1840 = vmatmul.mubr.bf16.gmra.mxu0 %v1630
  %v1841 = vpop.f32.mrf.mxu0
  %v1842 = vadd.f32 %v1625, %v1841
  %v1843 = vpop.f32.mrf.mxu0
  %v1844 = vpop.f32.mrf.mxu0
  %v1845 = vadd.f32 %v1625, %v1844
  %v1846 = vpop.f32.mrf.mxu0
  %1847 = vmatprep.mubr.bf16.mxu0 %v1634
  %1848 = vmatmul.mubr.bf16.gmra.mxu0 %v1633
  %v1849 = vpop.f32.mrf.mxu0
  %v1850 = vadd.f32 %v1625, %v1849
  %v1851 = vpop.f32.mrf.mxu0
  %v1852 = vpop.f32.mrf.mxu0
  %v1853 = vadd.f32 %v1625, %v1852
  %v1854 = vpop.f32.mrf.mxu0
  %1855 = vmatprep.mubr.bf16.mxu0 %v1637
  %1856 = vmatmul.mubr.bf16.gmra.mxu0 %v1636
  %v1857 = vpop.f32.mrf.mxu0
  %v1858 = vadd.f32 %v1625, %v1857
  %v1859 = vpop.f32.mrf.mxu0
  %v1860 = vpop.f32.mrf.mxu0
  %v1861 = vadd.f32 %v1625, %v1860
  %v1862 = vpop.f32.mrf.mxu0
  %1863 = vmatprep.mubr.bf16.mxu0 %v1640
  %1864 = vmatmul.mubr.bf16.gmra.mxu0 %v1639
  %v1865 = vpop.f32.mrf.mxu0
  %v1866 = vadd.f32 %v1625, %v1865
  %v1867 = vpop.f32.mrf.mxu0
  %v1868 = vpop.f32.mrf.mxu0
  %v1869 = vadd.f32 %v1625, %v1868
  %v1870 = vpop.f32.mrf.mxu0
  %1871 = vmatprep.mubr.bf16.mxu0 %v1643
  %1872 = vmatmul.mubr.bf16.gmra.mxu0 %v1642
  %v1873 = vpop.f32.mrf.mxu0
  %v1874 = vadd.f32 %v1625, %v1873
  %v1875 = vpop.f32.mrf.mxu0
  %v1876 = vpop.f32.mrf.mxu0
  %v1877 = vadd.f32 %v1625, %v1876
  %v1878 = vpop.f32.mrf.mxu0
  %1879 = vmatprep.mubr.bf16.mxu0 %v1646
  %1880 = vmatmul.mubr.bf16.gmra.mxu0 %v1645
  %v1881 = vpop.f32.mrf.mxu0
  %v1882 = vadd.f32 %v1625, %v1881
  %v1883 = vpop.f32.mrf.mxu0
  %v1884 = vpop.f32.mrf.mxu0
  %v1885 = vadd.f32 %v1625, %v1884
  %v1886 = vpop.f32.mrf.mxu0
  %1887 = vmatprep.mubr.bf16.mxu0 %v1649
  %1888 = vmatmul.mubr.bf16.gmra.mxu0 %v1648
  %v1889 = vpop.f32.mrf.mxu0
  %v1890 = vadd.f32 %v1625, %v1889
  %v1891 = vpop.f32.mrf.mxu0
  %v1892 = vpop.f32.mrf.mxu0
  %v1893 = vadd.f32 %v1625, %v1892
  %v1894 = vpop.f32.mrf.mxu0
  %1895 = vdwg.mxu0
  %1896 = vmatprep.subr.bf16.mxu0 0
  %1897 = vmatpush1.bf16.msra.mxu0 0
  %1898 = vmatprep.subr.bf16.mxu0 0
  %1899 = vmatpush1.bf16.msra.mxu0 0
  %1900 = vmatprep.subr.bf16.mxu0 0
  %1901 = vmatpush1.bf16.msra.mxu0 0
  %1902 = vmatprep.subr.bf16.mxu0 0
  %1903 = vmatpush1.bf16.msra.mxu0 0
  %1904 = vmatprep.subr.bf16.mxu0 0
  %1905 = vmatpush1.bf16.msra.mxu0 0
  %1906 = vmatprep.subr.bf16.mxu0 0
  %1907 = vmatpush1.bf16.msra.mxu0 0
  %1908 = vmatprep.subr.bf16.mxu0 0
  %1909 = vmatpush1.bf16.msra.mxu0 %v1756
  %1910 = vmatprep.subr.bf16.mxu0 0
  %1911 = vmatpush1.bf16.msra.mxu0 %v1755
  %1912 = vmatprep.subr.bf16.mxu0 0
  %1913 = vmatpush2.bf16.msra.mxu0 0
  %1914 = vmatprep.subr.bf16.mxu0 0
  %1915 = vmatpush2.bf16.msra.mxu0 0
  %1916 = vmatprep.subr.bf16.mxu0 0
  %1917 = vmatpush2.bf16.msra.mxu0 0
  %1918 = vmatprep.subr.bf16.mxu0 0
  %1919 = vmatpush2.bf16.msra.mxu0 0
  %1920 = vmatprep.subr.bf16.mxu0 0
  %1921 = vmatpush2.bf16.msra.mxu0 0
  %1922 = vmatprep.subr.bf16.mxu0 0
  %1923 = vmatpush2.bf16.msra.mxu0 0
  %1924 = vmatprep.subr.bf16.mxu0 0
  %1925 = vmatpush2.bf16.msra.mxu0 0
  %1926 = vmatprep.subr.bf16.mxu0 0
  %1927 = vmatpush2.bf16.msra.mxu0 0
  %1928 = vmatprep.mubr.bf16.mxu0 0
  %1929 = vmatmul.mubr.bf16.gmra.mxu0 %v1776
  %v1930 = vpop.f32.mrf.mxu0
  %v1931 = vadd.f32 %v1834, %v1930
  %v1932 = vpop.f32.mrf.mxu0
  %v1933 = vpop.f32.mrf.mxu0
  %v1934 = vadd.f32 %v1837, %v1933
  %v1935 = vpop.f32.mrf.mxu0
  %1936 = vmatprep.mubr.bf16.mxu0 0
  %1937 = vmatmul.mubr.bf16.gmra.mxu0 %v1779
  %v1938 = vpop.f32.mrf.mxu0
  %v1939 = vadd.f32 %v1842, %v1938
  %v1940 = vpop.f32.mrf.mxu0
  %v1941 = vpop.f32.mrf.mxu0
  %v1942 = vadd.f32 %v1845, %v1941
  %v1943 = vpop.f32.mrf.mxu0
  %1944 = vmatprep.mubr.bf16.mxu0 0
  %1945 = vmatmul.mubr.bf16.gmra.mxu0 %v1782
  %v1946 = vpop.f32.mrf.mxu0
  %v1947 = vadd.f32 %v1850, %v1946
  %v1948 = vpop.f32.mrf.mxu0
  %v1949 = vpop.f32.mrf.mxu0
  %v1950 = vadd.f32 %v1853, %v1949
  %v1951 = vpop.f32.mrf.mxu0
  %1952 = vmatprep.mubr.bf16.mxu0 0
  %1953 = vmatmul.mubr.bf16.gmra.mxu0 %v1785
  %v1954 = vpop.f32.mrf.mxu0
  %v1955 = vadd.f32 %v1858, %v1954
  %v1956 = vpop.f32.mrf.mxu0
  %v1957 = vpop.f32.mrf.mxu0
  %v1958 = vadd.f32 %v1861, %v1957
  %v1959 = vpop.f32.mrf.mxu0
  %1960 = vmatprep.mubr.bf16.mxu0 0
  %1961 = vmatmul.mubr.bf16.gmra.mxu0 %v1788
  %v1962 = vpop.f32.mrf.mxu0
  %v1963 = vadd.f32 %v1866, %v1962
  %v1964 = vpop.f32.mrf.mxu0
  %v1965 = vpop.f32.mrf.mxu0
  %v1966 = vadd.f32 %v1869, %v1965
  %v1967 = vpop.f32.mrf.mxu0
  %1968 = vmatprep.mubr.bf16.mxu0 0
  %1969 = vmatmul.mubr.bf16.gmra.mxu0 %v1791
  %v1970 = vpop.f32.mrf.mxu0
  %v1971 = vadd.f32 %v1874, %v1970
  %v1972 = vpop.f32.mrf.mxu0
  %v1973 = vpop.f32.mrf.mxu0
  %v1974 = vadd.f32 %v1877, %v1973
  %v1975 = vpop.f32.mrf.mxu0
  %1976 = vmatprep.mubr.bf16.mxu0 0
  %1977 = vmatmul.mubr.bf16.gmra.mxu0 %v1794
  %v1978 = vpop.f32.mrf.mxu0
  %v1979 = vadd.f32 %v1882, %v1978
  %v1980 = vpop.f32.mrf.mxu0
  %v1981 = vpop.f32.mrf.mxu0
  %v1982 = vadd.f32 %v1885, %v1981
  %v1983 = vpop.f32.mrf.mxu0
  %1984 = vmatprep.mubr.bf16.mxu0 0
  %1985 = vmatmul.mubr.bf16.gmra.mxu0 %v1797
  %v1986 = vpop.f32.mrf.mxu0
  %v1987 = vadd.f32 %v1890, %v1986
  %v1988 = vpop.f32.mrf.mxu0
  %v1989 = vpop.f32.mrf.mxu0
  %v1990 = vadd.f32 %v1893, %v1989
  %v1991 = vpop.f32.mrf.mxu0
  %1992 = vdwg.mxu0
  %v1993 = vmax.f32 %v1931, 0.0
  %v1994 = vmax.f32 %v1934, 0.0
  %v1995 = vmax.f32 %v1939, 0.0
  %v1996 = vmax.f32 %v1942, 0.0
  %v1997 = vmax.f32 %v1947, 0.0
  %v1998 = vmax.f32 %v1950, 0.0
  %v1999 = vmax.f32 %v1955, 0.0
  %v2000 = vmax.f32 %v1958, 0.0
  %v2001 = vmax.f32 %v1963, 0.0
  %v2002 = vmax.f32 %v1966, 0.0
  %v2003 = vmax.f32 %v1971, 0.0
  %v2004 = vmax.f32 %v1974, 0.0
  %v2005 = vmax.f32 %v1979, 0.0
  %v2006 = vmax.f32 %v1982, 0.0
  %v2007 = vmax.f32 %v1987, 0.0
  %v2008 = vmax.f32 %v1990, 0.0
  %v2009 = vpack.c.bf16 %v1994, %v1993
  %v2010 = vpack.c.bf16 %v1996, %v1995
  %v2011 = vpack.c.bf16 %v1998, %v1997
  %v2012 = vpack.c.bf16 %v2000, %v1999
  %v2013 = vpack.c.bf16 %v2002, %v2001
  %v2014 = vpack.c.bf16 %v2004, %v2003
  %v2015 = vpack.c.bf16 %v2006, %v2005
  %v2016 = vpack.c.bf16 %v2008, %v2007
  %2025 = vrot.lane.b32.xlu0 %v91, 32
  %v2026 = vpop.permute.xlu0 %2025
  %2027 = vrot.lane.b32.xlu0 %v92, 32
  %v2028 = vpop.permute.xlu0 %2027
  %2029 = vrot.lane.b32.xlu0 %v93, 32
  %v2030 = vpop.permute.xlu0 %2029
  %2031 = vrot.lane.b32.xlu0 %v94, 32
  %v2032 = vpop.permute.xlu0 %2031
  %2033 = vrot.lane.b32.xlu0 %v95, 32
  %v2034 = vpop.permute.xlu0 %2033
  %2035 = vrot.lane.b32.xlu0 %v96, 32
  %v2036 = vpop.permute.xlu0 %2035
  %2037 = vrot.lane.b32.xlu0 %v97, 32
  %v2038 = vpop.permute.xlu0 %2037
  %2039 = vrot.lane.b32.xlu0 %v98, 32
  %v2040 = vpop.permute.xlu0 %2039
  %v2043 = vsel %vm1298, %v2009, %v2026
  %v2046 = vsel %vm1298, %v2010, %v2028
  %v2049 = vsel %vm1298, %v2011, %v2030
  %v2052 = vsel %vm1298, %v2012, %v2032
  %v2055 = vsel %vm1298, %v2013, %v2034
  %v2058 = vsel %vm1298, %v2014, %v2036
  %v2061 = vsel %vm1298, %v2015, %v2038
  %v2064 = vsel %vm1298, %v2016, %v2040
  %v2065 = vld [vmem:[%s5] sm:$0xf]
  %v2066 = vld [vmem:[%s5 + $0x4] sm:$0xf]
  %v2067 = vld [vmem:[%s5 + $0x8] sm:$0xf]
  %v2068 = vld [vmem:[%s5 + $0xc] sm:$0xf]
  %v2069 = vld [vmem:[%s5 + $0x10] sm:$0x3]
  %v2070 = vld [vmem:[%s6] sm:$0x1]
  %v2072 = vlaneseq
  %v2073 = vshrl.u32 %v2072, 7
  %v2074 = vsub.s32 0, %v2073
  %v2075 = vrot.slane %v2070, %v2074
  %v2082 = vunpack.c.l.b16 %v2065
  %v2083 = vunpack.c.l.b16 %v2066
  %v2084 = vunpack.c.l.b16 %v2067
  %v2085 = vunpack.c.l.b16 %v2068
  %v2086 = vunpack.c.l.b16 %v2069
  %v2087 = vpack.c.b16 %v2083, %v2082
  %v2088 = vpack.c.b16 %v2085, %v2084
  %v2089 = vpack.c.b16 %v2086, %v2086
  %vm2092 = vcmask 293888
  %v2093 = vsel %vm2092, %v2043, 0
  %v2095 = vsel %vm2092, %v2046, 0
  %v2097 = vsel %vm2092, %v2049, 0
  %v2099 = vsel %vm2092, %v2052, 0
  %v2101 = vsel %vm2092, %v2055, 0
  %v2103 = vsel %vm2092, %v2058, 0
  %v2105 = vsel %vm2092, %v2061, 0
  %v2107 = vsel %vm2092, %v2064, 0
  %v2110 = vsel %vm228, %v2089, 0
  %2112 = vmatprep.subr.bf16.mxu0 0
  %2113 = vmatpush1.bf16.msra.mxu0 0
  %2114 = vmatprep.subr.bf16.mxu0 0
  %2115 = vmatpush1.bf16.msra.mxu0 0
  %2116 = vmatprep.subr.bf16.mxu0 0
  %2117 = vmatpush1.bf16.msra.mxu0 0
  %2118 = vmatprep.subr.bf16.mxu0 0
  %2119 = vmatpush1.bf16.msra.mxu0 0
  %2120 = vmatprep.subr.bf16.mxu0 0
  %2121 = vmatpush1.bf16.msra.mxu0 0
  %2122 = vmatprep.subr.bf16.mxu0 0
  %2123 = vmatpush1.bf16.msra.mxu0 %v2110
  %2124 = vmatprep.subr.bf16.mxu0 0
  %2125 = vmatpush1.bf16.msra.mxu0 %v2088
  %2126 = vmatprep.subr.bf16.mxu0 0
  %2127 = vmatpush1.bf16.msra.mxu0 %v2087
  %2128 = vmatprep.subr.bf16.mxu0 0
  %2129 = vmatpush2.bf16.msra.mxu0 0
  %2130 = vmatprep.subr.bf16.mxu0 0
  %2131 = vmatpush2.bf16.msra.mxu0 0
  %2132 = vmatprep.subr.bf16.mxu0 0
  %2133 = vmatpush2.bf16.msra.mxu0 0
  %2134 = vmatprep.subr.bf16.mxu0 0
  %2135 = vmatpush2.bf16.msra.mxu0 0
  %2136 = vmatprep.subr.bf16.mxu0 0
  %2137 = vmatpush2.bf16.msra.mxu0 0
  %2138 = vmatprep.subr.bf16.mxu0 0
  %2139 = vmatpush2.bf16.msra.mxu0 0
  %2140 = vmatprep.subr.bf16.mxu0 0
  %2141 = vmatpush2.bf16.msra.mxu0 0
  %2142 = vmatprep.subr.bf16.mxu0 0
  %2143 = vmatpush2.bf16.msra.mxu0 0
  %2144 = vmatprep.mubr.bf16.mxu0 0
  %2145 = vmatmul.mubr.bf16.gmra.mxu0 %v2093
  %v2146 = vpop.f32.mrf.mxu0
  %v2147 = vadd.f32 %v2075, %v2146
  %v2148 = vpop.f32.mrf.mxu0
  %v2149 = vpop.f32.mrf.mxu0
  %v2150 = vadd.f32 %v2075, %v2149
  %v2151 = vpop.f32.mrf.mxu0
  %2152 = vmatprep.mubr.bf16.mxu0 0
  %2153 = vmatmul.mubr.bf16.gmra.mxu0 %v2095
  %v2154 = vpop.f32.mrf.mxu0
  %v2155 = vadd.f32 %v2075, %v2154
  %v2156 = vpop.f32.mrf.mxu0
  %v2157 = vpop.f32.mrf.mxu0
  %v2158 = vadd.f32 %v2075, %v2157
  %v2159 = vpop.f32.mrf.mxu0
  %2160 = vmatprep.mubr.bf16.mxu0 0
  %2161 = vmatmul.mubr.bf16.gmra.mxu0 %v2097
  %v2162 = vpop.f32.mrf.mxu0
  %v2163 = vadd.f32 %v2075, %v2162
  %v2164 = vpop.f32.mrf.mxu0
  %v2165 = vpop.f32.mrf.mxu0
  %v2166 = vadd.f32 %v2075, %v2165
  %v2167 = vpop.f32.mrf.mxu0
  %2168 = vmatprep.mubr.bf16.mxu0 0
  %2169 = vmatmul.mubr.bf16.gmra.mxu0 %v2099
  %v2170 = vpop.f32.mrf.mxu0
  %v2171 = vadd.f32 %v2075, %v2170
  %v2172 = vpop.f32.mrf.mxu0
  %v2173 = vpop.f32.mrf.mxu0
  %v2174 = vadd.f32 %v2075, %v2173
  %v2175 = vpop.f32.mrf.mxu0
  %2176 = vmatprep.mubr.bf16.mxu0 0
  %2177 = vmatmul.mubr.bf16.gmra.mxu0 %v2101
  %v2178 = vpop.f32.mrf.mxu0
  %v2179 = vadd.f32 %v2075, %v2178
  %v2180 = vpop.f32.mrf.mxu0
  %v2181 = vpop.f32.mrf.mxu0
  %v2182 = vadd.f32 %v2075, %v2181
  %v2183 = vpop.f32.mrf.mxu0
  %2184 = vmatprep.mubr.bf16.mxu0 0
  %2185 = vmatmul.mubr.bf16.gmra.mxu0 %v2103
  %v2186 = vpop.f32.mrf.mxu0
  %v2187 = vadd.f32 %v2075, %v2186
  %v2188 = vpop.f32.mrf.mxu0
  %v2189 = vpop.f32.mrf.mxu0
  %v2190 = vadd.f32 %v2075, %v2189
  %v2191 = vpop.f32.mrf.mxu0
  %2192 = vmatprep.mubr.bf16.mxu0 0
  %2193 = vmatmul.mubr.bf16.gmra.mxu0 %v2105
  %v2194 = vpop.f32.mrf.mxu0
  %v2195 = vadd.f32 %v2075, %v2194
  %v2196 = vpop.f32.mrf.mxu0
  %v2197 = vpop.f32.mrf.mxu0
  %v2198 = vadd.f32 %v2075, %v2197
  %v2199 = vpop.f32.mrf.mxu0
  %2200 = vmatprep.mubr.bf16.mxu0 0
  %2201 = vmatmul.mubr.bf16.gmra.mxu0 %v2107
  %v2202 = vpop.f32.mrf.mxu0
  %v2203 = vadd.f32 %v2075, %v2202
  %v2204 = vpop.f32.mrf.mxu0
  %v2205 = vpop.f32.mrf.mxu0
  %v2206 = vadd.f32 %v2075, %v2205
  %v2207 = vpop.f32.mrf.mxu0
  %2208 = vdwg.mxu0
  %v2209 = vmax.f32 %v2147, 0.0
  %v2210 = vmax.f32 %v2150, 0.0
  %v2211 = vmax.f32 %v2155, 0.0
  %v2212 = vmax.f32 %v2158, 0.0
  %v2213 = vmax.f32 %v2163, 0.0
  %v2214 = vmax.f32 %v2166, 0.0
  %v2215 = vmax.f32 %v2171, 0.0
  %v2216 = vmax.f32 %v2174, 0.0
  %v2217 = vmax.f32 %v2179, 0.0
  %v2218 = vmax.f32 %v2182, 0.0
  %v2219 = vmax.f32 %v2187, 0.0
  %v2220 = vmax.f32 %v2190, 0.0
  %v2221 = vmax.f32 %v2195, 0.0
  %v2222 = vmax.f32 %v2198, 0.0
  %v2223 = vmax.f32 %v2203, 0.0
  %v2224 = vmax.f32 %v2206, 0.0
  %v2225 = vpack.c.bf16 %v2209, %v2209
  %v2226 = vpack.c.bf16 %v2210, %v2210
  %v2227 = vpack.c.bf16 %v2211, %v2211
  %v2228 = vpack.c.bf16 %v2212, %v2212
  %v2229 = vpack.c.bf16 %v2213, %v2213
  %v2230 = vpack.c.bf16 %v2214, %v2214
  %v2231 = vpack.c.bf16 %v2215, %v2215
  %v2232 = vpack.c.bf16 %v2216, %v2216
  %v2233 = vpack.c.bf16 %v2217, %v2217
  %v2234 = vpack.c.bf16 %v2218, %v2218
  %v2235 = vpack.c.bf16 %v2219, %v2219
  %v2236 = vpack.c.bf16 %v2220, %v2220
  %v2237 = vpack.c.bf16 %v2221, %v2221
  %v2238 = vpack.c.bf16 %v2222, %v2222
  %v2239 = vpack.c.bf16 %v2223, %v2223
  %v2240 = vpack.c.bf16 %v2224, %v2224
  %2241 = vst [vmem:[%s7] sm:$0xf] %v2225
  %2242 = vst [vmem:[%s7 + $0x4] sm:$0xf] %v2226
  %2243 = vst [vmem:[%s7 + $0x8] sm:$0xf] %v2227
  %2244 = vst [vmem:[%s7 + $0xc] sm:$0xf] %v2228
  %2245 = vst [vmem:[%s7 + $0x10] sm:$0xf] %v2229
  %2246 = vst [vmem:[%s7 + $0x14] sm:$0xf] %v2230
  %2247 = vst [vmem:[%s7 + $0x18] sm:$0xf] %v2231
  %2248 = vst [vmem:[%s7 + $0x1c] sm:$0xf] %v2232
  %2249 = vst [vmem:[%s7 + $0x20] sm:$0xf] %v2233
  %2250 = vst [vmem:[%s7 + $0x24] sm:$0xf] %v2234
  %2251 = vst [vmem:[%s7 + $0x28] sm:$0xf] %v2235
  %2252 = vst [vmem:[%s7 + $0x2c] sm:$0xf] %v2236
  %2253 = vst [vmem:[%s7 + $0x30] sm:$0xf] %v2237
  %2254 = vst [vmem:[%s7 + $0x34] sm:$0xf] %v2238
  %2255 = vst [vmem:[%s7 + $0x38] sm:$0xf] %v2239
  %2256 = vst [vmem:[%s7 + $0x3c] sm:$0xf] %v2240
  // Predicated region
  $region30: #{fwd.2} parent=0 // pred_check
    _
  $region31: #{fwd.2} parent=0 // pred_check_branch
    %2258 = sbr.rel (0) target = $region33
  $region32: #{fwd.2} parent=0 // pred_region
    _
  $region33: #{fwd.2} parent=0 // pred_fallthru
    _
  // Predicated region
  $region34: #{fwd.2} parent=0 // pred_check
    _
  $region35: #{fwd.2} parent=0 // pred_check_branch
    %2260 = sbr.rel (0) target = $region37
  $region36: #{fwd.2} parent=0 // pred_region
    _
  $region37: #{fwd.2} parent=0 // pred_fallthru
    _

</llo_original>
